<compile_context>
chip_gen: v7x
topology: tpu7x:2x2x1
jax: 0.10.0
libtpu: 0.0.40
codegen_flags: <defaults>
</compile_context>

<pallas_src>
import functools

import jax
import jax.numpy as jnp
from jax import lax
from jax.experimental import pallas as pl
from jax.experimental.pallas import tpu as pltpu


# ----------------------------------------------------------------------------
# Kernel 1: fused 3x3x3 conv (+ optional 1x1x1 shortcut) as one MXU GEMM/sample.
# xp_ref: (1, Cin, Spad) bf16 flat-halo-padded sample; m_ref: (27, S) bf16 tap
# validity masks; w_ref: (Cout, 27*Cin) bf16.  Output (1, Cout, S) fp32.
# ----------------------------------------------------------------------------
def _fill_slab(xv, m_ref, slab_ref, *, D, H, W, Cin, halo):
    """Build the (27*Cin, S) im2col slab in VMEM from the padded sample."""
    S = D * H * W
    t = 0
    for kd in range(3):
        for kh in range(3):
            for kw in range(3):
                # flat shift of tap (kd,kh,kw); out-of-bounds neighbors masked to 0
                delta = (kd - 1) * H * W + (kh - 1) * W + (kw - 1)
                tap = xv[:, halo + delta: halo + delta + S]      # (Cin, S) bf16
                mask = m_ref[t:t + 1, :]                          # (1, S) bf16 {0,1}
                slab_ref[t * Cin:(t + 1) * Cin, :] = tap * mask
                t += 1


def _conv3x3_kernel(xp_ref, m_ref, w_ref, o_ref, slab_ref, *, D, H, W, Cin, halo):
    xv = xp_ref[0]                                                # (Cin, Spad) bf16
    _fill_slab(xv, m_ref, slab_ref, D=D, H=H, W=W, Cin=Cin, halo=halo)
    acc = jnp.dot(w_ref[...], slab_ref[...], preferred_element_type=jnp.float32)
    o_ref[0] = acc.astype(o_ref.dtype)                            # (Cout, S) lane-dense


def _conv3x3_sc_kernel(xp_ref, m_ref, w_ref, wsc_ref, o_ref, osc_ref, slab_ref,
                       *, D, H, W, Cin, halo):
    S = D * H * W
    xv = xp_ref[0]
    _fill_slab(xv, m_ref, slab_ref, D=D, H=H, W=W, Cin=Cin, halo=halo)
    o_ref[0] = jnp.dot(w_ref[...], slab_ref[...],
                       preferred_element_type=jnp.float32).astype(o_ref.dtype)
    xc = xv[:, halo:halo + S]                                     # center tap == original x
    osc_ref[0] = jnp.dot(wsc_ref[...], xc,
                         preferred_element_type=jnp.float32).astype(osc_ref.dtype)


def conv3x3(xpad, masks, wmat, *, D, H, W):
    N, Cin, Spad = xpad.shape
    Cout = wmat.shape[0]
    S = D * H * W
    halo = H * W + W + 1
    kern = functools.partial(_conv3x3_kernel, D=D, H=H, W=W, Cin=Cin, halo=halo)
    # TODO(synk): for large D*H*W, add an S-tiling grid axis (tile-local masks/offsets)
    # and set vmem_limit_bytes so the slab + I/O blocks fit v7x's 64 MiB VMEM.
    return pl.pallas_call(
        kern,
        out_shape=jax.ShapeDtypeStruct((N, Cout, S), jnp.float32),
        grid_spec=pltpu.PrefetchScalarGridSpec(
            num_scalar_prefetch=0,
            grid=(N,),
            in_specs=[
                pl.BlockSpec((1, Cin, Spad), lambda n: (n, 0, 0)),
                pl.BlockSpec((27, S), lambda n: (0, 0)),
                pl.BlockSpec((Cout, 27 * Cin), lambda n: (0, 0)),
            ],
            out_specs=pl.BlockSpec((1, Cout, S), lambda n: (n, 0, 0)),
            scratch_shapes=[pltpu.VMEM((27 * Cin, S), jnp.bfloat16)],
        ),
        compiler_params=pltpu.CompilerParams(dimension_semantics=("parallel",)),
    )(xpad, masks, wmat)


def conv3x3_with_shortcut(xpad, masks, wmat, wsc, *, D, H, W):
    """conv1 (3x3x3) and the 1x1x1 shortcut computed from the same input DMA."""
    N, Cin, Spad = xpad.shape
    Cmid = wmat.shape[0]
    Cout = wsc.shape[0]
    S = D * H * W
    halo = H * W + W + 1
    kern = functools.partial(_conv3x3_sc_kernel, D=D, H=H, W=W, Cin=Cin, halo=halo)
    return pl.pallas_call(
        kern,
        out_shape=(jax.ShapeDtypeStruct((N, Cmid, S), jnp.float32),
                   jax.ShapeDtypeStruct((N, Cout, S), jnp.float32)),
        grid_spec=pltpu.PrefetchScalarGridSpec(
            num_scalar_prefetch=0,
            grid=(N,),
            in_specs=[
                pl.BlockSpec((1, Cin, Spad), lambda n: (n, 0, 0)),
                pl.BlockSpec((27, S), lambda n: (0, 0)),
                pl.BlockSpec((Cmid, 27 * Cin), lambda n: (0, 0)),
                pl.BlockSpec((Cout, Cin), lambda n: (0, 0)),
            ],
            out_specs=[pl.BlockSpec((1, Cmid, S), lambda n: (n, 0, 0)),
                       pl.BlockSpec((1, Cout, S), lambda n: (n, 0, 0))],
            scratch_shapes=[pltpu.VMEM((27 * Cin, S), jnp.bfloat16)],
        ),
        compiler_params=pltpu.CompilerParams(dimension_semantics=("parallel",)),
    )(xpad, masks, wmat, wsc)


# ----------------------------------------------------------------------------
# Kernel 2: fused (conv-bias) + GroupNorm + (residual add) + LeakyReLU.
# One grid step per sample, block (1, C, S) fp32.  Group statistics are built
# with per-channel lane reductions combined by a tiny same-group indicator
# matmul (A: (C, C)), so everything stays in the dense (C, S) layout.
# ----------------------------------------------------------------------------
def _gn_core(x, p, A, res, *, n_per_group, eps, slope):
    # x: (C, S) f32; p: (C, 3) f32 = [bias | gamma | beta]; A: (C, C) 0/1 same-group.
    bias = p[:, 0:1]
    gamma = p[:, 1:2]
    beta = p[:, 2:3]
    xb = x + bias                                                  # conv bias folded here
    grp_sum = jnp.dot(A, xb, preferred_element_type=jnp.float32)       # (C, S)
    grp_ssq = jnp.dot(A, xb * xb, preferred_element_type=jnp.float32)  # (C, S)
    inv_n = 1.0 / n_per_group
    mean = jnp.sum(grp_sum, axis=1, keepdims=True) * inv_n             # (C, 1) per-group
    ex2 = jnp.sum(grp_ssq, axis=1, keepdims=True) * inv_n
    var = ex2 - mean * mean
    inv = lax.rsqrt(var + eps)
    y = (xb - mean) * (inv * gamma) + beta
    if res is not None:
        y = y + res
    return jnp.where(y >= 0.0, y, slope * y)                           # LeakyReLU


def _gn_act_kernel(x_ref, p_ref, A_ref, o_ref, *, n_per_group, eps, slope):
    y = _gn_core(x_ref[0].astype(jnp.float32), p_ref[...], A_ref[...], None,
                 n_per_group=n_per_group, eps=eps, slope=slope)
    o_ref[0] = y.astype(o_ref.dtype)


def _gn_res_act_kernel(x_ref, res_ref, p_ref, A_ref, o_ref, *, n_per_group, eps, slope):
    y = _gn_core(x_ref[0].astype(jnp.float32), p_ref[...], A_ref[...],
                 res_ref[0].astype(jnp.float32),
                 n_per_group=n_per_group, eps=eps, slope=slope)
    o_ref[0] = y.astype(o_ref.dtype)


def groupnorm_bias_act(x, bias, gamma, beta, *, groups, residual=None,
                       out_dtype=jnp.float32, eps=1e-5, slope=0.01):
    # x: (N, C, S) fp32 conv output WITHOUT bias.
    N, C, S = x.shape
    assert C % groups == 0
    Cpg = C // groups
    p = jnp.stack([bias, gamma, beta], axis=1).astype(jnp.float32)      # (C, 3)
    gidx = jnp.arange(C) // Cpg
    A = (gidx[:, None] == gidx[None, :]).astype(jnp.float32)            # (C, C)
    kw = dict(n_per_group=float(Cpg * S), eps=eps, slope=slope)
    x_spec = pl.BlockSpec((1, C, S), lambda n: (n, 0, 0))
    p_spec = pl.BlockSpec((C, 3), lambda n: (0, 0))
    a_spec = pl.BlockSpec((C, C), lambda n: (0, 0))
    if residual is None:
        kern = functools.partial(_gn_act_kernel, **kw)
        in_specs = [x_spec, p_spec, a_spec]
        args = (x, p, A)
    else:
        kern = functools.partial(_gn_res_act_kernel, **kw)
        in_specs = [x_spec, x_spec, p_spec, a_spec]
        args = (x, residual.astype(jnp.float32), p, A)
    # TODO(synk): for very large S, tile S (grid axis "arbitrary") with sum/sumsq
    # accumulators so the block fits v7x's 64 MiB VMEM.
    return pl.pallas_call(
        kern,
        out_shape=jax.ShapeDtypeStruct((N, C, S), out_dtype),
        grid_spec=pltpu.PrefetchScalarGridSpec(
            num_scalar_prefetch=0,
            grid=(N,),
            in_specs=in_specs,
            out_specs=x_spec,
        ),
        compiler_params=pltpu.CompilerParams(dimension_semantics=("parallel",)),
    )(*args)


# ----------------------------------------------------------------------------
# BasicBlock forward (stride=1; in_channels != out_channels -> 1x1 conv shortcut).
# ----------------------------------------------------------------------------
def basic_block_forward(x, params, *, groups=8):
    # x: (N, Cin, D, H, W) fp32 (PyTorch NCDHW).
    N, Cin, D, H, W = x.shape
    Cmid = params["w1"].shape[0]
    Cout = params["w2"].shape[0]
    S = D * H * W
    halo = H * W + W + 1                       # max |flat shift| of any 3x3x3 tap

    # Tap validity masks (0/1): zero out neighbors that fall outside the D/H/W box.
    d = jnp.arange(D)[:, None, None]
    h = jnp.arange(H)[None, :, None]
    w = jnp.arange(W)[None, None, :]
    masks = []
    for kd in range(3):
        for kh in range(3):
            for kw_ in range(3):
                m = ((d + kd - 1 >= 0) & (d + kd - 1 < D) &
                     (h + kh - 1 >= 0) & (h + kh - 1 < H) &
                     (w + kw_ - 1 >= 0) & (w + kw_ - 1 < W))
                masks.append(m.reshape(-1))
    masks = jnp.stack(masks, axis=0).astype(jnp.bfloat16)              # (27, S)

    # Weights in GEMM layout: rows = Cout, cols ordered (kd, kh, kw, Cin) to match the slab.
    w1m = params["w1"].transpose(0, 2, 3, 4, 1).reshape(Cmid, 27 * Cin).astype(jnp.bfloat16)
    w2m = params["w2"].transpose(0, 2, 3, 4, 1).reshape(Cout, 27 * Cmid).astype(jnp.bfloat16)
    wsc = params["w_sc"].reshape(Cout, Cin).astype(jnp.bfloat16)

    # conv1 + 1x1 shortcut in one pallas_call (shared input DMA / slab).
    x_ncs = x.reshape(N, Cin, S).astype(jnp.bfloat16)
    xpad = jnp.pad(x_ncs, ((0, 0), (0, 0), (halo, halo)))
    y1, shortcut = conv3x3_with_shortcut(xpad, masks, w1m, wsc, D=D, H=H, W=W)

    # drop1: p=0 -> identity.  bias1 + GroupNorm + LeakyReLU; bf16 out feeds conv2's MXU.
    h1 = groupnorm_bias_act(y1, params["b1"], params["gamma1"], params["beta1"],
                            groups=groups, out_dtype=jnp.bfloat16)

    h1pad = jnp.pad(h1, ((0, 0), (0, 0), (halo, halo)))
    y2 = conv3x3(h1pad, masks, w2m, D=D, H=H, W=W)

    # drop2: p=0 -> identity.  bias2 + GroupNorm + shortcut add + LeakyReLU.
    out = groupnorm_bias_act(y2, params["b2"], params["gamma2"], params["beta2"],
                             groups=groups, residual=shortcut,
                             out_dtype=jnp.float32)
    return out.reshape(N, Cout, D, H, W)


def init_params(key, in_channels, mid_channels, out_channels):
    ks = jax.random.split(key, 7)
    scale = 0.1
    return {
        "w1": scale * jax.random.normal(ks[0], (mid_channels, in_channels, 3, 3, 3), jnp.float32),
        "b1": scale * jax.random.normal(ks[1], (mid_channels,), jnp.float32),
        "gamma1": 1.0 + scale * jax.random.normal(ks[2], (mid_channels,), jnp.float32),
        "beta1": scale * jax.random.normal(ks[3], (mid_channels,), jnp.float32),
        "w2": scale * jax.random.normal(ks[4], (out_channels, mid_channels, 3, 3, 3), jnp.float32),
        "b2": scale * jax.random.normal(ks[5], (out_channels,), jnp.float32),
        "gamma2": jnp.ones((out_channels,), jnp.float32),
        "beta2": jnp.zeros((out_channels,), jnp.float32),
        "w_sc": scale * jax.random.normal(ks[6], (out_channels, in_channels, 1, 1, 1), jnp.float32),
    }


# ----------------------------------------------------------------------------
# Pure-JAX/XLA reference (mirrors the PyTorch module; bf16 matmul inputs with
# fp32 accumulation, like the Pallas path) used only for a sanity check.
# ----------------------------------------------------------------------------
def _reference_forward(x, params, *, groups=8):
    dn = ("NCDHW", "OIDHW", "NCDHW")
    bf = jnp.bfloat16

    def conv3(v, wgt):
        return lax.conv_general_dilated(
            v.astype(bf), wgt.astype(bf), window_strides=(1, 1, 1),
            padding=((1, 1), (1, 1), (1, 1)), dimension_numbers=dn,
            preferred_element_type=jnp.float32)

    def gn(v, bias, gamma, beta):
        N, C = v.shape[:2]
        vb = v + bias.reshape(1, C, 1, 1, 1)
        vg = vb.reshape(N, groups, -1)
        m = jnp.mean(vg, axis=2, keepdims=True)
        var = jnp.mean(jnp.square(vg - m), axis=2, keepdims=True)
        vn = ((vg - m) * lax.rsqrt(var + 1e-5)).reshape(vb.shape)
        return vn * gamma.reshape(1, C, 1, 1, 1) + beta.reshape(1, C, 1, 1, 1)

    def lrelu(v):
        return jnp.where(v >= 0, v, 0.01 * v)

    shortcut = lax.conv_general_dilated(
        x.astype(bf), params["w_sc"].astype(bf), window_strides=(1, 1, 1),
        padding="VALID", dimension_numbers=dn, preferred_element_type=jnp.float32)
    h = lrelu(gn(conv3(x, params["w1"]), params["b1"], params["gamma1"], params["beta1"]))
    h = h.astype(bf)   # the Pallas path stores the intermediate activation in bf16
    y = gn(conv3(h, params["w2"]), params["b2"], params["gamma2"], params["beta2"])
    return lrelu(y + shortcut)


if __name__ == "__main__":
    key = jax.random.PRNGKey(0)
    k_in, k_par = jax.random.split(key)

    # Small GroupNorm(8)-compatible shapes; S = D*H*W = 256 keeps the lane dim 128-aligned.
    N, Cin, Cmid, Cout, D, H, W = 2, 8, 16, 16, 4, 8, 8
    x = jax.random.normal(k_in, (N, Cin, D, H, W), jnp.float32)
    params = init_params(k_par, Cin, Cmid, Cout)

    fwd = jax.jit(functools.partial(basic_block_forward, groups=8))
    out = fwd(x, params)
    jax.block_until_ready(out)
    assert out.shape == (N, Cout, D, H, W)

    ref = _reference_forward(x, params, groups=8)
    max_err = float(jnp.max(jnp.abs(out - ref)))
    assert max_err < 5e-2, f"mismatch vs reference: {max_err}"
    print("KERNEL_OK")
</pallas_src>

<mosaic_0001>
module attributes {stable_mosaic.version = 11 : i64} {
  func.func @_gn_act_kernel(%arg0: i32, %arg1: memref<1x16x256xf32, #tpu.memory_space<vmem>>, %arg2: memref<16x3xf32, #tpu.memory_space<vmem>>, %arg3: memref<16x16xf32, #tpu.memory_space<vmem>>, %arg4: memref<1x16x256xbf16, #tpu.memory_space<vmem>>) attributes {dimension_semantics = [#tpu.dimension_semantics<parallel>], iteration_bounds = array<i64: 2>, scalar_prefetch = 0 : i64, scratch_operands = 0 : i64, tpu.core_type = #tpu.core_type<tc>, window_params = [{transform_indices = @transform_0, window_bounds = array<i64: 1, 16, 256>}, {pipeline_mode = #tpu.pipeline_mode<synchronous>, transform_indices = @transform_1, window_bounds = array<i64: 16, 3>}, {pipeline_mode = #tpu.pipeline_mode<synchronous>, transform_indices = @transform_2, window_bounds = array<i64: 16, 16>}, {transform_indices = @transform_3, window_bounds = array<i64: 1, 16, 256>}]} {
    %c0 = arith.constant 0 : index
    %c0_0 = arith.constant 0 : index
    %c0_1 = arith.constant 0 : index
    %0 = vector.load %arg1[%c0, %c0_0, %c0_1] : memref<1x16x256xf32, #tpu.memory_space<vmem>>, vector<1x16x256xf32>
    %1 = vector.shape_cast %0 : vector<1x16x256xf32> to vector<16x256xf32>
    %c0_2 = arith.constant 0 : index
    %c0_3 = arith.constant 0 : index
    %2 = vector.load %arg2[%c0_2, %c0_3] : memref<16x3xf32, #tpu.memory_space<vmem>>, vector<16x3xf32>
    %c0_4 = arith.constant 0 : index
    %c0_5 = arith.constant 0 : index
    %3 = vector.load %arg3[%c0_4, %c0_5] : memref<16x16xf32, #tpu.memory_space<vmem>>, vector<16x16xf32>
    %4 = vector.extract_strided_slice %2 {offsets = [0, 0], sizes = [16, 1], strides = [1, 1]} : vector<16x3xf32> to vector<16x1xf32>
    %5 = vector.extract_strided_slice %2 {offsets = [0, 1], sizes = [16, 1], strides = [1, 1]} : vector<16x3xf32> to vector<16x1xf32>
    %6 = vector.extract_strided_slice %2 {offsets = [0, 2], sizes = [16, 1], strides = [1, 1]} : vector<16x3xf32> to vector<16x1xf32>
    %7 = vector.broadcast %4 : vector<16x1xf32> to vector<16x256xf32>
    %8 = arith.addf %1, %7 : vector<16x256xf32>
    %cst = arith.constant dense<0.000000e+00> : vector<16x256xf32>
    %9 = tpu.matmul %3, %8, %cst {dimension_numbers = #tpu.dot_dimension_numbers<[1], [0], [0], [1], [0, 0, 1, 1], [], []>} : vector<16x16xf32>, vector<16x256xf32>, vector<16x256xf32> -> vector<16x256xf32>
    %10 = arith.mulf %8, %8 : vector<16x256xf32>
    %cst_6 = arith.constant dense<0.000000e+00> : vector<16x256xf32>
    %11 = tpu.matmul %3, %10, %cst_6 {dimension_numbers = #tpu.dot_dimension_numbers<[1], [0], [0], [1], [0, 0, 1, 1], [], []>} : vector<16x16xf32>, vector<16x256xf32>, vector<16x256xf32> -> vector<16x256xf32>
    %cst_7 = arith.constant dense<0.000000e+00> : vector<16xf32>
    %12 = vector.multi_reduction <add>, %9, %cst_7 [1] : vector<16x256xf32> to vector<16xf32>
    %13 = vector.shape_cast %12 : vector<16xf32> to vector<16x1xf32>
    %cst_8 = arith.constant 0.001953125 : f32
    %14 = vector.broadcast %cst_8 : f32 to vector<16x1xf32>
    %15 = arith.mulf %13, %14 : vector<16x1xf32>
    %cst_9 = arith.constant dense<0.000000e+00> : vector<16xf32>
    %16 = vector.multi_reduction <add>, %11, %cst_9 [1] : vector<16x256xf32> to vector<16xf32>
    %17 = vector.shape_cast %16 : vector<16xf32> to vector<16x1xf32>
    %cst_10 = arith.constant 0.001953125 : f32
    %18 = vector.broadcast %cst_10 : f32 to vector<16x1xf32>
    %19 = arith.mulf %17, %18 : vector<16x1xf32>
    %20 = arith.mulf %15, %15 : vector<16x1xf32>
    %21 = arith.subf %19, %20 : vector<16x1xf32>
    %cst_11 = arith.constant 9.99999974E-6 : f32
    %22 = vector.broadcast %cst_11 : f32 to vector<16x1xf32>
    %23 = arith.addf %21, %22 : vector<16x1xf32>
    %24 = math.rsqrt %23 : vector<16x1xf32>
    %25 = vector.broadcast %15 : vector<16x1xf32> to vector<16x256xf32>
    %26 = arith.subf %8, %25 : vector<16x256xf32>
    %27 = arith.mulf %24, %5 : vector<16x1xf32>
    %28 = vector.broadcast %27 : vector<16x1xf32> to vector<16x256xf32>
    %29 = arith.mulf %26, %28 : vector<16x256xf32>
    %30 = vector.broadcast %6 : vector<16x1xf32> to vector<16x256xf32>
    %31 = arith.addf %29, %30 : vector<16x256xf32>
    %cst_12 = arith.constant 0.000000e+00 : f32
    %32 = vector.broadcast %cst_12 : f32 to vector<16x256xf32>
    %33 = arith.cmpf oge, %31, %32 : vector<16x256xf32>
    %cst_13 = arith.constant 0.00999999977 : f32
    %34 = vector.broadcast %cst_13 : f32 to vector<16x256xf32>
    %35 = arith.mulf %34, %31 : vector<16x256xf32>
    %36 = arith.select %33, %31, %35 : vector<16x256xi1>, vector<16x256xf32>
    %37 = arith.truncf %36 : vector<16x256xf32> to vector<16x256xbf16>
    %c0_14 = arith.constant 0 : index
    %c0_15 = arith.constant 0 : index
    %c0_16 = arith.constant 0 : index
    %38 = vector.load %arg4[%c0_14, %c0_15, %c0_16] : memref<1x16x256xbf16, #tpu.memory_space<vmem>>, vector<1x16x256xbf16>
    %39 = vector.shape_cast %38 : vector<1x16x256xbf16> to vector<16x256xbf16>
    %40 = vector.shape_cast %37 : vector<16x256xbf16> to vector<1x16x256xbf16>
    tpu.vector_store %arg4[%c0_14, %c0_15, %c0_16], %40 {strides = array<i32>} : memref<1x16x256xbf16, #tpu.memory_space<vmem>>, vector<1x16x256xbf16>,
    return
  }
  func.func @transform_0(%arg0: i32) -> (i32, i32, i32) {
    %c0_i32 = arith.constant 0 : i32
    %c0_i32_0 = arith.constant 0 : i32
    %c0_i32_1 = arith.constant 0 : i32
    return %arg0, %c0_i32, %c0_i32_0 : i32, i32, i32
  }
  func.func @transform_1(%arg0: i32) -> (i32, i32) {
    %c0_i32 = arith.constant 0 : i32
    %c0_i32_0 = arith.constant 0 : i32
    %c0_i32_1 = arith.constant 0 : i32
    return %c0_i32, %c0_i32_0 : i32, i32
  }
  func.func @transform_2(%arg0: i32) -> (i32, i32) {
    %c0_i32 = arith.constant 0 : i32
    %c0_i32_0 = arith.constant 0 : i32
    %c0_i32_1 = arith.constant 0 : i32
    return %c0_i32, %c0_i32_0 : i32, i32
  }
  func.func @transform_3(%arg0: i32) -> (i32, i32, i32) {
    %c0_i32 = arith.constant 0 : i32
    %c0_i32_0 = arith.constant 0 : i32
    %c0_i32_1 = arith.constant 0 : i32
    return %arg0, %c0_i32, %c0_i32_0 : i32, i32, i32
  }
}

module attributes {stable_mosaic.version = 11 : i64} {
  func.func @_conv3x3_sc_kernel(%arg0: i32, %arg1: memref<1x8x402xbf16, #tpu.memory_space<vmem>>, %arg2: memref<27x256xbf16, #tpu.memory_space<vmem>>, %arg3: memref<16x216xbf16, #tpu.memory_space<vmem>>, %arg4: memref<16x8xbf16, #tpu.memory_space<vmem>>, %arg5: memref<1x16x256xf32, #tpu.memory_space<vmem>>, %arg6: memref<1x16x256xf32, #tpu.memory_space<vmem>>, %arg7: memref<216x256xbf16, #tpu.memory_space<vmem>>) attributes {dimension_semantics = [#tpu.dimension_semantics<parallel>], iteration_bounds = array<i64: 2>, scalar_prefetch = 0 : i64, scratch_operands = 1 : i64, tpu.core_type = #tpu.core_type<tc>, window_params = [{transform_indices = @transform_0, window_bounds = array<i64: 1, 8, 402>}, {pipeline_mode = #tpu.pipeline_mode<synchronous>, transform_indices = @transform_1, window_bounds = array<i64: 27, 256>}, {pipeline_mode = #tpu.pipeline_mode<synchronous>, transform_indices = @transform_2, window_bounds = array<i64: 16, 216>}, {pipeline_mode = #tpu.pipeline_mode<synchronous>, transform_indices = @transform_3, window_bounds = array<i64: 16, 8>}, {transform_indices = @transform_4, window_bounds = array<i64: 1, 16, 256>}, {transform_indices = @transform_5, window_bounds = array<i64: 1, 16, 256>}]} {
    %c0 = arith.constant 0 : index
    %c0_0 = arith.constant 0 : index
    %c0_1 = arith.constant 0 : index
    %0 = vector.load %arg1[%c0, %c0_0, %c0_1] : memref<1x8x402xbf16, #tpu.memory_space<vmem>>, vector<1x8x402xbf16>
    %1 = vector.shape_cast %0 : vector<1x8x402xbf16> to vector<8x402xbf16>
    %2 = vector.extract_strided_slice %1 {offsets = [0, 0], sizes = [8, 256], strides = [1, 1]} : vector<8x402xbf16> to vector<8x256xbf16>
    %c0_2 = arith.constant 0 : index
    %c0_3 = arith.constant 0 : index
    %3 = vector.load %arg2[%c0_2, %c0_3] : memref<27x256xbf16, #tpu.memory_space<vmem>>, vector<1x256xbf16>
    %4 = vector.broadcast %3 : vector<1x256xbf16> to vector<8x256xbf16>
    %5 = arith.mulf %2, %4 : vector<8x256xbf16>
    %c0_4 = arith.constant 0 : index
    %c0_5 = arith.constant 0 : index
    %6 = vector.load %arg7[%c0_4, %c0_5] : memref<216x256xbf16, #tpu.memory_space<vmem>>, vector<8x256xbf16>
    tpu.vector_store %arg7[%c0_4, %c0_5], %5 {strides = array<i32>} : memref<216x256xbf16, #tpu.memory_space<vmem>>, vector<8x256xbf16>,
    %7 = vector.extract_strided_slice %1 {offsets = [0, 1], sizes = [8, 256], strides = [1, 1]} : vector<8x402xbf16> to vector<8x256xbf16>
    %c1 = arith.constant 1 : index
    %c0_6 = arith.constant 0 : index
    %8 = vector.load %arg2[%c1, %c0_6] : memref<27x256xbf16, #tpu.memory_space<vmem>>, vector<1x256xbf16>
    %9 = vector.broadcast %8 : vector<1x256xbf16> to vector<8x256xbf16>
    %10 = arith.mulf %7, %9 : vector<8x256xbf16>
    %c8 = arith.constant 8 : index
    %c0_7 = arith.constant 0 : index
    %11 = vector.load %arg7[%c8, %c0_7] : memref<216x256xbf16, #tpu.memory_space<vmem>>, vector<8x256xbf16>
    tpu.vector_store %arg7[%c8, %c0_7], %10 {strides = array<i32>} : memref<216x256xbf16, #tpu.memory_space<vmem>>, vector<8x256xbf16>,
    %12 = vector.extract_strided_slice %1 {offsets = [0, 2], sizes = [8, 256], strides = [1, 1]} : vector<8x402xbf16> to vector<8x256xbf16>
    %c2 = arith.constant 2 : index
    %c0_8 = arith.constant 0 : index
    %13 = vector.load %arg2[%c2, %c0_8] : memref<27x256xbf16, #tpu.memory_space<vmem>>, vector<1x256xbf16>
    %14 = vector.broadcast %13 : vector<1x256xbf16> to vector<8x256xbf16>
    %15 = arith.mulf %12, %14 : vector<8x256xbf16>
    %c16 = arith.constant 16 : index
    %c0_9 = arith.constant 0 : index
    %16 = vector.load %arg7[%c16, %c0_9] : memref<216x256xbf16, #tpu.memory_space<vmem>>, vector<8x256xbf16>
    tpu.vector_store %arg7[%c16, %c0_9], %15 {strides = array<i32>} : memref<216x256xbf16, #tpu.memory_space<vmem>>, vector<8x256xbf16>,
    %17 = vector.extract_strided_slice %1 {offsets = [0, 8], sizes = [8, 256], strides = [1, 1]} : vector<8x402xbf16> to vector<8x256xbf16>
    %c3 = arith.constant 3 : index
    %c0_10 = arith.constant 0 : index
    %18 = vector.load %arg2[%c3, %c0_10] : memref<27x256xbf16, #tpu.memory_space<vmem>>, vector<1x256xbf16>
    %19 = vector.broadcast %18 : vector<1x256xbf16> to vector<8x256xbf16>
    %20 = arith.mulf %17, %19 : vector<8x256xbf16>
    %c24 = arith.constant 24 : index
    %c0_11 = arith.constant 0 : index
    %21 = vector.load %arg7[%c24, %c0_11] : memref<216x256xbf16, #tpu.memory_space<vmem>>, vector<8x256xbf16>
    tpu.vector_store %arg7[%c24, %c0_11], %20 {strides = array<i32>} : memref<216x256xbf16, #tpu.memory_space<vmem>>, vector<8x256xbf16>,
    %22 = vector.extract_strided_slice %1 {offsets = [0, 9], sizes = [8, 256], strides = [1, 1]} : vector<8x402xbf16> to vector<8x256xbf16>
    %c4 = arith.constant 4 : index
    %c0_12 = arith.constant 0 : index
    %23 = vector.load %arg2[%c4, %c0_12] : memref<27x256xbf16, #tpu.memory_space<vmem>>, vector<1x256xbf16>
    %24 = vector.broadcast %23 : vector<1x256xbf16> to vector<8x256xbf16>
    %25 = arith.mulf %22, %24 : vector<8x256xbf16>
    %c32 = arith.constant 32 : index
    %c0_13 = arith.constant 0 : index
    %26 = vector.load %arg7[%c32, %c0_13] : memref<216x256xbf16, #tpu.memory_space<vmem>>, vector<8x256xbf16>
    tpu.vector_store %arg7[%c32, %c0_13], %25 {strides = array<i32>} : memref<216x256xbf16, #tpu.memory_space<vmem>>, vector<8x256xbf16>,
    %27 = vector.extract_strided_slice %1 {offsets = [0, 10], sizes = [8, 256], strides = [1, 1]} : vector<8x402xbf16> to vector<8x256xbf16>
    %c5 = arith.constant 5 : index
    %c0_14 = arith.constant 0 : index
    %28 = vector.load %arg2[%c5, %c0_14] : memref<27x256xbf16, #tpu.memory_space<vmem>>, vector<1x256xbf16>
    %29 = vector.broadcast %28 : vector<1x256xbf16> to vector<8x256xbf16>
    %30 = arith.mulf %27, %29 : vector<8x256xbf16>
    %c40 = arith.constant 40 : index
    %c0_15 = arith.constant 0 : index
    %31 = vector.load %arg7[%c40, %c0_15] : memref<216x256xbf16, #tpu.memory_space<vmem>>, vector<8x256xbf16>
    tpu.vector_store %arg7[%c40, %c0_15], %30 {strides = array<i32>} : memref<216x256xbf16, #tpu.memory_space<vmem>>, vector<8x256xbf16>,
    %32 = vector.extract_strided_slice %1 {offsets = [0, 16], sizes = [8, 256], strides = [1, 1]} : vector<8x402xbf16> to vector<8x256xbf16>
    %c6 = arith.constant 6 : index
    %c0_16 = arith.constant 0 : index
    %33 = vector.load %arg2[%c6, %c0_16] : memref<27x256xbf16, #tpu.memory_space<vmem>>, vector<1x256xbf16>
    %34 = vector.broadcast %33 : vector<1x256xbf16> to vector<8x256xbf16>
    %35 = arith.mulf %32, %34 : vector<8x256xbf16>
    %c48 = arith.constant 48 : index
    %c0_17 = arith.constant 0 : index
    %36 = vector.load %arg7[%c48, %c0_17] : memref<216x256xbf16, #tpu.memory_space<vmem>>, vector<8x256xbf16>
    tpu.vector_store %arg7[%c48, %c0_17], %35 {strides = array<i32>} : memref<216x256xbf16, #tpu.memory_space<vmem>>, vector<8x256xbf16>,
    %37 = vector.extract_strided_slice %1 {offsets = [0, 17], sizes = [8, 256], strides = [1, 1]} : vector<8x402xbf16> to vector<8x256xbf16>
    %c7 = arith.constant 7 : index
    %c0_18 = arith.constant 0 : index
    %38 = vector.load %arg2[%c7, %c0_18] : memref<27x256xbf16, #tpu.memory_space<vmem>>, vector<1x256xbf16>
    %39 = vector.broadcast %38 : vector<1x256xbf16> to vector<8x256xbf16>
    %40 = arith.mulf %37, %39 : vector<8x256xbf16>
    %c56 = arith.constant 56 : index
    %c0_19 = arith.constant 0 : index
    %41 = vector.load %arg7[%c56, %c0_19] : memref<216x256xbf16, #tpu.memory_space<vmem>>, vector<8x256xbf16>
    tpu.vector_store %arg7[%c56, %c0_19], %40 {strides = array<i32>} : memref<216x256xbf16, #tpu.memory_space<vmem>>, vector<8x256xbf16>,
    %42 = vector.extract_strided_slice %1 {offsets = [0, 18], sizes = [8, 256], strides = [1, 1]} : vector<8x402xbf16> to vector<8x256xbf16>
    %c8_20 = arith.constant 8 : index
    %c0_21 = arith.constant 0 : index
    %43 = vector.load %arg2[%c8_20, %c0_21] : memref<27x256xbf16, #tpu.memory_space<vmem>>, vector<1x256xbf16>
    %44 = vector.broadcast %43 : vector<1x256xbf16> to vector<8x256xbf16>
    %45 = arith.mulf %42, %44 : vector<8x256xbf16>
    %c64 = arith.constant 64 : index
    %c0_22 = arith.constant 0 : index
    %46 = vector.load %arg7[%c64, %c0_22] : memref<216x256xbf16, #tpu.memory_space<vmem>>, vector<8x256xbf16>
    tpu.vector_store %arg7[%c64, %c0_22], %45 {strides = array<i32>} : memref<216x256xbf16, #tpu.memory_space<vmem>>, vector<8x256xbf16>,
    %47 = vector.extract_strided_slice %1 {offsets = [0, 64], sizes = [8, 256], strides = [1, 1]} : vector<8x402xbf16> to vector<8x256xbf16>
    %c9 = arith.constant 9 : index
    %c0_23 = arith.constant 0 : index
    %48 = vector.load %arg2[%c9, %c0_23] : memref<27x256xbf16, #tpu.memory_space<vmem>>, vector<1x256xbf16>
    %49 = vector.broadcast %48 : vector<1x256xbf16> to vector<8x256xbf16>
    %50 = arith.mulf %47, %49 : vector<8x256xbf16>
    %c72 = arith.constant 72 : index
    %c0_24 = arith.constant 0 : index
    %51 = vector.load %arg7[%c72, %c0_24] : memref<216x256xbf16, #tpu.memory_space<vmem>>, vector<8x256xbf16>
    tpu.vector_store %arg7[%c72, %c0_24], %50 {strides = array<i32>} : memref<216x256xbf16, #tpu.memory_space<vmem>>, vector<8x256xbf16>,
    %52 = vector.extract_strided_slice %1 {offsets = [0, 65], sizes = [8, 256], strides = [1, 1]} : vector<8x402xbf16> to vector<8x256xbf16>
    %c10 = arith.constant 10 : index
    %c0_25 = arith.constant 0 : index
    %53 = vector.load %arg2[%c10, %c0_25] : memref<27x256xbf16, #tpu.memory_space<vmem>>, vector<1x256xbf16>
    %54 = vector.broadcast %53 : vector<1x256xbf16> to vector<8x256xbf16>
    %55 = arith.mulf %52, %54 : vector<8x256xbf16>
    %c80 = arith.constant 80 : index
    %c0_26 = arith.constant 0 : index
    %56 = vector.load %arg7[%c80, %c0_26] : memref<216x256xbf16, #tpu.memory_space<vmem>>, vector<8x256xbf16>
    tpu.vector_store %arg7[%c80, %c0_26], %55 {strides = array<i32>} : memref<216x256xbf16, #tpu.memory_space<vmem>>, vector<8x256xbf16>,
    %57 = vector.extract_strided_slice %1 {offsets = [0, 66], sizes = [8, 256], strides = [1, 1]} : vector<8x402xbf16> to vector<8x256xbf16>
    %c11 = arith.constant 11 : index
    %c0_27 = arith.constant 0 : index
    %58 = vector.load %arg2[%c11, %c0_27] : memref<27x256xbf16, #tpu.memory_space<vmem>>, vector<1x256xbf16>
    %59 = vector.broadcast %58 : vector<1x256xbf16> to vector<8x256xbf16>
    %60 = arith.mulf %57, %59 : vector<8x256xbf16>
    %c88 = arith.constant 88 : index
    %c0_28 = arith.constant 0 : index
    %61 = vector.load %arg7[%c88, %c0_28] : memref<216x256xbf16, #tpu.memory_space<vmem>>, vector<8x256xbf16>
    tpu.vector_store %arg7[%c88, %c0_28], %60 {strides = array<i32>} : memref<216x256xbf16, #tpu.memory_space<vmem>>, vector<8x256xbf16>,
    %62 = vector.extract_strided_slice %1 {offsets = [0, 72], sizes = [8, 256], strides = [1, 1]} : vector<8x402xbf16> to vector<8x256xbf16>
    %c12 = arith.constant 12 : index
    %c0_29 = arith.constant 0 : index
    %63 = vector.load %arg2[%c12, %c0_29] : memref<27x256xbf16, #tpu.memory_space<vmem>>, vector<1x256xbf16>
    %64 = vector.broadcast %63 : vector<1x256xbf16> to vector<8x256xbf16>
    %65 = arith.mulf %62, %64 : vector<8x256xbf16>
    %c96 = arith.constant 96 : index
    %c0_30 = arith.constant 0 : index
    %66 = vector.load %arg7[%c96, %c0_30] : memref<216x256xbf16, #tpu.memory_space<vmem>>, vector<8x256xbf16>
    tpu.vector_store %arg7[%c96, %c0_30], %65 {strides = array<i32>} : memref<216x256xbf16, #tpu.memory_space<vmem>>, vector<8x256xbf16>,
    %67 = vector.extract_strided_slice %1 {offsets = [0, 73], sizes = [8, 256], strides = [1, 1]} : vector<8x402xbf16> to vector<8x256xbf16>
    %c13 = arith.constant 13 : index
    %c0_31 = arith.constant 0 : index
    %68 = vector.load %arg2[%c13, %c0_31] : memref<27x256xbf16, #tpu.memory_space<vmem>>, vector<1x256xbf16>
    %69 = vector.broadcast %68 : vector<1x256xbf16> to vector<8x256xbf16>
    %70 = arith.mulf %67, %69 : vector<8x256xbf16>
    %c104 = arith.constant 104 : index
    %c0_32 = arith.constant 0 : index
    %71 = vector.load %arg7[%c104, %c0_32] : memref<216x256xbf16, #tpu.memory_space<vmem>>, vector<8x256xbf16>
    tpu.vector_store %arg7[%c104, %c0_32], %70 {strides = array<i32>} : memref<216x256xbf16, #tpu.memory_space<vmem>>, vector<8x256xbf16>,
    %72 = vector.extract_strided_slice %1 {offsets = [0, 74], sizes = [8, 256], strides = [1, 1]} : vector<8x402xbf16> to vector<8x256xbf16>
    %c14 = arith.constant 14 : index
    %c0_33 = arith.constant 0 : index
    %73 = vector.load %arg2[%c14, %c0_33] : memref<27x256xbf16, #tpu.memory_space<vmem>>, vector<1x256xbf16>
    %74 = vector.broadcast %73 : vector<1x256xbf16> to vector<8x256xbf16>
    %75 = arith.mulf %72, %74 : vector<8x256xbf16>
    %c112 = arith.constant 112 : index
    %c0_34 = arith.constant 0 : index
    %76 = vector.load %arg7[%c112, %c0_34] : memref<216x256xbf16, #tpu.memory_space<vmem>>, vector<8x256xbf16>
    tpu.vector_store %arg7[%c112, %c0_34], %75 {strides = array<i32>} : memref<216x256xbf16, #tpu.memory_space<vmem>>, vector<8x256xbf16>,
    %77 = vector.extract_strided_slice %1 {offsets = [0, 80], sizes = [8, 256], strides = [1, 1]} : vector<8x402xbf16> to vector<8x256xbf16>
    %c15 = arith.constant 15 : index
    %c0_35 = arith.constant 0 : index
    %78 = vector.load %arg2[%c15, %c0_35] : memref<27x256xbf16, #tpu.memory_space<vmem>>, vector<1x256xbf16>
    %79 = vector.broadcast %78 : vector<1x256xbf16> to vector<8x256xbf16>
    %80 = arith.mulf %77, %79 : vector<8x256xbf16>
    %c120 = arith.constant 120 : index
    %c0_36 = arith.constant 0 : index
    %81 = vector.load %arg7[%c120, %c0_36] : memref<216x256xbf16, #tpu.memory_space<vmem>>, vector<8x256xbf16>
    tpu.vector_store %arg7[%c120, %c0_36], %80 {strides = array<i32>} : memref<216x256xbf16, #tpu.memory_space<vmem>>, vector<8x256xbf16>,
    %82 = vector.extract_strided_slice %1 {offsets = [0, 81], sizes = [8, 256], strides = [1, 1]} : vector<8x402xbf16> to vector<8x256xbf16>
    %c16_37 = arith.constant 16 : index
    %c0_38 = arith.constant 0 : index
    %83 = vector.load %arg2[%c16_37, %c0_38] : memref<27x256xbf16, #tpu.memory_space<vmem>>, vector<1x256xbf16>
    %84 = vector.broadcast %83 : vector<1x256xbf16> to vector<8x256xbf16>
    %85 = arith.mulf %82, %84 : vector<8x256xbf16>
    %c128 = arith.constant 128 : index
    %c0_39 = arith.constant 0 : index
    %86 = vector.load %arg7[%c128, %c0_39] : memref<216x256xbf16, #tpu.memory_space<vmem>>, vector<8x256xbf16>
    tpu.vector_store %arg7[%c128, %c0_39], %85 {strides = array<i32>} : memref<216x256xbf16, #tpu.memory_space<vmem>>, vector<8x256xbf16>,
    %87 = vector.extract_strided_slice %1 {offsets = [0, 82], sizes = [8, 256], strides = [1, 1]} : vector<8x402xbf16> to vector<8x256xbf16>
    %c17 = arith.constant 17 : index
    %c0_40 = arith.constant 0 : index
    %88 = vector.load %arg2[%c17, %c0_40] : memref<27x256xbf16, #tpu.memory_space<vmem>>, vector<1x256xbf16>
    %89 = vector.broadcast %88 : vector<1x256xbf16> to vector<8x256xbf16>
    %90 = arith.mulf %87, %89 : vector<8x256xbf16>
    %c136 = arith.constant 136 : index
    %c0_41 = arith.constant 0 : index
    %91 = vector.load %arg7[%c136, %c0_41] : memref<216x256xbf16, #tpu.memory_space<vmem>>, vector<8x256xbf16>
    tpu.vector_store %arg7[%c136, %c0_41], %90 {strides = array<i32>} : memref<216x256xbf16, #tpu.memory_space<vmem>>, vector<8x256xbf16>,
    %92 = vector.extract_strided_slice %1 {offsets = [0, 128], sizes = [8, 256], strides = [1, 1]} : vector<8x402xbf16> to vector<8x256xbf16>
    %c18 = arith.constant 18 : index
    %c0_42 = arith.constant 0 : index
    %93 = vector.load %arg2[%c18, %c0_42] : memref<27x256xbf16, #tpu.memory_space<vmem>>, vector<1x256xbf16>
    %94 = vector.broadcast %93 : vector<1x256xbf16> to vector<8x256xbf16>
    %95 = arith.mulf %92, %94 : vector<8x256xbf16>
    %c144 = arith.constant 144 : index
    %c0_43 = arith.constant 0 : index
    %96 = vector.load %arg7[%c144, %c0_43] : memref<216x256xbf16, #tpu.memory_space<vmem>>, vector<8x256xbf16>
    tpu.vector_store %arg7[%c144, %c0_43], %95 {strides = array<i32>} : memref<216x256xbf16, #tpu.memory_space<vmem>>, vector<8x256xbf16>,
    %97 = vector.extract_strided_slice %1 {offsets = [0, 129], sizes = [8, 256], strides = [1, 1]} : vector<8x402xbf16> to vector<8x256xbf16>
    %c19 = arith.constant 19 : index
    %c0_44 = arith.constant 0 : index
    %98 = vector.load %arg2[%c19, %c0_44] : memref<27x256xbf16, #tpu.memory_space<vmem>>, vector<1x256xbf16>
    %99 = vector.broadcast %98 : vector<1x256xbf16> to vector<8x256xbf16>
    %100 = arith.mulf %97, %99 : vector<8x256xbf16>
    %c152 = arith.constant 152 : index
    %c0_45 = arith.constant 0 : index
    %101 = vector.load %arg7[%c152, %c0_45] : memref<216x256xbf16, #tpu.memory_space<vmem>>, vector<8x256xbf16>
    tpu.vector_store %arg7[%c152, %c0_45], %100 {strides = array<i32>} : memref<216x256xbf16, #tpu.memory_space<vmem>>, vector<8x256xbf16>,
    %102 = vector.extract_strided_slice %1 {offsets = [0, 130], sizes = [8, 256], strides = [1, 1]} : vector<8x402xbf16> to vector<8x256xbf16>
    %c20 = arith.constant 20 : index
    %c0_46 = arith.constant 0 : index
    %103 = vector.load %arg2[%c20, %c0_46] : memref<27x256xbf16, #tpu.memory_space<vmem>>, vector<1x256xbf16>
    %104 = vector.broadcast %103 : vector<1x256xbf16> to vector<8x256xbf16>
    %105 = arith.mulf %102, %104 : vector<8x256xbf16>
    %c160 = arith.constant 160 : index
    %c0_47 = arith.constant 0 : index
    %106 = vector.load %arg7[%c160, %c0_47] : memref<216x256xbf16, #tpu.memory_space<vmem>>, vector<8x256xbf16>
    tpu.vector_store %arg7[%c160, %c0_47], %105 {strides = array<i32>} : memref<216x256xbf16, #tpu.memory_space<vmem>>, vector<8x256xbf16>,
    %107 = vector.extract_strided_slice %1 {offsets = [0, 136], sizes = [8, 256], strides = [1, 1]} : vector<8x402xbf16> to vector<8x256xbf16>
    %c21 = arith.constant 21 : index
    %c0_48 = arith.constant 0 : index
    %108 = vector.load %arg2[%c21, %c0_48] : memref<27x256xbf16, #tpu.memory_space<vmem>>, vector<1x256xbf16>
    %109 = vector.broadcast %108 : vector<1x256xbf16> to vector<8x256xbf16>
    %110 = arith.mulf %107, %109 : vector<8x256xbf16>
    %c168 = arith.constant 168 : index
    %c0_49 = arith.constant 0 : index
    %111 = vector.load %arg7[%c168, %c0_49] : memref<216x256xbf16, #tpu.memory_space<vmem>>, vector<8x256xbf16>
    tpu.vector_store %arg7[%c168, %c0_49], %110 {strides = array<i32>} : memref<216x256xbf16, #tpu.memory_space<vmem>>, vector<8x256xbf16>,
    %112 = vector.extract_strided_slice %1 {offsets = [0, 137], sizes = [8, 256], strides = [1, 1]} : vector<8x402xbf16> to vector<8x256xbf16>
    %c22 = arith.constant 22 : index
    %c0_50 = arith.constant 0 : index
    %113 = vector.load %arg2[%c22, %c0_50] : memref<27x256xbf16, #tpu.memory_space<vmem>>, vector<1x256xbf16>
    %114 = vector.broadcast %113 : vector<1x256xbf16> to vector<8x256xbf16>
    %115 = arith.mulf %112, %114 : vector<8x256xbf16>
    %c176 = arith.constant 176 : index
    %c0_51 = arith.constant 0 : index
    %116 = vector.load %arg7[%c176, %c0_51] : memref<216x256xbf16, #tpu.memory_space<vmem>>, vector<8x256xbf16>
    tpu.vector_store %arg7[%c176, %c0_51], %115 {strides = array<i32>} : memref<216x256xbf16, #tpu.memory_space<vmem>>, vector<8x256xbf16>,
    %117 = vector.extract_strided_slice %1 {offsets = [0, 138], sizes = [8, 256], strides = [1, 1]} : vector<8x402xbf16> to vector<8x256xbf16>
    %c23 = arith.constant 23 : index
    %c0_52 = arith.constant 0 : index
    %118 = vector.load %arg2[%c23, %c0_52] : memref<27x256xbf16, #tpu.memory_space<vmem>>, vector<1x256xbf16>
    %119 = vector.broadcast %118 : vector<1x256xbf16> to vector<8x256xbf16>
    %120 = arith.mulf %117, %119 : vector<8x256xbf16>
    %c184 = arith.constant 184 : index
    %c0_53 = arith.constant 0 : index
    %121 = vector.load %arg7[%c184, %c0_53] : memref<216x256xbf16, #tpu.memory_space<vmem>>, vector<8x256xbf16>
    tpu.vector_store %arg7[%c184, %c0_53], %120 {strides = array<i32>} : memref<216x256xbf16, #tpu.memory_space<vmem>>, vector<8x256xbf16>,
    %122 = vector.extract_strided_slice %1 {offsets = [0, 144], sizes = [8, 256], strides = [1, 1]} : vector<8x402xbf16> to vector<8x256xbf16>
    %c24_54 = arith.constant 24 : index
    %c0_55 = arith.constant 0 : index
    %123 = vector.load %arg2[%c24_54, %c0_55] : memref<27x256xbf16, #tpu.memory_space<vmem>>, vector<1x256xbf16>
    %124 = vector.broadcast %123 : vector<1x256xbf16> to vector<8x256xbf16>
    %125 = arith.mulf %122, %124 : vector<8x256xbf16>
    %c192 = arith.constant 192 : index
    %c0_56 = arith.constant 0 : index
    %126 = vector.load %arg7[%c192, %c0_56] : memref<216x256xbf16, #tpu.memory_space<vmem>>, vector<8x256xbf16>
    tpu.vector_store %arg7[%c192, %c0_56], %125 {strides = array<i32>} : memref<216x256xbf16, #tpu.memory_space<vmem>>, vector<8x256xbf16>,
    %127 = vector.extract_strided_slice %1 {offsets = [0, 145], sizes = [8, 256], strides = [1, 1]} : vector<8x402xbf16> to vector<8x256xbf16>
    %c25 = arith.constant 25 : index
    %c0_57 = arith.constant 0 : index
    %128 = vector.load %arg2[%c25, %c0_57] : memref<27x256xbf16, #tpu.memory_space<vmem>>, vector<1x256xbf16>
    %129 = vector.broadcast %128 : vector<1x256xbf16> to vector<8x256xbf16>
    %130 = arith.mulf %127, %129 : vector<8x256xbf16>
    %c200 = arith.constant 200 : index
    %c0_58 = arith.constant 0 : index
    %131 = vector.load %arg7[%c200, %c0_58] : memref<216x256xbf16, #tpu.memory_space<vmem>>, vector<8x256xbf16>
    tpu.vector_store %arg7[%c200, %c0_58], %130 {strides = array<i32>} : memref<216x256xbf16, #tpu.memory_space<vmem>>, vector<8x256xbf16>,
    %132 = vector.extract_strided_slice %1 {offsets = [0, 146], sizes = [8, 256], strides = [1, 1]} : vector<8x402xbf16> to vector<8x256xbf16>
    %c26 = arith.constant 26 : index
    %c0_59 = arith.constant 0 : index
    %133 = vector.load %arg2[%c26, %c0_59] : memref<27x256xbf16, #tpu.memory_space<vmem>>, vector<1x256xbf16>
    %134 = vector.broadcast %133 : vector<1x256xbf16> to vector<8x256xbf16>
    %135 = arith.mulf %132, %134 : vector<8x256xbf16>
    %c208 = arith.constant 208 : index
    %c0_60 = arith.constant 0 : index
    %136 = vector.load %arg7[%c208, %c0_60] : memref<216x256xbf16, #tpu.memory_space<vmem>>, vector<8x256xbf16>
    tpu.vector_store %arg7[%c208, %c0_60], %135 {strides = array<i32>} : memref<216x256xbf16, #tpu.memory_space<vmem>>, vector<8x256xbf16>,
    %c0_61 = arith.constant 0 : index
    %c0_62 = arith.constant 0 : index
    %137 = vector.load %arg3[%c0_61, %c0_62] : memref<16x216xbf16, #tpu.memory_space<vmem>>, vector<16x216xbf16>
    %c0_63 = arith.constant 0 : index
    %c0_64 = arith.constant 0 : index
    %138 = vector.load %arg7[%c0_63, %c0_64] : memref<216x256xbf16, #tpu.memory_space<vmem>>, vector<216x256xbf16>
    %cst = arith.constant dense<0.000000e+00> : vector<16x256xf32>
    %139 = tpu.matmul %137, %138, %cst {dimension_numbers = #tpu.dot_dimension_numbers<[1], [0], [0], [1], [0, 0, 1, 1], [], []>} : vector<16x216xbf16>, vector<216x256xbf16>, vector<16x256xf32> -> vector<16x256xf32>
    %c0_65 = arith.constant 0 : index
    %c0_66 = arith.constant 0 : index
    %c0_67 = arith.constant 0 : index
    %140 = vector.load %arg5[%c0_65, %c0_66, %c0_67] : memref<1x16x256xf32, #tpu.memory_space<vmem>>, vector<1x16x256xf32>
    %141 = vector.shape_cast %140 : vector<1x16x256xf32> to vector<16x256xf32>
    %142 = vector.shape_cast %139 : vector<16x256xf32> to vector<1x16x256xf32>
    tpu.vector_store %arg5[%c0_65, %c0_66, %c0_67], %142 {strides = array<i32>} : memref<1x16x256xf32, #tpu.memory_space<vmem>>, vector<1x16x256xf32>,
    %143 = vector.extract_strided_slice %1 {offsets = [0, 73], sizes = [8, 256], strides = [1, 1]} : vector<8x402xbf16> to vector<8x256xbf16>
    %c0_68 = arith.constant 0 : index
    %c0_69 = arith.constant 0 : index
    %144 = vector.load %arg4[%c0_68, %c0_69] : memref<16x8xbf16, #tpu.memory_space<vmem>>, vector<16x8xbf16>
    %cst_70 = arith.constant dense<0.000000e+00> : vector<16x256xf32>
    %145 = tpu.matmul %144, %143, %cst_70 {dimension_numbers = #tpu.dot_dimension_numbers<[1], [0], [0], [1], [0, 0, 1, 1], [], []>} : vector<16x8xbf16>, vector<8x256xbf16>, vector<16x256xf32> -> vector<16x256xf32>
    %c0_71 = arith.constant 0 : index
    %c0_72 = arith.constant 0 : index
    %c0_73 = arith.constant 0 : index
    %146 = vector.load %arg6[%c0_71, %c0_72, %c0_73] : memref<1x16x256xf32, #tpu.memory_space<vmem>>, vector<1x16x256xf32>
    %147 = vector.shape_cast %146 : vector<1x16x256xf32> to vector<16x256xf32>
    %148 = vector.shape_cast %145 : vector<16x256xf32> to vector<1x16x256xf32>
    tpu.vector_store %arg6[%c0_71, %c0_72, %c0_73], %148 {strides = array<i32>} : memref<1x16x256xf32, #tpu.memory_space<vmem>>, vector<1x16x256xf32>,
    return
  }
  func.func @transform_0(%arg0: i32) -> (i32, i32, i32) {
    %c0_i32 = arith.constant 0 : i32
    %c0_i32_0 = arith.constant 0 : i32
    %c0_i32_1 = arith.constant 0 : i32
    return %arg0, %c0_i32, %c0_i32_0 : i32, i32, i32
  }
  func.func @transform_1(%arg0: i32) -> (i32, i32) {
    %c0_i32 = arith.constant 0 : i32
    %c0_i32_0 = arith.constant 0 : i32
    %c0_i32_1 = arith.constant 0 : i32
    return %c0_i32, %c0_i32_0 : i32, i32
  }
  func.func @transform_2(%arg0: i32) -> (i32, i32) {
    %c0_i32 = arith.constant 0 : i32
    %c0_i32_0 = arith.constant 0 : i32
    %c0_i32_1 = arith.constant 0 : i32
    return %c0_i32, %c0_i32_0 : i32, i32
  }
  func.func @transform_3(%arg0: i32) -> (i32, i32) {
    %c0_i32 = arith.constant 0 : i32
    %c0_i32_0 = arith.constant 0 : i32
    %c0_i32_1 = arith.constant 0 : i32
    return %c0_i32, %c0_i32_0 : i32, i32
  }
  func.func @transform_4(%arg0: i32) -> (i32, i32, i32) {
    %c0_i32 = arith.constant 0 : i32
    %c0_i32_0 = arith.constant 0 : i32
    %c0_i32_1 = arith.constant 0 : i32
    return %arg0, %c0_i32, %c0_i32_0 : i32, i32, i32
  }
  func.func @transform_5(%arg0: i32) -> (i32, i32, i32) {
    %c0_i32 = arith.constant 0 : i32
    %c0_i32_0 = arith.constant 0 : i32
    %c0_i32_1 = arith.constant 0 : i32
    return %arg0, %c0_i32, %c0_i32_0 : i32, i32, i32
  }
}

module attributes {stable_mosaic.version = 11 : i64} {
  func.func @_conv3x3_kernel(%arg0: i32, %arg1: memref<1x16x402xbf16, #tpu.memory_space<vmem>>, %arg2: memref<27x256xbf16, #tpu.memory_space<vmem>>, %arg3: memref<16x432xbf16, #tpu.memory_space<vmem>>, %arg4: memref<1x16x256xf32, #tpu.memory_space<vmem>>, %arg5: memref<432x256xbf16, #tpu.memory_space<vmem>>) attributes {dimension_semantics = [#tpu.dimension_semantics<parallel>], iteration_bounds = array<i64: 2>, scalar_prefetch = 0 : i64, scratch_operands = 1 : i64, tpu.core_type = #tpu.core_type<tc>, window_params = [{transform_indices = @transform_0, window_bounds = array<i64: 1, 16, 402>}, {pipeline_mode = #tpu.pipeline_mode<synchronous>, transform_indices = @transform_1, window_bounds = array<i64: 27, 256>}, {pipeline_mode = #tpu.pipeline_mode<synchronous>, transform_indices = @transform_2, window_bounds = array<i64: 16, 432>}, {transform_indices = @transform_3, window_bounds = array<i64: 1, 16, 256>}]} {
    %c0 = arith.constant 0 : index
    %c0_0 = arith.constant 0 : index
    %c0_1 = arith.constant 0 : index
    %0 = vector.load %arg1[%c0, %c0_0, %c0_1] : memref<1x16x402xbf16, #tpu.memory_space<vmem>>, vector<1x16x402xbf16>
    %1 = vector.shape_cast %0 : vector<1x16x402xbf16> to vector<16x402xbf16>
    %2 = vector.extract_strided_slice %1 {offsets = [0, 0], sizes = [16, 256], strides = [1, 1]} : vector<16x402xbf16> to vector<16x256xbf16>
    %c0_2 = arith.constant 0 : index
    %c0_3 = arith.constant 0 : index
    %3 = vector.load %arg2[%c0_2, %c0_3] : memref<27x256xbf16, #tpu.memory_space<vmem>>, vector<1x256xbf16>
    %4 = vector.broadcast %3 : vector<1x256xbf16> to vector<16x256xbf16>
    %5 = arith.mulf %2, %4 : vector<16x256xbf16>
    %c0_4 = arith.constant 0 : index
    %c0_5 = arith.constant 0 : index
    %6 = vector.load %arg5[%c0_4, %c0_5] : memref<432x256xbf16, #tpu.memory_space<vmem>>, vector<16x256xbf16>
    tpu.vector_store %arg5[%c0_4, %c0_5], %5 {strides = array<i32>} : memref<432x256xbf16, #tpu.memory_space<vmem>>, vector<16x256xbf16>,
    %7 = vector.extract_strided_slice %1 {offsets = [0, 1], sizes = [16, 256], strides = [1, 1]} : vector<16x402xbf16> to vector<16x256xbf16>
    %c1 = arith.constant 1 : index
    %c0_6 = arith.constant 0 : index
    %8 = vector.load %arg2[%c1, %c0_6] : memref<27x256xbf16, #tpu.memory_space<vmem>>, vector<1x256xbf16>
    %9 = vector.broadcast %8 : vector<1x256xbf16> to vector<16x256xbf16>
    %10 = arith.mulf %7, %9 : vector<16x256xbf16>
    %c16 = arith.constant 16 : index
    %c0_7 = arith.constant 0 : index
    %11 = vector.load %arg5[%c16, %c0_7] : memref<432x256xbf16, #tpu.memory_space<vmem>>, vector<16x256xbf16>
    tpu.vector_store %arg5[%c16, %c0_7], %10 {strides = array<i32>} : memref<432x256xbf16, #tpu.memory_space<vmem>>, vector<16x256xbf16>,
    %12 = vector.extract_strided_slice %1 {offsets = [0, 2], sizes = [16, 256], strides = [1, 1]} : vector<16x402xbf16> to vector<16x256xbf16>
    %c2 = arith.constant 2 : index
    %c0_8 = arith.constant 0 : index
    %13 = vector.load %arg2[%c2, %c0_8] : memref<27x256xbf16, #tpu.memory_space<vmem>>, vector<1x256xbf16>
    %14 = vector.broadcast %13 : vector<1x256xbf16> to vector<16x256xbf16>
    %15 = arith.mulf %12, %14 : vector<16x256xbf16>
    %c32 = arith.constant 32 : index
    %c0_9 = arith.constant 0 : index
    %16 = vector.load %arg5[%c32, %c0_9] : memref<432x256xbf16, #tpu.memory_space<vmem>>, vector<16x256xbf16>
    tpu.vector_store %arg5[%c32, %c0_9], %15 {strides = array<i32>} : memref<432x256xbf16, #tpu.memory_space<vmem>>, vector<16x256xbf16>,
    %17 = vector.extract_strided_slice %1 {offsets = [0, 8], sizes = [16, 256], strides = [1, 1]} : vector<16x402xbf16> to vector<16x256xbf16>
    %c3 = arith.constant 3 : index
    %c0_10 = arith.constant 0 : index
    %18 = vector.load %arg2[%c3, %c0_10] : memref<27x256xbf16, #tpu.memory_space<vmem>>, vector<1x256xbf16>
    %19 = vector.broadcast %18 : vector<1x256xbf16> to vector<16x256xbf16>
    %20 = arith.mulf %17, %19 : vector<16x256xbf16>
    %c48 = arith.constant 48 : index
    %c0_11 = arith.constant 0 : index
    %21 = vector.load %arg5[%c48, %c0_11] : memref<432x256xbf16, #tpu.memory_space<vmem>>, vector<16x256xbf16>
    tpu.vector_store %arg5[%c48, %c0_11], %20 {strides = array<i32>} : memref<432x256xbf16, #tpu.memory_space<vmem>>, vector<16x256xbf16>,
    %22 = vector.extract_strided_slice %1 {offsets = [0, 9], sizes = [16, 256], strides = [1, 1]} : vector<16x402xbf16> to vector<16x256xbf16>
    %c4 = arith.constant 4 : index
    %c0_12 = arith.constant 0 : index
    %23 = vector.load %arg2[%c4, %c0_12] : memref<27x256xbf16, #tpu.memory_space<vmem>>, vector<1x256xbf16>
    %24 = vector.broadcast %23 : vector<1x256xbf16> to vector<16x256xbf16>
    %25 = arith.mulf %22, %24 : vector<16x256xbf16>
    %c64 = arith.constant 64 : index
    %c0_13 = arith.constant 0 : index
    %26 = vector.load %arg5[%c64, %c0_13] : memref<432x256xbf16, #tpu.memory_space<vmem>>, vector<16x256xbf16>
    tpu.vector_store %arg5[%c64, %c0_13], %25 {strides = array<i32>} : memref<432x256xbf16, #tpu.memory_space<vmem>>, vector<16x256xbf16>,
    %27 = vector.extract_strided_slice %1 {offsets = [0, 10], sizes = [16, 256], strides = [1, 1]} : vector<16x402xbf16> to vector<16x256xbf16>
    %c5 = arith.constant 5 : index
    %c0_14 = arith.constant 0 : index
    %28 = vector.load %arg2[%c5, %c0_14] : memref<27x256xbf16, #tpu.memory_space<vmem>>, vector<1x256xbf16>
    %29 = vector.broadcast %28 : vector<1x256xbf16> to vector<16x256xbf16>
    %30 = arith.mulf %27, %29 : vector<16x256xbf16>
    %c80 = arith.constant 80 : index
    %c0_15 = arith.constant 0 : index
    %31 = vector.load %arg5[%c80, %c0_15] : memref<432x256xbf16, #tpu.memory_space<vmem>>, vector<16x256xbf16>
    tpu.vector_store %arg5[%c80, %c0_15], %30 {strides = array<i32>} : memref<432x256xbf16, #tpu.memory_space<vmem>>, vector<16x256xbf16>,
    %32 = vector.extract_strided_slice %1 {offsets = [0, 16], sizes = [16, 256], strides = [1, 1]} : vector<16x402xbf16> to vector<16x256xbf16>
    %c6 = arith.constant 6 : index
    %c0_16 = arith.constant 0 : index
    %33 = vector.load %arg2[%c6, %c0_16] : memref<27x256xbf16, #tpu.memory_space<vmem>>, vector<1x256xbf16>
    %34 = vector.broadcast %33 : vector<1x256xbf16> to vector<16x256xbf16>
    %35 = arith.mulf %32, %34 : vector<16x256xbf16>
    %c96 = arith.constant 96 : index
    %c0_17 = arith.constant 0 : index
    %36 = vector.load %arg5[%c96, %c0_17] : memref<432x256xbf16, #tpu.memory_space<vmem>>, vector<16x256xbf16>
    tpu.vector_store %arg5[%c96, %c0_17], %35 {strides = array<i32>} : memref<432x256xbf16, #tpu.memory_space<vmem>>, vector<16x256xbf16>,
    %37 = vector.extract_strided_slice %1 {offsets = [0, 17], sizes = [16, 256], strides = [1, 1]} : vector<16x402xbf16> to vector<16x256xbf16>
    %c7 = arith.constant 7 : index
    %c0_18 = arith.constant 0 : index
    %38 = vector.load %arg2[%c7, %c0_18] : memref<27x256xbf16, #tpu.memory_space<vmem>>, vector<1x256xbf16>
    %39 = vector.broadcast %38 : vector<1x256xbf16> to vector<16x256xbf16>
    %40 = arith.mulf %37, %39 : vector<16x256xbf16>
    %c112 = arith.constant 112 : index
    %c0_19 = arith.constant 0 : index
    %41 = vector.load %arg5[%c112, %c0_19] : memref<432x256xbf16, #tpu.memory_space<vmem>>, vector<16x256xbf16>
    tpu.vector_store %arg5[%c112, %c0_19], %40 {strides = array<i32>} : memref<432x256xbf16, #tpu.memory_space<vmem>>, vector<16x256xbf16>,
    %42 = vector.extract_strided_slice %1 {offsets = [0, 18], sizes = [16, 256], strides = [1, 1]} : vector<16x402xbf16> to vector<16x256xbf16>
    %c8 = arith.constant 8 : index
    %c0_20 = arith.constant 0 : index
    %43 = vector.load %arg2[%c8, %c0_20] : memref<27x256xbf16, #tpu.memory_space<vmem>>, vector<1x256xbf16>
    %44 = vector.broadcast %43 : vector<1x256xbf16> to vector<16x256xbf16>
    %45 = arith.mulf %42, %44 : vector<16x256xbf16>
    %c128 = arith.constant 128 : index
    %c0_21 = arith.constant 0 : index
    %46 = vector.load %arg5[%c128, %c0_21] : memref<432x256xbf16, #tpu.memory_space<vmem>>, vector<16x256xbf16>
    tpu.vector_store %arg5[%c128, %c0_21], %45 {strides = array<i32>} : memref<432x256xbf16, #tpu.memory_space<vmem>>, vector<16x256xbf16>,
    %47 = vector.extract_strided_slice %1 {offsets = [0, 64], sizes = [16, 256], strides = [1, 1]} : vector<16x402xbf16> to vector<16x256xbf16>
    %c9 = arith.constant 9 : index
    %c0_22 = arith.constant 0 : index
    %48 = vector.load %arg2[%c9, %c0_22] : memref<27x256xbf16, #tpu.memory_space<vmem>>, vector<1x256xbf16>
    %49 = vector.broadcast %48 : vector<1x256xbf16> to vector<16x256xbf16>
    %50 = arith.mulf %47, %49 : vector<16x256xbf16>
    %c144 = arith.constant 144 : index
    %c0_23 = arith.constant 0 : index
    %51 = vector.load %arg5[%c144, %c0_23] : memref<432x256xbf16, #tpu.memory_space<vmem>>, vector<16x256xbf16>
    tpu.vector_store %arg5[%c144, %c0_23], %50 {strides = array<i32>} : memref<432x256xbf16, #tpu.memory_space<vmem>>, vector<16x256xbf16>,
    %52 = vector.extract_strided_slice %1 {offsets = [0, 65], sizes = [16, 256], strides = [1, 1]} : vector<16x402xbf16> to vector<16x256xbf16>
    %c10 = arith.constant 10 : index
    %c0_24 = arith.constant 0 : index
    %53 = vector.load %arg2[%c10, %c0_24] : memref<27x256xbf16, #tpu.memory_space<vmem>>, vector<1x256xbf16>
    %54 = vector.broadcast %53 : vector<1x256xbf16> to vector<16x256xbf16>
    %55 = arith.mulf %52, %54 : vector<16x256xbf16>
    %c160 = arith.constant 160 : index
    %c0_25 = arith.constant 0 : index
    %56 = vector.load %arg5[%c160, %c0_25] : memref<432x256xbf16, #tpu.memory_space<vmem>>, vector<16x256xbf16>
    tpu.vector_store %arg5[%c160, %c0_25], %55 {strides = array<i32>} : memref<432x256xbf16, #tpu.memory_space<vmem>>, vector<16x256xbf16>,
    %57 = vector.extract_strided_slice %1 {offsets = [0, 66], sizes = [16, 256], strides = [1, 1]} : vector<16x402xbf16> to vector<16x256xbf16>
    %c11 = arith.constant 11 : index
    %c0_26 = arith.constant 0 : index
    %58 = vector.load %arg2[%c11, %c0_26] : memref<27x256xbf16, #tpu.memory_space<vmem>>, vector<1x256xbf16>
    %59 = vector.broadcast %58 : vector<1x256xbf16> to vector<16x256xbf16>
    %60 = arith.mulf %57, %59 : vector<16x256xbf16>
    %c176 = arith.constant 176 : index
    %c0_27 = arith.constant 0 : index
    %61 = vector.load %arg5[%c176, %c0_27] : memref<432x256xbf16, #tpu.memory_space<vmem>>, vector<16x256xbf16>
    tpu.vector_store %arg5[%c176, %c0_27], %60 {strides = array<i32>} : memref<432x256xbf16, #tpu.memory_space<vmem>>, vector<16x256xbf16>,
    %62 = vector.extract_strided_slice %1 {offsets = [0, 72], sizes = [16, 256], strides = [1, 1]} : vector<16x402xbf16> to vector<16x256xbf16>
    %c12 = arith.constant 12 : index
    %c0_28 = arith.constant 0 : index
    %63 = vector.load %arg2[%c12, %c0_28] : memref<27x256xbf16, #tpu.memory_space<vmem>>, vector<1x256xbf16>
    %64 = vector.broadcast %63 : vector<1x256xbf16> to vector<16x256xbf16>
    %65 = arith.mulf %62, %64 : vector<16x256xbf16>
    %c192 = arith.constant 192 : index
    %c0_29 = arith.constant 0 : index
    %66 = vector.load %arg5[%c192, %c0_29] : memref<432x256xbf16, #tpu.memory_space<vmem>>, vector<16x256xbf16>
    tpu.vector_store %arg5[%c192, %c0_29], %65 {strides = array<i32>} : memref<432x256xbf16, #tpu.memory_space<vmem>>, vector<16x256xbf16>,
    %67 = vector.extract_strided_slice %1 {offsets = [0, 73], sizes = [16, 256], strides = [1, 1]} : vector<16x402xbf16> to vector<16x256xbf16>
    %c13 = arith.constant 13 : index
    %c0_30 = arith.constant 0 : index
    %68 = vector.load %arg2[%c13, %c0_30] : memref<27x256xbf16, #tpu.memory_space<vmem>>, vector<1x256xbf16>
    %69 = vector.broadcast %68 : vector<1x256xbf16> to vector<16x256xbf16>
    %70 = arith.mulf %67, %69 : vector<16x256xbf16>
    %c208 = arith.constant 208 : index
    %c0_31 = arith.constant 0 : index
    %71 = vector.load %arg5[%c208, %c0_31] : memref<432x256xbf16, #tpu.memory_space<vmem>>, vector<16x256xbf16>
    tpu.vector_store %arg5[%c208, %c0_31], %70 {strides = array<i32>} : memref<432x256xbf16, #tpu.memory_space<vmem>>, vector<16x256xbf16>,
    %72 = vector.extract_strided_slice %1 {offsets = [0, 74], sizes = [16, 256], strides = [1, 1]} : vector<16x402xbf16> to vector<16x256xbf16>
    %c14 = arith.constant 14 : index
    %c0_32 = arith.constant 0 : index
    %73 = vector.load %arg2[%c14, %c0_32] : memref<27x256xbf16, #tpu.memory_space<vmem>>, vector<1x256xbf16>
    %74 = vector.broadcast %73 : vector<1x256xbf16> to vector<16x256xbf16>
    %75 = arith.mulf %72, %74 : vector<16x256xbf16>
    %c224 = arith.constant 224 : index
    %c0_33 = arith.constant 0 : index
    %76 = vector.load %arg5[%c224, %c0_33] : memref<432x256xbf16, #tpu.memory_space<vmem>>, vector<16x256xbf16>
    tpu.vector_store %arg5[%c224, %c0_33], %75 {strides = array<i32>} : memref<432x256xbf16, #tpu.memory_space<vmem>>, vector<16x256xbf16>,
    %77 = vector.extract_strided_slice %1 {offsets = [0, 80], sizes = [16, 256], strides = [1, 1]} : vector<16x402xbf16> to vector<16x256xbf16>
    %c15 = arith.constant 15 : index
    %c0_34 = arith.constant 0 : index
    %78 = vector.load %arg2[%c15, %c0_34] : memref<27x256xbf16, #tpu.memory_space<vmem>>, vector<1x256xbf16>
    %79 = vector.broadcast %78 : vector<1x256xbf16> to vector<16x256xbf16>
    %80 = arith.mulf %77, %79 : vector<16x256xbf16>
    %c240 = arith.constant 240 : index
    %c0_35 = arith.constant 0 : index
    %81 = vector.load %arg5[%c240, %c0_35] : memref<432x256xbf16, #tpu.memory_space<vmem>>, vector<16x256xbf16>
    tpu.vector_store %arg5[%c240, %c0_35], %80 {strides = array<i32>} : memref<432x256xbf16, #tpu.memory_space<vmem>>, vector<16x256xbf16>,
    %82 = vector.extract_strided_slice %1 {offsets = [0, 81], sizes = [16, 256], strides = [1, 1]} : vector<16x402xbf16> to vector<16x256xbf16>
    %c16_36 = arith.constant 16 : index
    %c0_37 = arith.constant 0 : index
    %83 = vector.load %arg2[%c16_36, %c0_37] : memref<27x256xbf16, #tpu.memory_space<vmem>>, vector<1x256xbf16>
    %84 = vector.broadcast %83 : vector<1x256xbf16> to vector<16x256xbf16>
    %85 = arith.mulf %82, %84 : vector<16x256xbf16>
    %c256 = arith.constant 256 : index
    %c0_38 = arith.constant 0 : index
    %86 = vector.load %arg5[%c256, %c0_38] : memref<432x256xbf16, #tpu.memory_space<vmem>>, vector<16x256xbf16>
    tpu.vector_store %arg5[%c256, %c0_38], %85 {strides = array<i32>} : memref<432x256xbf16, #tpu.memory_space<vmem>>, vector<16x256xbf16>,
    %87 = vector.extract_strided_slice %1 {offsets = [0, 82], sizes = [16, 256], strides = [1, 1]} : vector<16x402xbf16> to vector<16x256xbf16>
    %c17 = arith.constant 17 : index
    %c0_39 = arith.constant 0 : index
    %88 = vector.load %arg2[%c17, %c0_39] : memref<27x256xbf16, #tpu.memory_space<vmem>>, vector<1x256xbf16>
    %89 = vector.broadcast %88 : vector<1x256xbf16> to vector<16x256xbf16>
    %90 = arith.mulf %87, %89 : vector<16x256xbf16>
    %c272 = arith.constant 272 : index
    %c0_40 = arith.constant 0 : index
    %91 = vector.load %arg5[%c272, %c0_40] : memref<432x256xbf16, #tpu.memory_space<vmem>>, vector<16x256xbf16>
    tpu.vector_store %arg5[%c272, %c0_40], %90 {strides = array<i32>} : memref<432x256xbf16, #tpu.memory_space<vmem>>, vector<16x256xbf16>,
    %92 = vector.extract_strided_slice %1 {offsets = [0, 128], sizes = [16, 256], strides = [1, 1]} : vector<16x402xbf16> to vector<16x256xbf16>
    %c18 = arith.constant 18 : index
    %c0_41 = arith.constant 0 : index
    %93 = vector.load %arg2[%c18, %c0_41] : memref<27x256xbf16, #tpu.memory_space<vmem>>, vector<1x256xbf16>
    %94 = vector.broadcast %93 : vector<1x256xbf16> to vector<16x256xbf16>
    %95 = arith.mulf %92, %94 : vector<16x256xbf16>
    %c288 = arith.constant 288 : index
    %c0_42 = arith.constant 0 : index
    %96 = vector.load %arg5[%c288, %c0_42] : memref<432x256xbf16, #tpu.memory_space<vmem>>, vector<16x256xbf16>
    tpu.vector_store %arg5[%c288, %c0_42], %95 {strides = array<i32>} : memref<432x256xbf16, #tpu.memory_space<vmem>>, vector<16x256xbf16>,
    %97 = vector.extract_strided_slice %1 {offsets = [0, 129], sizes = [16, 256], strides = [1, 1]} : vector<16x402xbf16> to vector<16x256xbf16>
    %c19 = arith.constant 19 : index
    %c0_43 = arith.constant 0 : index
    %98 = vector.load %arg2[%c19, %c0_43] : memref<27x256xbf16, #tpu.memory_space<vmem>>, vector<1x256xbf16>
    %99 = vector.broadcast %98 : vector<1x256xbf16> to vector<16x256xbf16>
    %100 = arith.mulf %97, %99 : vector<16x256xbf16>
    %c304 = arith.constant 304 : index
    %c0_44 = arith.constant 0 : index
    %101 = vector.load %arg5[%c304, %c0_44] : memref<432x256xbf16, #tpu.memory_space<vmem>>, vector<16x256xbf16>
    tpu.vector_store %arg5[%c304, %c0_44], %100 {strides = array<i32>} : memref<432x256xbf16, #tpu.memory_space<vmem>>, vector<16x256xbf16>,
    %102 = vector.extract_strided_slice %1 {offsets = [0, 130], sizes = [16, 256], strides = [1, 1]} : vector<16x402xbf16> to vector<16x256xbf16>
    %c20 = arith.constant 20 : index
    %c0_45 = arith.constant 0 : index
    %103 = vector.load %arg2[%c20, %c0_45] : memref<27x256xbf16, #tpu.memory_space<vmem>>, vector<1x256xbf16>
    %104 = vector.broadcast %103 : vector<1x256xbf16> to vector<16x256xbf16>
    %105 = arith.mulf %102, %104 : vector<16x256xbf16>
    %c320 = arith.constant 320 : index
    %c0_46 = arith.constant 0 : index
    %106 = vector.load %arg5[%c320, %c0_46] : memref<432x256xbf16, #tpu.memory_space<vmem>>, vector<16x256xbf16>
    tpu.vector_store %arg5[%c320, %c0_46], %105 {strides = array<i32>} : memref<432x256xbf16, #tpu.memory_space<vmem>>, vector<16x256xbf16>,
    %107 = vector.extract_strided_slice %1 {offsets = [0, 136], sizes = [16, 256], strides = [1, 1]} : vector<16x402xbf16> to vector<16x256xbf16>
    %c21 = arith.constant 21 : index
    %c0_47 = arith.constant 0 : index
    %108 = vector.load %arg2[%c21, %c0_47] : memref<27x256xbf16, #tpu.memory_space<vmem>>, vector<1x256xbf16>
    %109 = vector.broadcast %108 : vector<1x256xbf16> to vector<16x256xbf16>
    %110 = arith.mulf %107, %109 : vector<16x256xbf16>
    %c336 = arith.constant 336 : index
    %c0_48 = arith.constant 0 : index
    %111 = vector.load %arg5[%c336, %c0_48] : memref<432x256xbf16, #tpu.memory_space<vmem>>, vector<16x256xbf16>
    tpu.vector_store %arg5[%c336, %c0_48], %110 {strides = array<i32>} : memref<432x256xbf16, #tpu.memory_space<vmem>>, vector<16x256xbf16>,
    %112 = vector.extract_strided_slice %1 {offsets = [0, 137], sizes = [16, 256], strides = [1, 1]} : vector<16x402xbf16> to vector<16x256xbf16>
    %c22 = arith.constant 22 : index
    %c0_49 = arith.constant 0 : index
    %113 = vector.load %arg2[%c22, %c0_49] : memref<27x256xbf16, #tpu.memory_space<vmem>>, vector<1x256xbf16>
    %114 = vector.broadcast %113 : vector<1x256xbf16> to vector<16x256xbf16>
    %115 = arith.mulf %112, %114 : vector<16x256xbf16>
    %c352 = arith.constant 352 : index
    %c0_50 = arith.constant 0 : index
    %116 = vector.load %arg5[%c352, %c0_50] : memref<432x256xbf16, #tpu.memory_space<vmem>>, vector<16x256xbf16>
    tpu.vector_store %arg5[%c352, %c0_50], %115 {strides = array<i32>} : memref<432x256xbf16, #tpu.memory_space<vmem>>, vector<16x256xbf16>,
    %117 = vector.extract_strided_slice %1 {offsets = [0, 138], sizes = [16, 256], strides = [1, 1]} : vector<16x402xbf16> to vector<16x256xbf16>
    %c23 = arith.constant 23 : index
    %c0_51 = arith.constant 0 : index
    %118 = vector.load %arg2[%c23, %c0_51] : memref<27x256xbf16, #tpu.memory_space<vmem>>, vector<1x256xbf16>
    %119 = vector.broadcast %118 : vector<1x256xbf16> to vector<16x256xbf16>
    %120 = arith.mulf %117, %119 : vector<16x256xbf16>
    %c368 = arith.constant 368 : index
    %c0_52 = arith.constant 0 : index
    %121 = vector.load %arg5[%c368, %c0_52] : memref<432x256xbf16, #tpu.memory_space<vmem>>, vector<16x256xbf16>
    tpu.vector_store %arg5[%c368, %c0_52], %120 {strides = array<i32>} : memref<432x256xbf16, #tpu.memory_space<vmem>>, vector<16x256xbf16>,
    %122 = vector.extract_strided_slice %1 {offsets = [0, 144], sizes = [16, 256], strides = [1, 1]} : vector<16x402xbf16> to vector<16x256xbf16>
    %c24 = arith.constant 24 : index
    %c0_53 = arith.constant 0 : index
    %123 = vector.load %arg2[%c24, %c0_53] : memref<27x256xbf16, #tpu.memory_space<vmem>>, vector<1x256xbf16>
    %124 = vector.broadcast %123 : vector<1x256xbf16> to vector<16x256xbf16>
    %125 = arith.mulf %122, %124 : vector<16x256xbf16>
    %c384 = arith.constant 384 : index
    %c0_54 = arith.constant 0 : index
    %126 = vector.load %arg5[%c384, %c0_54] : memref<432x256xbf16, #tpu.memory_space<vmem>>, vector<16x256xbf16>
    tpu.vector_store %arg5[%c384, %c0_54], %125 {strides = array<i32>} : memref<432x256xbf16, #tpu.memory_space<vmem>>, vector<16x256xbf16>,
    %127 = vector.extract_strided_slice %1 {offsets = [0, 145], sizes = [16, 256], strides = [1, 1]} : vector<16x402xbf16> to vector<16x256xbf16>
    %c25 = arith.constant 25 : index
    %c0_55 = arith.constant 0 : index
    %128 = vector.load %arg2[%c25, %c0_55] : memref<27x256xbf16, #tpu.memory_space<vmem>>, vector<1x256xbf16>
    %129 = vector.broadcast %128 : vector<1x256xbf16> to vector<16x256xbf16>
    %130 = arith.mulf %127, %129 : vector<16x256xbf16>
    %c400 = arith.constant 400 : index
    %c0_56 = arith.constant 0 : index
    %131 = vector.load %arg5[%c400, %c0_56] : memref<432x256xbf16, #tpu.memory_space<vmem>>, vector<16x256xbf16>
    tpu.vector_store %arg5[%c400, %c0_56], %130 {strides = array<i32>} : memref<432x256xbf16, #tpu.memory_space<vmem>>, vector<16x256xbf16>,
    %132 = vector.extract_strided_slice %1 {offsets = [0, 146], sizes = [16, 256], strides = [1, 1]} : vector<16x402xbf16> to vector<16x256xbf16>
    %c26 = arith.constant 26 : index
    %c0_57 = arith.constant 0 : index
    %133 = vector.load %arg2[%c26, %c0_57] : memref<27x256xbf16, #tpu.memory_space<vmem>>, vector<1x256xbf16>
    %134 = vector.broadcast %133 : vector<1x256xbf16> to vector<16x256xbf16>
    %135 = arith.mulf %132, %134 : vector<16x256xbf16>
    %c416 = arith.constant 416 : index
    %c0_58 = arith.constant 0 : index
    %136 = vector.load %arg5[%c416, %c0_58] : memref<432x256xbf16, #tpu.memory_space<vmem>>, vector<16x256xbf16>
    tpu.vector_store %arg5[%c416, %c0_58], %135 {strides = array<i32>} : memref<432x256xbf16, #tpu.memory_space<vmem>>, vector<16x256xbf16>,
    %c0_59 = arith.constant 0 : index
    %c0_60 = arith.constant 0 : index
    %137 = vector.load %arg3[%c0_59, %c0_60] : memref<16x432xbf16, #tpu.memory_space<vmem>>, vector<16x432xbf16>
    %c0_61 = arith.constant 0 : index
    %c0_62 = arith.constant 0 : index
    %138 = vector.load %arg5[%c0_61, %c0_62] : memref<432x256xbf16, #tpu.memory_space<vmem>>, vector<432x256xbf16>
    %cst = arith.constant dense<0.000000e+00> : vector<16x256xf32>
    %139 = tpu.matmul %137, %138, %cst {dimension_numbers = #tpu.dot_dimension_numbers<[1], [0], [0], [1], [0, 0, 1, 1], [], []>} : vector<16x432xbf16>, vector<432x256xbf16>, vector<16x256xf32> -> vector<16x256xf32>
    %c0_63 = arith.constant 0 : index
    %c0_64 = arith.constant 0 : index
    %c0_65 = arith.constant 0 : index
    %140 = vector.load %arg4[%c0_63, %c0_64, %c0_65] : memref<1x16x256xf32, #tpu.memory_space<vmem>>, vector<1x16x256xf32>
    %141 = vector.shape_cast %140 : vector<1x16x256xf32> to vector<16x256xf32>
    %142 = vector.shape_cast %139 : vector<16x256xf32> to vector<1x16x256xf32>
    tpu.vector_store %arg4[%c0_63, %c0_64, %c0_65], %142 {strides = array<i32>} : memref<1x16x256xf32, #tpu.memory_space<vmem>>, vector<1x16x256xf32>,
    return
  }
  func.func @transform_0(%arg0: i32) -> (i32, i32, i32) {
    %c0_i32 = arith.constant 0 : i32
    %c0_i32_0 = arith.constant 0 : i32
    %c0_i32_1 = arith.constant 0 : i32
    return %arg0, %c0_i32, %c0_i32_0 : i32, i32, i32
  }
  func.func @transform_1(%arg0: i32) -> (i32, i32) {
    %c0_i32 = arith.constant 0 : i32
    %c0_i32_0 = arith.constant 0 : i32
    %c0_i32_1 = arith.constant 0 : i32
    return %c0_i32, %c0_i32_0 : i32, i32
  }
  func.func @transform_2(%arg0: i32) -> (i32, i32) {
    %c0_i32 = arith.constant 0 : i32
    %c0_i32_0 = arith.constant 0 : i32
    %c0_i32_1 = arith.constant 0 : i32
    return %c0_i32, %c0_i32_0 : i32, i32
  }
  func.func @transform_3(%arg0: i32) -> (i32, i32, i32) {
    %c0_i32 = arith.constant 0 : i32
    %c0_i32_0 = arith.constant 0 : i32
    %c0_i32_1 = arith.constant 0 : i32
    return %arg0, %c0_i32, %c0_i32_0 : i32, i32, i32
  }
}

module attributes {stable_mosaic.version = 11 : i64} {
  func.func @_gn_res_act_kernel(%arg0: i32, %arg1: memref<1x16x256xf32, #tpu.memory_space<vmem>>, %arg2: memref<1x16x256xf32, #tpu.memory_space<vmem>>, %arg3: memref<16x3xf32, #tpu.memory_space<vmem>>, %arg4: memref<16x16xf32, #tpu.memory_space<vmem>>, %arg5: memref<1x16x256xf32, #tpu.memory_space<vmem>>) attributes {dimension_semantics = [#tpu.dimension_semantics<parallel>], iteration_bounds = array<i64: 2>, scalar_prefetch = 0 : i64, scratch_operands = 0 : i64, tpu.core_type = #tpu.core_type<tc>, window_params = [{transform_indices = @transform_0, window_bounds = array<i64: 1, 16, 256>}, {transform_indices = @transform_1, window_bounds = array<i64: 1, 16, 256>}, {pipeline_mode = #tpu.pipeline_mode<synchronous>, transform_indices = @transform_2, window_bounds = array<i64: 16, 3>}, {pipeline_mode = #tpu.pipeline_mode<synchronous>, transform_indices = @transform_3, window_bounds = array<i64: 16, 16>}, {transform_indices = @transform_4, window_bounds = array<i64: 1, 16, 256>}]} {
    %c0 = arith.constant 0 : index
    %c0_0 = arith.constant 0 : index
    %c0_1 = arith.constant 0 : index
    %0 = vector.load %arg1[%c0, %c0_0, %c0_1] : memref<1x16x256xf32, #tpu.memory_space<vmem>>, vector<1x16x256xf32>
    %1 = vector.shape_cast %0 : vector<1x16x256xf32> to vector<16x256xf32>
    %c0_2 = arith.constant 0 : index
    %c0_3 = arith.constant 0 : index
    %2 = vector.load %arg3[%c0_2, %c0_3] : memref<16x3xf32, #tpu.memory_space<vmem>>, vector<16x3xf32>
    %c0_4 = arith.constant 0 : index
    %c0_5 = arith.constant 0 : index
    %3 = vector.load %arg4[%c0_4, %c0_5] : memref<16x16xf32, #tpu.memory_space<vmem>>, vector<16x16xf32>
    %c0_6 = arith.constant 0 : index
    %c0_7 = arith.constant 0 : index
    %c0_8 = arith.constant 0 : index
    %4 = vector.load %arg2[%c0_6, %c0_7, %c0_8] : memref<1x16x256xf32, #tpu.memory_space<vmem>>, vector<1x16x256xf32>
    %5 = vector.shape_cast %4 : vector<1x16x256xf32> to vector<16x256xf32>
    %6 = vector.extract_strided_slice %2 {offsets = [0, 0], sizes = [16, 1], strides = [1, 1]} : vector<16x3xf32> to vector<16x1xf32>
    %7 = vector.extract_strided_slice %2 {offsets = [0, 1], sizes = [16, 1], strides = [1, 1]} : vector<16x3xf32> to vector<16x1xf32>
    %8 = vector.extract_strided_slice %2 {offsets = [0, 2], sizes = [16, 1], strides = [1, 1]} : vector<16x3xf32> to vector<16x1xf32>
    %9 = vector.broadcast %6 : vector<16x1xf32> to vector<16x256xf32>
    %10 = arith.addf %1, %9 : vector<16x256xf32>
    %cst = arith.constant dense<0.000000e+00> : vector<16x256xf32>
    %11 = tpu.matmul %3, %10, %cst {dimension_numbers = #tpu.dot_dimension_numbers<[1], [0], [0], [1], [0, 0, 1, 1], [], []>} : vector<16x16xf32>, vector<16x256xf32>, vector<16x256xf32> -> vector<16x256xf32>
    %12 = arith.mulf %10, %10 : vector<16x256xf32>
    %cst_9 = arith.constant dense<0.000000e+00> : vector<16x256xf32>
    %13 = tpu.matmul %3, %12, %cst_9 {dimension_numbers = #tpu.dot_dimension_numbers<[1], [0], [0], [1], [0, 0, 1, 1], [], []>} : vector<16x16xf32>, vector<16x256xf32>, vector<16x256xf32> -> vector<16x256xf32>
    %cst_10 = arith.constant dense<0.000000e+00> : vector<16xf32>
    %14 = vector.multi_reduction <add>, %11, %cst_10 [1] : vector<16x256xf32> to vector<16xf32>
    %15 = vector.shape_cast %14 : vector<16xf32> to vector<16x1xf32>
    %cst_11 = arith.constant 0.001953125 : f32
    %16 = vector.broadcast %cst_11 : f32 to vector<16x1xf32>
    %17 = arith.mulf %15, %16 : vector<16x1xf32>
    %cst_12 = arith.constant dense<0.000000e+00> : vector<16xf32>
    %18 = vector.multi_reduction <add>, %13, %cst_12 [1] : vector<16x256xf32> to vector<16xf32>
    %19 = vector.shape_cast %18 : vector<16xf32> to vector<16x1xf32>
    %cst_13 = arith.constant 0.001953125 : f32
    %20 = vector.broadcast %cst_13 : f32 to vector<16x1xf32>
    %21 = arith.mulf %19, %20 : vector<16x1xf32>
    %22 = arith.mulf %17, %17 : vector<16x1xf32>
    %23 = arith.subf %21, %22 : vector<16x1xf32>
    %cst_14 = arith.constant 9.99999974E-6 : f32
    %24 = vector.broadcast %cst_14 : f32 to vector<16x1xf32>
    %25 = arith.addf %23, %24 : vector<16x1xf32>
    %26 = math.rsqrt %25 : vector<16x1xf32>
    %27 = vector.broadcast %17 : vector<16x1xf32> to vector<16x256xf32>
    %28 = arith.subf %10, %27 : vector<16x256xf32>
    %29 = arith.mulf %26, %7 : vector<16x1xf32>
    %30 = vector.broadcast %29 : vector<16x1xf32> to vector<16x256xf32>
    %31 = arith.mulf %28, %30 : vector<16x256xf32>
    %32 = vector.broadcast %8 : vector<16x1xf32> to vector<16x256xf32>
    %33 = arith.addf %31, %32 : vector<16x256xf32>
    %34 = arith.addf %33, %5 : vector<16x256xf32>
    %cst_15 = arith.constant 0.000000e+00 : f32
    %35 = vector.broadcast %cst_15 : f32 to vector<16x256xf32>
    %36 = arith.cmpf oge, %34, %35 : vector<16x256xf32>
    %cst_16 = arith.constant 0.00999999977 : f32
    %37 = vector.broadcast %cst_16 : f32 to vector<16x256xf32>
    %38 = arith.mulf %37, %34 : vector<16x256xf32>
    %39 = arith.select %36, %34, %38 : vector<16x256xi1>, vector<16x256xf32>
    %c0_17 = arith.constant 0 : index
    %c0_18 = arith.constant 0 : index
    %c0_19 = arith.constant 0 : index
    %40 = vector.load %arg5[%c0_17, %c0_18, %c0_19] : memref<1x16x256xf32, #tpu.memory_space<vmem>>, vector<1x16x256xf32>
    %41 = vector.shape_cast %40 : vector<1x16x256xf32> to vector<16x256xf32>
    %42 = vector.shape_cast %39 : vector<16x256xf32> to vector<1x16x256xf32>
    tpu.vector_store %arg5[%c0_17, %c0_18, %c0_19], %42 {strides = array<i32>} : memref<1x16x256xf32, #tpu.memory_space<vmem>>, vector<1x16x256xf32>,
    return
  }
  func.func @transform_0(%arg0: i32) -> (i32, i32, i32) {
    %c0_i32 = arith.constant 0 : i32
    %c0_i32_0 = arith.constant 0 : i32
    %c0_i32_1 = arith.constant 0 : i32
    return %arg0, %c0_i32, %c0_i32_0 : i32, i32, i32
  }
  func.func @transform_1(%arg0: i32) -> (i32, i32, i32) {
    %c0_i32 = arith.constant 0 : i32
    %c0_i32_0 = arith.constant 0 : i32
    %c0_i32_1 = arith.constant 0 : i32
    return %arg0, %c0_i32, %c0_i32_0 : i32, i32, i32
  }
  func.func @transform_2(%arg0: i32) -> (i32, i32) {
    %c0_i32 = arith.constant 0 : i32
    %c0_i32_0 = arith.constant 0 : i32
    %c0_i32_1 = arith.constant 0 : i32
    return %c0_i32, %c0_i32_0 : i32, i32
  }
  func.func @transform_3(%arg0: i32) -> (i32, i32) {
    %c0_i32 = arith.constant 0 : i32
    %c0_i32_0 = arith.constant 0 : i32
    %c0_i32_1 = arith.constant 0 : i32
    return %c0_i32, %c0_i32_0 : i32, i32
  }
  func.func @transform_4(%arg0: i32) -> (i32, i32, i32) {
    %c0_i32 = arith.constant 0 : i32
    %c0_i32_0 = arith.constant 0 : i32
    %c0_i32_1 = arith.constant 0 : i32
    return %arg0, %c0_i32, %c0_i32_0 : i32, i32, i32
  }
}

</mosaic_0001>

<llo_original>
// kernel: basic_block_forward.5
$region0: #{basic_block_forward.5}
  #allocation0 [shape = 'u32[]', space=smem, size = 0x4, offset = 0x4, fixed_abs, tag = 'smem constant byte address 0x4 - core index']
  #allocation1 [shape = 'u32[144,128]{1,0:T(1,128)}', space=vmem, size = 0x12000, scoped, tag = 'internal scratch']
  %s0 = inlined_call_operand.vmem [shape: f32[2,16,256], index: 0, kind: input, shape index: {}]
  %s1 = inlined_call_operand.vmem [shape: f32[16,3], index: 1, kind: input, shape index: {}]
  %s2 = inlined_call_operand.vmem [shape: f32[16,16], index: 2, kind: input, shape index: {}]
  %s3 = inlined_call_operand.vmem [shape: bf16[2,16,256], index: 3, kind: output, shape index: {}]
  %s4 = sld [smem:[#allocation0]]
  $region45: #{basic_block_forward.5} parent=0
    _
  %s6 = ssub.s32 1, %s4
  %s7 = scalar_select 0, %s6, %s4
  loop: start=0, step=1, limit=4
  $region2: #{basic_block_forward.5} parent=0 // loop_pre_header
    _
  $region3: #{basic_block_forward.5} parent=0 // loop_header
    %s9 = sphi 0, %s13
    %p10 = scmp.ge.s32.totalorder %s9, 4
    %s19 = sphi 0, %s21
    %s22 = sphi 0, %s19
    %s23 = sphi 0, %s22
    %s39 = sphi 0, %s23
    %s43 = sphi 0, %s43
    %s45 = sphi 0, %s43
    %s46 = sphi 0, %s45
    %s60 = sphi 0, %s46
    %s64 = sphi 0, %s64
    %s66 = sphi 0, %s64
    %s67 = sphi 0, %s66
    %s81 = sphi 0, %s67
    %s87 = sphi 0, %s89
    %s90 = sphi 0, %s87
    %s91 = sphi 0, %s90
    %s107 = sphi 0, %s91
  $region4: #{basic_block_forward.5} parent=0 // loop_header_branch
    %12 = sbr.rel (%p10) target = $region8
  $region5: #{basic_block_forward.5} parent=0 // loop_body
    %s14 = ssub.s32 %s9, 1
    %s15 = ssub.s32 %s9, 2
    %s16 = sadd.s32 %s9, 1
    %s17 = ssub.s32 %s9, %s16
    %p18 = scmp.eq.s32.totalorder %s17, 0
    %s20 = sadd.s32 %s19, 1
    %s21 = scalar_select %p18, %s19, %s20
    %p24 = pneg %p18
    %p25 = scmp.eq.s32.totalorder %s9, 1
    %p26 = por %p24, %p25
    %p27 = scmp.ne.s32.totalorder %s19, %s22
    %p28 = scmp.eq.s32.totalorder %s9, 0
    %p29 = por %p27, %p28
    %p30 = scmp.ne.s32.totalorder %s19, %s22
    %p31 = scmp.eq.s32.totalorder %s14, 1
    %p32 = por %p30, %p31
    %p33 = scmp.ne.s32.totalorder %s22, %s23
    %p34 = scmp.eq.s32.totalorder %s14, 0
    %p35 = por %p33, %p34
    %p36 = scmp.ne.s32.totalorder %s22, %s23
    %p37 = scmp.eq.s32.totalorder %s15, 1
    %p38 = por %p36, %p37
    %p40 = scmp.ne.s32.totalorder %s23, %s39
    %p41 = scmp.eq.s32.totalorder %s15, 0
    %p42 = por %p40, %p41
    %s44 = sadd.s32 %s43, 1
    %p47 = scmp.eq.s32.totalorder %s9, 1
    %p48 = scmp.ne.s32.totalorder %s43, %s45
    %p49 = scmp.eq.s32.totalorder %s9, 0
    %p50 = por %p48, %p49
    %p51 = scmp.ne.s32.totalorder %s43, %s45
    %p52 = scmp.eq.s32.totalorder %s14, 1
    %p53 = por %p51, %p52
    %p54 = scmp.ne.s32.totalorder %s45, %s46
    %p55 = scmp.eq.s32.totalorder %s14, 0
    %p56 = por %p54, %p55
    %p57 = scmp.ne.s32.totalorder %s45, %s46
    %p58 = scmp.eq.s32.totalorder %s15, 1
    %p59 = por %p57, %p58
    %p61 = scmp.ne.s32.totalorder %s46, %s60
    %p62 = scmp.eq.s32.totalorder %s15, 0
    %p63 = por %p61, %p62
    %s65 = sadd.s32 %s64, 1
    %p68 = scmp.eq.s32.totalorder %s9, 1
    %p69 = scmp.ne.s32.totalorder %s64, %s66
    %p70 = scmp.eq.s32.totalorder %s9, 0
    %p71 = por %p69, %p70
    %p72 = scmp.ne.s32.totalorder %s64, %s66
    %p73 = scmp.eq.s32.totalorder %s14, 1
    %p74 = por %p72, %p73
    %p75 = scmp.ne.s32.totalorder %s66, %s67
    %p76 = scmp.eq.s32.totalorder %s14, 0
    %p77 = por %p75, %p76
    %p78 = scmp.ne.s32.totalorder %s66, %s67
    %p79 = scmp.eq.s32.totalorder %s15, 1
    %p80 = por %p78, %p79
    %p82 = scmp.ne.s32.totalorder %s67, %s81
    %p83 = scmp.eq.s32.totalorder %s15, 0
    %p84 = por %p82, %p83
    %s85 = ssub.s32 %s9, %s16
    %p86 = scmp.eq.s32.totalorder %s85, 0
    %s88 = sadd.s32 %s87, 1
    %s89 = scalar_select %p86, %s87, %s88
    %p92 = pneg %p86
    %p93 = scmp.eq.s32.totalorder %s9, 1
    %p94 = por %p92, %p93
    %p95 = scmp.ne.s32.totalorder %s87, %s90
    %p96 = scmp.eq.s32.totalorder %s9, 0
    %p97 = por %p95, %p96
    %p98 = scmp.ne.s32.totalorder %s87, %s90
    %p99 = scmp.eq.s32.totalorder %s14, 1
    %p100 = por %p98, %p99
    %p101 = scmp.ne.s32.totalorder %s90, %s91
    %p102 = scmp.eq.s32.totalorder %s14, 0
    %p103 = por %p101, %p102
    %p104 = scmp.ne.s32.totalorder %s90, %s91
    %p105 = scmp.eq.s32.totalorder %s15, 1
    %p106 = por %p104, %p105
    %p108 = scmp.ne.s32.totalorder %s91, %s107
    %p109 = scmp.eq.s32.totalorder %s15, 0
    %p110 = por %p108, %p109
    %p111 = scmp.le.s32.totalorder 1, %s9
    %p112 = scmp.lt.s32.totalorder %s9, 3
    %p113 = pnand %p111, %p112
    %p114 = pneg %p113
    // Predicated region
    $region9: #{basic_block_forward.5} parent=5 // pred_check
      _
    $region10: #{basic_block_forward.5} parent=5 // pred_check_branch
      %116 = sbr.rel (%p113) target = $region12
    $region11: #{basic_block_forward.5} parent=5 // pred_region
      %s117 = ssub.s32 %s9, 1
      // Predicated region
      $region13: #{basic_block_forward.5} parent=11 // pred_check
        %p118 = pneg %p56
      $region14: #{basic_block_forward.5} parent=11 // pred_check_branch
        %120 = sbr.rel (%p118) target = $region16
      $region15: #{basic_block_forward.5} parent=11 // pred_region
        _
      $region16: #{basic_block_forward.5} parent=11 // pred_fallthru
        _
      // Predicated region
      $region17: #{basic_block_forward.5} parent=11 // pred_check
        %p121 = pneg %p77
      $region18: #{basic_block_forward.5} parent=11 // pred_check_branch
        %123 = sbr.rel (%p121) target = $region20
      $region19: #{basic_block_forward.5} parent=11 // pred_region
        _
      $region20: #{basic_block_forward.5} parent=11 // pred_fallthru
        _
    $region12: #{basic_block_forward.5} parent=5 // pred_fallthru
      _
    %p124 = scmp.lt.s32.totalorder %s9, 2
    // Predicated region
    $region21: #{basic_block_forward.5} parent=5 // pred_check
      %p125 = pneg %p124
    $region22: #{basic_block_forward.5} parent=5 // pred_check_branch
      %127 = sbr.rel (%p125) target = $region24
    $region23: #{basic_block_forward.5} parent=5 // pred_region
      // Predicated region
      $region25: #{basic_block_forward.5} parent=23 // pred_check
        %p128 = pneg %p29
      $region26: #{basic_block_forward.5} parent=23 // pred_check_branch
        %130 = sbr.rel (%p128) target = $region28
      $region27: #{basic_block_forward.5} parent=23 // pred_region
        %p131 = scmp.lt.s32.totalorder %s9, 1
        %s132 = scalar_select %p131, %s9, 1
        %s133 = smul.addr %s132, 4
        %s134 = smul.addr %s133, 8
        %s135 = scalar_lea.vmem %s0, %s134
      $region28: #{basic_block_forward.5} parent=23 // pred_fallthru
        _
    $region24: #{basic_block_forward.5} parent=5 // pred_fallthru
      _
    %p136 = scmp.le.s32.totalorder 1, %s9
    %p137 = scmp.lt.s32.totalorder %s9, 3
    %p138 = pnand %p136, %p137
    %p139 = pneg %p138
    // Predicated region
    $region29: #{basic_block_forward.5} parent=5 // pred_check
      _
    $region30: #{basic_block_forward.5} parent=5 // pred_check_branch
      %141 = sbr.rel (%p138) target = $region32
    $region31: #{basic_block_forward.5} parent=5 // pred_region
      %s142 = ssub.s32 %s9, 1
      %p143 = scmp.lt.s32.totalorder %s14, 1
      %s144 = scalar_select %p143, %s14, 1
      %s145 = smul.addr %s144, 4
      %s146 = smul.addr %s145, 8
      %s147 = scalar_lea.vmem %s0, %s146
      %p148 = pneg %p35
      %p149 = pneg %p32
      %p150 = pneg %p56
      %p151 = pneg %p53
      %p152 = pneg %p77
      %p153 = pneg %p74
      %p154 = pneg %p103
      %p155 = pneg %p100
      %p156 = scmp.lt.s32.totalorder %s14, 1
      %s157 = scalar_select %p156, %s14, 1
      %s158 = smul.addr %s157, 4
      %s159 = smul.addr %s158, 4
      %s160 = scalar_lea.vmem %s3, %s159
      %p161 = scmp.lt.s32.totalorder %s14, 1
      %s162 = scalar_select %p161, %s14, 1
      %s163 = smul.addr %s162, 4
      %s164 = smul.addr %s163, 8
      %s165 = scalar_lea.vmem %s0, %s164
      %p166 = scmp.lt.s32.totalorder %s14, 1
      %s167 = scalar_select %p166, %s14, 1
      %s168 = smul.addr %s167, 4
      %s169 = smul.addr %s168, 4
      %s170 = scalar_lea.vmem %s3, %s169
      %v171 = vld [vmem:[%s165] sm:$0xff]
      %v172 = vld [vmem:[%s165 + $0x8] sm:$0xff]
      %v173 = vld [vmem:[%s165 + $0x10] sm:$0xff]
      %v174 = vld [vmem:[%s165 + $0x18] sm:$0xff]
      %v175 = vld [vmem:[%s1] sm:$0xff]
      %v176 = vld [vmem:[%s1 + $0x8] sm:$0xff]
      %v177 = vld [vmem:[%s2] sm:$0xff]
      %v178 = vld [vmem:[%s2 + $0x8] sm:$0xff]
      %180 = vset.pattern.permute.xlu0 0
      %181 = vperm.xlu0 %180, %v175
      %v182 = vpop.permute.xlu0 %181
      %185 = vset.pattern.permute.xlu0 0
      %186 = vperm.xlu0 %185, %v176
      %v187 = vpop.permute.xlu0 %186
      %v189 = vadd.f32 %v171, %v182
      %v190 = vadd.f32 %v172, %v182
      %v191 = vadd.f32 %v173, %v187
      %v192 = vadd.f32 %v174, %v187
      %vm193 = vcmask 130048
      %v195 = vsel %vm193, %v177, 0
      %v198 = vsel %vm193, %v178, 0
      %200 = vmatprep.subr.mxu0 %v190
      %201 = vmatpush1.msra.mxu0 %v189
      %202 = vmatprep.subr.mxu0 %v192
      %203 = vmatpush1.msra.mxu0 %v191
      %204 = vmatprep.subr.mxu0 0.0
      %205 = vmatpush1.msra.mxu0 0.0
      %206 = vmatprep.subr.mxu0 0.0
      %207 = vmatpush1.msra.mxu0 0.0
      %208 = vmatprep.subr.mxu0 0.0
      %209 = vmatpush1.msra.mxu0 0.0
      %210 = vmatprep.subr.mxu0 0.0
      %211 = vmatpush1.msra.mxu0 0.0
      %212 = vmatprep.subr.mxu0 0.0
      %213 = vmatpush1.msra.mxu0 0.0
      %214 = vmatprep.subr.mxu0 0.0
      %215 = vmatpush1.msra.mxu0 0.0
      %216 = vmatprep.subr.mxu0 0.0
      %217 = vmatpush1.msra.mxu0 0.0
      %218 = vmatprep.subr.mxu0 0.0
      %219 = vmatpush1.msra.mxu0 0.0
      %220 = vmatprep.subr.mxu0 0.0
      %221 = vmatpush1.msra.mxu0 0.0
      %222 = vmatprep.subr.mxu0 0.0
      %223 = vmatpush1.msra.mxu0 0.0
      %224 = vmatprep.subr.mxu0 0.0
      %225 = vmatpush1.msra.mxu0 0.0
      %226 = vmatprep.subr.mxu0 0.0
      %227 = vmatpush1.msra.mxu0 0.0
      %228 = vmatprep.subr.mxu0 0.0
      %229 = vmatpush1.msra.mxu0 0.0
      %230 = vmatprep.subr.mxu0 0.0
      %231 = vmatpush1.msra.mxu0 0.0
      %232 = vmatprep.subr.mxu0 0.0
      %233 = vmatpush1.msra.mxu0 0.0
      %234 = vmatprep.subr.mxu0 0.0
      %235 = vmatpush1.msra.mxu0 0.0
      %236 = vmatprep.subr.mxu0 0.0
      %237 = vmatpush1.msra.mxu0 0.0
      %238 = vmatprep.subr.mxu0 0.0
      %239 = vmatpush1.msra.mxu0 0.0
      %240 = vmatprep.subr.mxu0 0.0
      %241 = vmatpush1.msra.mxu0 0.0
      %242 = vmatprep.subr.mxu0 0.0
      %243 = vmatpush1.msra.mxu0 0.0
      %244 = vmatprep.subr.mxu0 0.0
      %245 = vmatpush1.msra.mxu0 0.0
      %246 = vmatprep.subr.mxu0 0.0
      %247 = vmatpush1.msra.mxu0 0.0
      %248 = vmatprep.subr.mxu0 0.0
      %249 = vmatpush1.msra.mxu0 0.0
      %250 = vmatprep.subr.mxu0 0.0
      %251 = vmatpush1.msra.mxu0 0.0
      %252 = vmatprep.subr.mxu0 0.0
      %253 = vmatpush1.msra.mxu0 0.0
      %254 = vmatprep.subr.mxu0 0.0
      %255 = vmatpush1.msra.mxu0 0.0
      %256 = vmatprep.subr.mxu0 0.0
      %257 = vmatpush1.msra.mxu0 0.0
      %258 = vmatprep.subr.mxu0 0.0
      %259 = vmatpush1.msra.mxu0 0.0
      %260 = vmatprep.subr.mxu0 0.0
      %261 = vmatpush1.msra.mxu0 0.0
      %262 = vmatprep.subr.mxu0 0.0
      %263 = vmatpush1.msra.mxu0 0.0
      %264 = vmatprep.mubr.f32.mxu0 0.0
      %265 = vmatmul.mubr.f32.gmra.mrb[0].mxu0 %v195
      %v266 = vpop.f32.mrb[0].mxu0
      %v267 = vadd.f32 0.0, %v266
      %v268 = vpop.f32.mrb[0].mxu0
      %v269 = vadd.f32 0.0, %v268
      %270 = vmatprep.mubr.f32.mxu0 0.0
      %271 = vmatmul.mubr.f32.gmra.mrb[0].mxu0 %v198
      %v272 = vpop.f32.mrb[0].mxu0
      %v273 = vadd.f32 0.0, %v272
      %v274 = vpop.f32.mrb[0].mxu0
      %v275 = vadd.f32 0.0, %v274
      %276 = vdwg.mxu0
      %v277 = vmul.f32 %v189, %v189
      %v278 = vmul.f32 %v190, %v190
      %v279 = vmul.f32 %v191, %v191
      %v280 = vmul.f32 %v192, %v192
      %281 = vmatprep.subr.mxu0 %v278
      %282 = vmatpush1.msra.mxu0 %v277
      %283 = vmatprep.subr.mxu0 %v280
      %284 = vmatpush1.msra.mxu0 %v279
      %285 = vmatprep.subr.mxu0 0.0
      %286 = vmatpush1.msra.mxu0 0.0
      %287 = vmatprep.subr.mxu0 0.0
      %288 = vmatpush1.msra.mxu0 0.0
      %289 = vmatprep.subr.mxu0 0.0
      %290 = vmatpush1.msra.mxu0 0.0
      %291 = vmatprep.subr.mxu0 0.0
      %292 = vmatpush1.msra.mxu0 0.0
      %293 = vmatprep.subr.mxu0 0.0
      %294 = vmatpush1.msra.mxu0 0.0
      %295 = vmatprep.subr.mxu0 0.0
      %296 = vmatpush1.msra.mxu0 0.0
      %297 = vmatprep.subr.mxu0 0.0
      %298 = vmatpush1.msra.mxu0 0.0
      %299 = vmatprep.subr.mxu0 0.0
      %300 = vmatpush1.msra.mxu0 0.0
      %301 = vmatprep.subr.mxu0 0.0
      %302 = vmatpush1.msra.mxu0 0.0
      %303 = vmatprep.subr.mxu0 0.0
      %304 = vmatpush1.msra.mxu0 0.0
      %305 = vmatprep.subr.mxu0 0.0
      %306 = vmatpush1.msra.mxu0 0.0
      %307 = vmatprep.subr.mxu0 0.0
      %308 = vmatpush1.msra.mxu0 0.0
      %309 = vmatprep.subr.mxu0 0.0
      %310 = vmatpush1.msra.mxu0 0.0
      %311 = vmatprep.subr.mxu0 0.0
      %312 = vmatpush1.msra.mxu0 0.0
      %313 = vmatprep.subr.mxu0 0.0
      %314 = vmatpush1.msra.mxu0 0.0
      %315 = vmatprep.subr.mxu0 0.0
      %316 = vmatpush1.msra.mxu0 0.0
      %317 = vmatprep.subr.mxu0 0.0
      %318 = vmatpush1.msra.mxu0 0.0
      %319 = vmatprep.subr.mxu0 0.0
      %320 = vmatpush1.msra.mxu0 0.0
      %321 = vmatprep.subr.mxu0 0.0
      %322 = vmatpush1.msra.mxu0 0.0
      %323 = vmatprep.subr.mxu0 0.0
      %324 = vmatpush1.msra.mxu0 0.0
      %325 = vmatprep.subr.mxu0 0.0
      %326 = vmatpush1.msra.mxu0 0.0
      %327 = vmatprep.subr.mxu0 0.0
      %328 = vmatpush1.msra.mxu0 0.0
      %329 = vmatprep.subr.mxu0 0.0
      %330 = vmatpush1.msra.mxu0 0.0
      %331 = vmatprep.subr.mxu0 0.0
      %332 = vmatpush1.msra.mxu0 0.0
      %333 = vmatprep.subr.mxu0 0.0
      %334 = vmatpush1.msra.mxu0 0.0
      %335 = vmatprep.subr.mxu0 0.0
      %336 = vmatpush1.msra.mxu0 0.0
      %337 = vmatprep.subr.mxu0 0.0
      %338 = vmatpush1.msra.mxu0 0.0
      %339 = vmatprep.subr.mxu0 0.0
      %340 = vmatpush1.msra.mxu0 0.0
      %341 = vmatprep.subr.mxu0 0.0
      %342 = vmatpush1.msra.mxu0 0.0
      %343 = vmatprep.subr.mxu0 0.0
      %344 = vmatpush1.msra.mxu0 0.0
      %345 = vmatprep.mubr.f32.mxu0 0.0
      %346 = vmatmul.mubr.f32.gmra.mrb[0].mxu0 %v195
      %v347 = vpop.f32.mrb[0].mxu0
      %v348 = vadd.f32 0.0, %v347
      %v349 = vpop.f32.mrb[0].mxu0
      %v350 = vadd.f32 0.0, %v349
      %351 = vmatprep.mubr.f32.mxu0 0.0
      %352 = vmatmul.mubr.f32.gmra.mrb[0].mxu0 %v198
      %v353 = vpop.f32.mrb[0].mxu0
      %v354 = vadd.f32 0.0, %v353
      %v355 = vpop.f32.mrb[0].mxu0
      %v356 = vadd.f32 0.0, %v355
      %357 = vdwg.mxu0
      %v358 = vadd.f32 %v267, %v269
      %359 = vadd.xlane.f32.xlu0 %v358
      %v360 = vpop.xlane.xlu0 %359
      %v361 = vadd.f32 %v273, %v275
      %362 = vadd.xlane.f32.xlu0 %v361
      %v363 = vpop.xlane.xlu0 %362
      %v364 = vmul.f32 %v360, 0.001953125
      %v365 = vmul.f32 %v363, 0.001953125
      %v366 = vadd.f32 %v348, %v350
      %367 = vadd.xlane.f32.xlu0 %v366
      %v368 = vpop.xlane.xlu0 %367
      %v369 = vadd.f32 %v354, %v356
      %370 = vadd.xlane.f32.xlu0 %v369
      %v371 = vpop.xlane.xlu0 %370
      %v372 = vmul.f32 %v368, 0.001953125
      %v373 = vmul.f32 %v371, 0.001953125
      %v374 = vmul.f32 %v364, %v364
      %v375 = vmul.f32 %v365, %v365
      %v376 = vsub.f32 %v372, %v374
      %v377 = vsub.f32 %v373, %v375
      %v378 = vadd.f32 %v376, 1e-05
      %v379 = vadd.f32 %v377, 1e-05
      %v380 = vrsqrt.pop %v378
      %v381 = vrsqrt.pop %v379
      %v382 = vsub.f32 %v189, %v364
      %v383 = vsub.f32 %v190, %v364
      %v384 = vsub.f32 %v191, %v365
      %v385 = vsub.f32 %v192, %v365
      %v386 = vmul.f32 %v380, %v175
      %v387 = vmul.f32 %v381, %v176
      %389 = vset.pattern.permute.xlu0 1
      %390 = vperm.xlu0 %389, %v386
      %v391 = vpop.permute.xlu0 %390
      %394 = vset.pattern.permute.xlu0 1
      %395 = vperm.xlu0 %394, %v387
      %v396 = vpop.permute.xlu0 %395
      %v398 = vmul.f32 %v382, %v391
      %v399 = vmul.f32 %v383, %v391
      %v400 = vmul.f32 %v384, %v396
      %v401 = vmul.f32 %v385, %v396
      %402 = vset.pattern.permute.xlu0 2
      %403 = vperm.xlu0 %402, %v175
      %v404 = vpop.permute.xlu0 %403
      %406 = vset.pattern.permute.xlu0 2
      %407 = vperm.xlu0 %406, %v176
      %v408 = vpop.permute.xlu0 %407
      %v410 = vadd.f32 %v398, %v404
      %v411 = vadd.f32 %v399, %v404
      %v412 = vadd.f32 %v400, %v408
      %v413 = vadd.f32 %v401, %v408
      %vm414 = vcmp.ge.f32.partialorder %v410, 0.0
      %vm415 = vcmp.ge.f32.partialorder %v411, 0.0
      %vm416 = vcmp.ge.f32.partialorder %v412, 0.0
      %vm417 = vcmp.ge.f32.partialorder %v413, 0.0
      %v418 = vmul.f32 %v410, 0.01
      %v419 = vmul.f32 %v411, 0.01
      %v420 = vmul.f32 %v412, 0.01
      %v421 = vmul.f32 %v413, 0.01
      %v422 = vsel %vm414, %v410, %v418
      %v423 = vsel %vm415, %v411, %v419
      %v424 = vsel %vm416, %v412, %v420
      %v425 = vsel %vm417, %v413, %v421
      %v426 = vpack.c.bf16 %v424, %v422
      %v427 = vpack.c.bf16 %v425, %v423
      %v430 = vunpack.c.l.b16 %v426
      %v431 = vunpack.c.l.b16 %v427
      %v432 = vunpack.c.h.b16 %v426
      %v433 = vunpack.c.h.b16 %v427
      %v434 = vpack.c.b16 %v431, %v430
      %v435 = vpack.c.b16 %v433, %v432
      %438 = vst [vmem:[%s170] sm:$0xff] %v434
      %439 = vst [vmem:[%s170 + $0x8] sm:$0xff] %v435
      %p440 = scmp.lt.s32.totalorder %s14, 1
      %s441 = scalar_select %p440, %s14, 1
      %s442 = smul.addr %s441, 4
      %s443 = smul.addr %s442, 4
      %s444 = scalar_lea.vmem %s3, %s443
      // Predicated region
      $region33: #{basic_block_forward.5} parent=31 // pred_check
        %p445 = pneg %p100
      $region34: #{basic_block_forward.5} parent=31 // pred_check_branch
        %447 = sbr.rel (%p445) target = $region36
      $region35: #{basic_block_forward.5} parent=31 // pred_region
        _
      $region36: #{basic_block_forward.5} parent=31 // pred_fallthru
        _
    $region32: #{basic_block_forward.5} parent=5 // pred_fallthru
      _
    %p448 = scmp.le.s32.totalorder 2, %s9
    // Predicated region
    $region37: #{basic_block_forward.5} parent=5 // pred_check
      %p449 = pneg %p448
    $region38: #{basic_block_forward.5} parent=5 // pred_check_branch
      %451 = sbr.rel (%p449) target = $region40
    $region39: #{basic_block_forward.5} parent=5 // pred_region
      %s452 = ssub.s32 %s9, 2
      // Predicated region
      $region41: #{basic_block_forward.5} parent=39 // pred_check
        %p453 = pneg %p106
      $region42: #{basic_block_forward.5} parent=39 // pred_check_branch
        %455 = sbr.rel (%p453) target = $region44
      $region43: #{basic_block_forward.5} parent=39 // pred_region
        %p456 = scmp.lt.s32.totalorder %s15, 1
        %s457 = scalar_select %p456, %s15, 1
        %s458 = smul.addr %s457, 4
        %s459 = smul.addr %s458, 4
        %s460 = scalar_lea.vmem %s3, %s459
      $region44: #{basic_block_forward.5} parent=39 // pred_fallthru
        _
    $region40: #{basic_block_forward.5} parent=5 // pred_fallthru
      _
  $region6: #{basic_block_forward.5} parent=0 // loop_footer
    %s13 = sadd.s32 1, %s9
  $region7: #{basic_block_forward.5} parent=0 // loop_footer_branch
    %8 = sbr.rel target = $region3
  $region8: #{basic_block_forward.5} parent=0 // loop_exit
    _

// kernel: basic_block_forward.4
$region0: #{basic_block_forward.4}
  #allocation0 [shape = 'u32[]', space=smem, size = 0x4, offset = 0x4, fixed_abs, tag = 'smem constant byte address 0x4 - core index']
  #allocation1 [shape = 'u32[144,128]{1,0:T(1,128)}', space=vmem, size = 0x12000, scoped, tag = 'internal scratch']
  #allocation2 [shape = 'bf16[216,256]{1,0:T(8,128)(2,1)}', space=vmem, size = 0x1b000, scoped, tag = 'scratch operand']
  %s0 = inlined_call_operand.vmem [shape: bf16[2,8,402], index: 0, kind: input, shape index: {}]
  %s1 = inlined_call_operand.vmem [shape: bf16[27,256], index: 1, kind: input, shape index: {}]
  %s2 = inlined_call_operand.vmem [shape: bf16[16,216], index: 2, kind: input, shape index: {}]
  %s3 = inlined_call_operand.vmem [shape: bf16[16,8], index: 3, kind: input, shape index: {}]
  %s4 = inlined_call_operand.vmem [shape: f32[2,16,256], index: 4, kind: output, shape index: {0}]
  %s5 = inlined_call_operand.vmem [shape: f32[2,16,256], index: 5, kind: output, shape index: {1}]
  %6 = xla_tuple %s4, %s5
  %s7 = sld [smem:[#allocation0]]
  $region57: #{basic_block_forward.4} parent=0
    _
  %s9 = ssub.s32 1, %s7
  %s10 = scalar_select 0, %s9, %s7
  loop: start=0, step=1, limit=4
  $region2: #{basic_block_forward.4} parent=0 // loop_pre_header
    _
  $region3: #{basic_block_forward.4} parent=0 // loop_header
    %s12 = sphi 0, %s16
    %p13 = scmp.ge.s32.totalorder %s12, 4
    %s22 = sphi 0, %s24
    %s25 = sphi 0, %s22
    %s26 = sphi 0, %s25
    %s42 = sphi 0, %s26
    %s46 = sphi 0, %s46
    %s48 = sphi 0, %s46
    %s49 = sphi 0, %s48
    %s63 = sphi 0, %s49
    %s67 = sphi 0, %s67
    %s69 = sphi 0, %s67
    %s70 = sphi 0, %s69
    %s84 = sphi 0, %s70
    %s88 = sphi 0, %s88
    %s90 = sphi 0, %s88
    %s91 = sphi 0, %s90
    %s105 = sphi 0, %s91
    %s111 = sphi 0, %s113
    %s114 = sphi 0, %s111
    %s115 = sphi 0, %s114
    %s131 = sphi 0, %s115
    %s137 = sphi 0, %s139
    %s140 = sphi 0, %s137
    %s141 = sphi 0, %s140
    %s157 = sphi 0, %s141
  $region4: #{basic_block_forward.4} parent=0 // loop_header_branch
    %15 = sbr.rel (%p13) target = $region8
  $region5: #{basic_block_forward.4} parent=0 // loop_body
    %s17 = ssub.s32 %s12, 1
    %s18 = ssub.s32 %s12, 2
    %s19 = sadd.s32 %s12, 1
    %s20 = ssub.s32 %s12, %s19
    %p21 = scmp.eq.s32.totalorder %s20, 0
    %s23 = sadd.s32 %s22, 1
    %s24 = scalar_select %p21, %s22, %s23
    %p27 = pneg %p21
    %p28 = scmp.eq.s32.totalorder %s12, 1
    %p29 = por %p27, %p28
    %p30 = scmp.ne.s32.totalorder %s22, %s25
    %p31 = scmp.eq.s32.totalorder %s12, 0
    %p32 = por %p30, %p31
    %p33 = scmp.ne.s32.totalorder %s22, %s25
    %p34 = scmp.eq.s32.totalorder %s17, 1
    %p35 = por %p33, %p34
    %p36 = scmp.ne.s32.totalorder %s25, %s26
    %p37 = scmp.eq.s32.totalorder %s17, 0
    %p38 = por %p36, %p37
    %p39 = scmp.ne.s32.totalorder %s25, %s26
    %p40 = scmp.eq.s32.totalorder %s18, 1
    %p41 = por %p39, %p40
    %p43 = scmp.ne.s32.totalorder %s26, %s42
    %p44 = scmp.eq.s32.totalorder %s18, 0
    %p45 = por %p43, %p44
    %s47 = sadd.s32 %s46, 1
    %p50 = scmp.eq.s32.totalorder %s12, 1
    %p51 = scmp.ne.s32.totalorder %s46, %s48
    %p52 = scmp.eq.s32.totalorder %s12, 0
    %p53 = por %p51, %p52
    %p54 = scmp.ne.s32.totalorder %s46, %s48
    %p55 = scmp.eq.s32.totalorder %s17, 1
    %p56 = por %p54, %p55
    %p57 = scmp.ne.s32.totalorder %s48, %s49
    %p58 = scmp.eq.s32.totalorder %s17, 0
    %p59 = por %p57, %p58
    %p60 = scmp.ne.s32.totalorder %s48, %s49
    %p61 = scmp.eq.s32.totalorder %s18, 1
    %p62 = por %p60, %p61
    %p64 = scmp.ne.s32.totalorder %s49, %s63
    %p65 = scmp.eq.s32.totalorder %s18, 0
    %p66 = por %p64, %p65
    %s68 = sadd.s32 %s67, 1
    %p71 = scmp.eq.s32.totalorder %s12, 1
    %p72 = scmp.ne.s32.totalorder %s67, %s69
    %p73 = scmp.eq.s32.totalorder %s12, 0
    %p74 = por %p72, %p73
    %p75 = scmp.ne.s32.totalorder %s67, %s69
    %p76 = scmp.eq.s32.totalorder %s17, 1
    %p77 = por %p75, %p76
    %p78 = scmp.ne.s32.totalorder %s69, %s70
    %p79 = scmp.eq.s32.totalorder %s17, 0
    %p80 = por %p78, %p79
    %p81 = scmp.ne.s32.totalorder %s69, %s70
    %p82 = scmp.eq.s32.totalorder %s18, 1
    %p83 = por %p81, %p82
    %p85 = scmp.ne.s32.totalorder %s70, %s84
    %p86 = scmp.eq.s32.totalorder %s18, 0
    %p87 = por %p85, %p86
    %s89 = sadd.s32 %s88, 1
    %p92 = scmp.eq.s32.totalorder %s12, 1
    %p93 = scmp.ne.s32.totalorder %s88, %s90
    %p94 = scmp.eq.s32.totalorder %s12, 0
    %p95 = por %p93, %p94
    %p96 = scmp.ne.s32.totalorder %s88, %s90
    %p97 = scmp.eq.s32.totalorder %s17, 1
    %p98 = por %p96, %p97
    %p99 = scmp.ne.s32.totalorder %s90, %s91
    %p100 = scmp.eq.s32.totalorder %s17, 0
    %p101 = por %p99, %p100
    %p102 = scmp.ne.s32.totalorder %s90, %s91
    %p103 = scmp.eq.s32.totalorder %s18, 1
    %p104 = por %p102, %p103
    %p106 = scmp.ne.s32.totalorder %s91, %s105
    %p107 = scmp.eq.s32.totalorder %s18, 0
    %p108 = por %p106, %p107
    %s109 = ssub.s32 %s12, %s19
    %p110 = scmp.eq.s32.totalorder %s109, 0
    %s112 = sadd.s32 %s111, 1
    %s113 = scalar_select %p110, %s111, %s112
    %p116 = pneg %p110
    %p117 = scmp.eq.s32.totalorder %s12, 1
    %p118 = por %p116, %p117
    %p119 = scmp.ne.s32.totalorder %s111, %s114
    %p120 = scmp.eq.s32.totalorder %s12, 0
    %p121 = por %p119, %p120
    %p122 = scmp.ne.s32.totalorder %s111, %s114
    %p123 = scmp.eq.s32.totalorder %s17, 1
    %p124 = por %p122, %p123
    %p125 = scmp.ne.s32.totalorder %s114, %s115
    %p126 = scmp.eq.s32.totalorder %s17, 0
    %p127 = por %p125, %p126
    %p128 = scmp.ne.s32.totalorder %s114, %s115
    %p129 = scmp.eq.s32.totalorder %s18, 1
    %p130 = por %p128, %p129
    %p132 = scmp.ne.s32.totalorder %s115, %s131
    %p133 = scmp.eq.s32.totalorder %s18, 0
    %p134 = por %p132, %p133
    %s135 = ssub.s32 %s12, %s19
    %p136 = scmp.eq.s32.totalorder %s135, 0
    %s138 = sadd.s32 %s137, 1
    %s139 = scalar_select %p136, %s137, %s138
    %p142 = pneg %p136
    %p143 = scmp.eq.s32.totalorder %s12, 1
    %p144 = por %p142, %p143
    %p145 = scmp.ne.s32.totalorder %s137, %s140
    %p146 = scmp.eq.s32.totalorder %s12, 0
    %p147 = por %p145, %p146
    %p148 = scmp.ne.s32.totalorder %s137, %s140
    %p149 = scmp.eq.s32.totalorder %s17, 1
    %p150 = por %p148, %p149
    %p151 = scmp.ne.s32.totalorder %s140, %s141
    %p152 = scmp.eq.s32.totalorder %s17, 0
    %p153 = por %p151, %p152
    %p154 = scmp.ne.s32.totalorder %s140, %s141
    %p155 = scmp.eq.s32.totalorder %s18, 1
    %p156 = por %p154, %p155
    %p158 = scmp.ne.s32.totalorder %s141, %s157
    %p159 = scmp.eq.s32.totalorder %s18, 0
    %p160 = por %p158, %p159
    %p161 = scmp.le.s32.totalorder 1, %s12
    %p162 = scmp.lt.s32.totalorder %s12, 3
    %p163 = pnand %p161, %p162
    %p164 = pneg %p163
    // Predicated region
    $region9: #{basic_block_forward.4} parent=5 // pred_check
      _
    $region10: #{basic_block_forward.4} parent=5 // pred_check_branch
      %166 = sbr.rel (%p163) target = $region12
    $region11: #{basic_block_forward.4} parent=5 // pred_region
      %s167 = ssub.s32 %s12, 1
      // Predicated region
      $region13: #{basic_block_forward.4} parent=11 // pred_check
        %p168 = pneg %p59
      $region14: #{basic_block_forward.4} parent=11 // pred_check_branch
        %170 = sbr.rel (%p168) target = $region16
      $region15: #{basic_block_forward.4} parent=11 // pred_region
        _
      $region16: #{basic_block_forward.4} parent=11 // pred_fallthru
        _
      // Predicated region
      $region17: #{basic_block_forward.4} parent=11 // pred_check
        %p171 = pneg %p80
      $region18: #{basic_block_forward.4} parent=11 // pred_check_branch
        %173 = sbr.rel (%p171) target = $region20
      $region19: #{basic_block_forward.4} parent=11 // pred_region
        _
      $region20: #{basic_block_forward.4} parent=11 // pred_fallthru
        _
      // Predicated region
      $region21: #{basic_block_forward.4} parent=11 // pred_check
        %p174 = pneg %p101
      $region22: #{basic_block_forward.4} parent=11 // pred_check_branch
        %176 = sbr.rel (%p174) target = $region24
      $region23: #{basic_block_forward.4} parent=11 // pred_region
        _
      $region24: #{basic_block_forward.4} parent=11 // pred_fallthru
        _
    $region12: #{basic_block_forward.4} parent=5 // pred_fallthru
      _
    %p177 = scmp.lt.s32.totalorder %s12, 2
    // Predicated region
    $region25: #{basic_block_forward.4} parent=5 // pred_check
      %p178 = pneg %p177
    $region26: #{basic_block_forward.4} parent=5 // pred_check_branch
      %180 = sbr.rel (%p178) target = $region28
    $region27: #{basic_block_forward.4} parent=5 // pred_region
      // Predicated region
      $region29: #{basic_block_forward.4} parent=27 // pred_check
        %p181 = pneg %p32
      $region30: #{basic_block_forward.4} parent=27 // pred_check_branch
        %183 = sbr.rel (%p181) target = $region32
      $region31: #{basic_block_forward.4} parent=27 // pred_region
        %p184 = scmp.lt.s32.totalorder %s12, 1
        %s185 = scalar_select %p184, %s12, 1
        %s186 = smul.addr %s185, 4
        %s187 = smul.addr %s186, 4
        %s188 = scalar_lea.vmem %s0, %s187
      $region32: #{basic_block_forward.4} parent=27 // pred_fallthru
        _
    $region28: #{basic_block_forward.4} parent=5 // pred_fallthru
      _
    %p189 = scmp.le.s32.totalorder 1, %s12
    %p190 = scmp.lt.s32.totalorder %s12, 3
    %p191 = pnand %p189, %p190
    %p192 = pneg %p191
    // Predicated region
    $region33: #{basic_block_forward.4} parent=5 // pred_check
      _
    $region34: #{basic_block_forward.4} parent=5 // pred_check_branch
      %194 = sbr.rel (%p191) target = $region36
    $region35: #{basic_block_forward.4} parent=5 // pred_region
      %s195 = ssub.s32 %s12, 1
      %p196 = scmp.lt.s32.totalorder %s17, 1
      %s197 = scalar_select %p196, %s17, 1
      %s198 = smul.addr %s197, 4
      %s199 = smul.addr %s198, 4
      %s200 = scalar_lea.vmem %s0, %s199
      %p201 = pneg %p38
      %p202 = pneg %p35
      %p203 = pneg %p59
      %p204 = pneg %p56
      %p205 = pneg %p80
      %p206 = pneg %p77
      %p207 = pneg %p101
      %p208 = pneg %p98
      %p209 = pneg %p127
      %p210 = pneg %p124
      %p211 = scmp.lt.s32.totalorder %s17, 1
      %s212 = scalar_select %p211, %s17, 1
      %s213 = smul.addr %s212, 4
      %s214 = smul.addr %s213, 8
      %s215 = scalar_lea.vmem %s4, %s214
      %p216 = pneg %p153
      %p217 = pneg %p150
      %p218 = scmp.lt.s32.totalorder %s17, 1
      %s219 = scalar_select %p218, %s17, 1
      %s220 = smul.addr %s219, 4
      %s221 = smul.addr %s220, 8
      %s222 = scalar_lea.vmem %s5, %s221
      %p223 = scmp.lt.s32.totalorder %s17, 1
      %s224 = scalar_select %p223, %s17, 1
      %s225 = smul.addr %s224, 4
      %s226 = smul.addr %s225, 4
      %s227 = scalar_lea.vmem %s0, %s226
      %p228 = scmp.lt.s32.totalorder %s17, 1
      %s229 = scalar_select %p228, %s17, 1
      %s230 = smul.addr %s229, 4
      %s231 = smul.addr %s230, 8
      %s232 = scalar_lea.vmem %s4, %s231
      %p233 = scmp.lt.s32.totalorder %s17, 1
      %s234 = scalar_select %p233, %s17, 1
      %s235 = smul.addr %s234, 4
      %s236 = smul.addr %s235, 8
      %s237 = scalar_lea.vmem %s5, %s236
      %v239 = vld [vmem:[%s227] sm:$0xff]
      %v240 = vld [vmem:[%s227 + $0x8] sm:$0xff]
      %v241 = vld [vmem:[%s1] sm:$0x11]
      %v243 = vunpack.c.l.b16 %v241
      %v244 = vunpack.c.h.b16 %v241
      %v245 = vpack.c.b16 %v243, %v243
      %v246 = vpack.c.b16 %v244, %v244
      %v248 = vpack.i.b16 %v245, %v245
      %v250 = vlaneseq
      %v251 = vshrl.u32 %v250, 7
      %v252 = vsub.s32 0, %v251
      %v253 = vrot.slane %v248, %v252
      %v255 = vpack.i.b16 %v246, %v246
      %v257 = vlaneseq
      %v258 = vshrl.u32 %v257, 7
      %v259 = vsub.s32 0, %v258
      %v260 = vrot.slane %v255, %v259
      %v263 = vunpack.c.l.b16 %v253
      %v264 = vunpack.c.l.b16 %v260
      %v265 = vpack.c.b16 %v264, %v263
      %v267 = vmul.bf16 %v239, %v265
      %268 = vst [vmem:[#allocation2] sm:$0xff] %v267
      %v269 = vld [vmem:[%s1] sm:$0x11]
      %v271 = vunpack.c.l.b16 %v269
      %v272 = vunpack.c.h.b16 %v269
      %v273 = vpack.c.b16 %v271, %v271
      %v274 = vpack.c.b16 %v272, %v272
      %v276 = vshrl.u32 %v273, 16
      %v277 = vpack.i.b16 %v276, %v276
      %v279 = vlaneseq
      %v280 = vshrl.u32 %v279, 7
      %v281 = vsub.s32 0, %v280
      %v282 = vrot.slane %v277, %v281
      %v284 = vshrl.u32 %v274, 16
      %v285 = vpack.i.b16 %v284, %v284
      %v287 = vlaneseq
      %v288 = vshrl.u32 %v287, 7
      %v289 = vsub.s32 0, %v288
      %v290 = vrot.slane %v285, %v289
      %v293 = vunpack.c.l.b16 %v282
      %v294 = vunpack.c.l.b16 %v290
      %v295 = vpack.c.b16 %v294, %v293
      %296 = vrot.lane.b32.xlu0 %v295, 1
      %v297 = vpop.permute.xlu0 %296
      %v298 = vrot.slane %v297, 4
      %vm299 = vcmask 7168
      %v300 = vsel %vm299, %v298, %v297
      %v303 = vmul.bf16 %v239, %v300
      %v304 = vmul.bf16 %v240, %v298
      %307 = vrot.lane.b32.xlu0 %v303, 127
      %v308 = vpop.permute.xlu0 %307
      %309 = vrot.lane.b32.xlu0 %v304, 127
      %v310 = vpop.permute.xlu0 %309
      %v311 = vrot.slane %v308, 4
      %v312 = vrot.slane %v310, 4
      %vm313 = vcmask 1043456
      %v314 = vsel %vm313, %v311, %v312
      %vm315 = vcmask 1039360
      %v316 = vsel %vm315, %v308, %v314
      %318 = vst [vmem:[#allocation2 + $0x8] sm:$0xff] %v316
      %v319 = vld [vmem:[%s1] sm:$0x22]
      %v321 = vunpack.c.l.b16 %v319
      %v322 = vunpack.c.h.b16 %v319
      %v323 = vpack.c.b16 %v321, %v321
      %v324 = vpack.c.b16 %v322, %v322
      %v326 = vpack.i.b16 %v323, %v323
      %v328 = vlaneseq
      %v329 = vshrl.u32 %v328, 7
      %v330 = vsub.s32 1, %v329
      %v331 = vrot.slane %v326, %v330
      %v333 = vpack.i.b16 %v324, %v324
      %v335 = vlaneseq
      %v336 = vshrl.u32 %v335, 7
      %v337 = vsub.s32 1, %v336
      %v338 = vrot.slane %v333, %v337
      %v341 = vunpack.c.l.b16 %v331
      %v342 = vunpack.c.l.b16 %v338
      %v343 = vpack.c.b16 %v342, %v341
      %344 = vrot.lane.b32.xlu0 %v343, 2
      %v345 = vpop.permute.xlu0 %344
      %v346 = vrot.slane %v345, 4
      %vm347 = vcmask 15360
      %v348 = vsel %vm347, %v346, %v345
      %v351 = vmul.bf16 %v239, %v348
      %v352 = vmul.bf16 %v240, %v346
      %355 = vrot.lane.b32.xlu0 %v351, 126
      %v356 = vpop.permute.xlu0 %355
      %357 = vrot.lane.b32.xlu0 %v352, 126
      %v358 = vpop.permute.xlu0 %357
      %v359 = vrot.slane %v356, 4
      %v360 = vrot.slane %v358, 4
      %v361 = vsel %vm313, %v359, %v360
      %vm362 = vcmask 1031168
      %v363 = vsel %vm362, %v356, %v361
      %365 = vst [vmem:[#allocation2 + $0x10] sm:$0xff] %v363
      %v366 = vld [vmem:[%s1] sm:$0x22]
      %v368 = vunpack.c.l.b16 %v366
      %v369 = vunpack.c.h.b16 %v366
      %v370 = vpack.c.b16 %v368, %v368
      %v371 = vpack.c.b16 %v369, %v369
      %v373 = vshrl.u32 %v370, 16
      %v374 = vpack.i.b16 %v373, %v373
      %v376 = vlaneseq
      %v377 = vshrl.u32 %v376, 7
      %v378 = vsub.s32 1, %v377
      %v379 = vrot.slane %v374, %v378
      %v381 = vshrl.u32 %v371, 16
      %v382 = vpack.i.b16 %v381, %v381
      %v384 = vlaneseq
      %v385 = vshrl.u32 %v384, 7
      %v386 = vsub.s32 1, %v385
      %v387 = vrot.slane %v382, %v386
      %v390 = vunpack.c.l.b16 %v379
      %v391 = vunpack.c.l.b16 %v387
      %v392 = vpack.c.b16 %v391, %v390
      %393 = vrot.lane.b32.xlu0 %v392, 8
      %v394 = vpop.permute.xlu0 %393
      %v395 = vrot.slane %v394, 4
      %vm396 = vcmask 64512
      %v397 = vsel %vm396, %v395, %v394
      %v400 = vmul.bf16 %v239, %v397
      %v401 = vmul.bf16 %v240, %v395
      %404 = vrot.lane.b32.xlu0 %v400, 120
      %v405 = vpop.permute.xlu0 %404
      %406 = vrot.lane.b32.xlu0 %v401, 120
      %v407 = vpop.permute.xlu0 %406
      %v408 = vrot.slane %v405, 4
      %v409 = vrot.slane %v407, 4
      %v410 = vsel %vm313, %v408, %v409
      %vm411 = vcmask 982016
      %v412 = vsel %vm411, %v405, %v410
      %414 = vst [vmem:[#allocation2 + $0x18] sm:$0xff] %v412
      %v415 = vld [vmem:[%s1] sm:$0x44]
      %v417 = vunpack.c.l.b16 %v415
      %v418 = vunpack.c.h.b16 %v415
      %v419 = vpack.c.b16 %v417, %v417
      %v420 = vpack.c.b16 %v418, %v418
      %v422 = vpack.i.b16 %v419, %v419
      %v424 = vlaneseq
      %v425 = vshrl.u32 %v424, 7
      %v426 = vsub.s32 2, %v425
      %v427 = vrot.slane %v422, %v426
      %v429 = vpack.i.b16 %v420, %v420
      %v431 = vlaneseq
      %v432 = vshrl.u32 %v431, 7
      %v433 = vsub.s32 2, %v432
      %v434 = vrot.slane %v429, %v433
      %v437 = vunpack.c.l.b16 %v427
      %v438 = vunpack.c.l.b16 %v434
      %v439 = vpack.c.b16 %v438, %v437
      %440 = vrot.lane.b32.xlu0 %v439, 9
      %v441 = vpop.permute.xlu0 %440
      %v442 = vrot.slane %v441, 4
      %vm443 = vcmask 72704
      %v444 = vsel %vm443, %v442, %v441
      %v447 = vmul.bf16 %v239, %v444
      %v448 = vmul.bf16 %v240, %v442
      %451 = vrot.lane.b32.xlu0 %v447, 119
      %v452 = vpop.permute.xlu0 %451
      %453 = vrot.lane.b32.xlu0 %v448, 119
      %v454 = vpop.permute.xlu0 %453
      %v455 = vrot.slane %v452, 4
      %v456 = vrot.slane %v454, 4
      %v457 = vsel %vm313, %v455, %v456
      %vm458 = vcmask 973824
      %v459 = vsel %vm458, %v452, %v457
      %461 = vst [vmem:[#allocation2 + $0x20] sm:$0xff] %v459
      %v462 = vld [vmem:[%s1] sm:$0x44]
      %v464 = vunpack.c.l.b16 %v462
      %v465 = vunpack.c.h.b16 %v462
      %v466 = vpack.c.b16 %v464, %v464
      %v467 = vpack.c.b16 %v465, %v465
      %v469 = vshrl.u32 %v466, 16
      %v470 = vpack.i.b16 %v469, %v469
      %v472 = vlaneseq
      %v473 = vshrl.u32 %v472, 7
      %v474 = vsub.s32 2, %v473
      %v475 = vrot.slane %v470, %v474
      %v477 = vshrl.u32 %v467, 16
      %v478 = vpack.i.b16 %v477, %v477
      %v480 = vlaneseq
      %v481 = vshrl.u32 %v480, 7
      %v482 = vsub.s32 2, %v481
      %v483 = vrot.slane %v478, %v482
      %v486 = vunpack.c.l.b16 %v475
      %v487 = vunpack.c.l.b16 %v483
      %v488 = vpack.c.b16 %v487, %v486
      %489 = vrot.lane.b32.xlu0 %v488, 10
      %v490 = vpop.permute.xlu0 %489
      %v491 = vrot.slane %v490, 4
      %vm492 = vcmask 80896
      %v493 = vsel %vm492, %v491, %v490
      %v496 = vmul.bf16 %v239, %v493
      %v497 = vmul.bf16 %v240, %v491
      %500 = vrot.lane.b32.xlu0 %v496, 118
      %v501 = vpop.permute.xlu0 %500
      %502 = vrot.lane.b32.xlu0 %v497, 118
      %v503 = vpop.permute.xlu0 %502
      %v504 = vrot.slane %v501, 4
      %v505 = vrot.slane %v503, 4
      %v506 = vsel %vm313, %v504, %v505
      %vm507 = vcmask 965632
      %v508 = vsel %vm507, %v501, %v506
      %510 = vst [vmem:[#allocation2 + $0x28] sm:$0xff] %v508
      %v511 = vld [vmem:[%s1] sm:$0x88]
      %v513 = vunpack.c.l.b16 %v511
      %v514 = vunpack.c.h.b16 %v511
      %v515 = vpack.c.b16 %v513, %v513
      %v516 = vpack.c.b16 %v514, %v514
      %v518 = vpack.i.b16 %v515, %v515
      %v520 = vlaneseq
      %v521 = vshrl.u32 %v520, 7
      %v522 = vsub.s32 3, %v521
      %v523 = vrot.slane %v518, %v522
      %v525 = vpack.i.b16 %v516, %v516
      %v527 = vlaneseq
      %v528 = vshrl.u32 %v527, 7
      %v529 = vsub.s32 3, %v528
      %v530 = vrot.slane %v525, %v529
      %v533 = vunpack.c.l.b16 %v523
      %v534 = vunpack.c.l.b16 %v530
      %v535 = vpack.c.b16 %v534, %v533
      %536 = vrot.lane.b32.xlu0 %v535, 16
      %v537 = vpop.permute.xlu0 %536
      %v538 = vrot.slane %v537, 4
      %vm539 = vcmask 130048
      %v540 = vsel %vm539, %v538, %v537
      %v543 = vmul.bf16 %v239, %v540
      %v544 = vmul.bf16 %v240, %v538
      %547 = vrot.lane.b32.xlu0 %v543, 112
      %v548 = vpop.permute.xlu0 %547
      %549 = vrot.lane.b32.xlu0 %v544, 112
      %v550 = vpop.permute.xlu0 %549
      %v551 = vrot.slane %v548, 4
      %v552 = vrot.slane %v550, 4
      %v553 = vsel %vm313, %v551, %v552
      %vm554 = vcmask 916480
      %v555 = vsel %vm554, %v548, %v553
      %557 = vst [vmem:[#allocation2 + $0x30] sm:$0xff] %v555
      %v558 = vld [vmem:[%s1] sm:$0x88]
      %v560 = vunpack.c.l.b16 %v558
      %v561 = vunpack.c.h.b16 %v558
      %v562 = vpack.c.b16 %v560, %v560
      %v563 = vpack.c.b16 %v561, %v561
      %v565 = vshrl.u32 %v562, 16
      %v566 = vpack.i.b16 %v565, %v565
      %v568 = vlaneseq
      %v569 = vshrl.u32 %v568, 7
      %v570 = vsub.s32 3, %v569
      %v571 = vrot.slane %v566, %v570
      %v573 = vshrl.u32 %v563, 16
      %v574 = vpack.i.b16 %v573, %v573
      %v576 = vlaneseq
      %v577 = vshrl.u32 %v576, 7
      %v578 = vsub.s32 3, %v577
      %v579 = vrot.slane %v574, %v578
      %v582 = vunpack.c.l.b16 %v571
      %v583 = vunpack.c.l.b16 %v579
      %v584 = vpack.c.b16 %v583, %v582
      %585 = vrot.lane.b32.xlu0 %v584, 17
      %v586 = vpop.permute.xlu0 %585
      %v587 = vrot.slane %v586, 4
      %vm588 = vcmask 138240
      %v589 = vsel %vm588, %v587, %v586
      %v592 = vmul.bf16 %v239, %v589
      %v593 = vmul.bf16 %v240, %v587
      %596 = vrot.lane.b32.xlu0 %v592, 111
      %v597 = vpop.permute.xlu0 %596
      %598 = vrot.lane.b32.xlu0 %v593, 111
      %v599 = vpop.permute.xlu0 %598
      %v600 = vrot.slane %v597, 4
      %v601 = vrot.slane %v599, 4
      %v602 = vsel %vm313, %v600, %v601
      %vm603 = vcmask 908288
      %v604 = vsel %vm603, %v597, %v602
      %606 = vst [vmem:[#allocation2 + $0x38] sm:$0xff] %v604
      %v607 = vld [vmem:[%s1 + $0x8] sm:$0x11]
      %v609 = vunpack.c.l.b16 %v607
      %v610 = vunpack.c.h.b16 %v607
      %v611 = vpack.c.b16 %v609, %v609
      %v612 = vpack.c.b16 %v610, %v610
      %v614 = vpack.i.b16 %v611, %v611
      %v616 = vlaneseq
      %v617 = vshrl.u32 %v616, 7
      %v618 = vsub.s32 0, %v617
      %v619 = vrot.slane %v614, %v618
      %v621 = vpack.i.b16 %v612, %v612
      %v623 = vlaneseq
      %v624 = vshrl.u32 %v623, 7
      %v625 = vsub.s32 0, %v624
      %v626 = vrot.slane %v621, %v625
      %v629 = vunpack.c.l.b16 %v619
      %v630 = vunpack.c.l.b16 %v626
      %v631 = vpack.c.b16 %v630, %v629
      %632 = vrot.lane.b32.xlu0 %v631, 18
      %v633 = vpop.permute.xlu0 %632
      %v634 = vrot.slane %v633, 4
      %vm635 = vcmask 146432
      %v636 = vsel %vm635, %v634, %v633
      %v639 = vmul.bf16 %v239, %v636
      %v640 = vmul.bf16 %v240, %v634
      %643 = vrot.lane.b32.xlu0 %v639, 110
      %v644 = vpop.permute.xlu0 %643
      %645 = vrot.lane.b32.xlu0 %v640, 110
      %v646 = vpop.permute.xlu0 %645
      %v647 = vrot.slane %v644, 4
      %v648 = vrot.slane %v646, 4
      %v649 = vsel %vm313, %v647, %v648
      %vm650 = vcmask 900096
      %v651 = vsel %vm650, %v644, %v649
      %653 = vst [vmem:[#allocation2 + $0x40] sm:$0xff] %v651
      %v654 = vld [vmem:[%s1 + $0x8] sm:$0x11]
      %v656 = vunpack.c.l.b16 %v654
      %v657 = vunpack.c.h.b16 %v654
      %v658 = vpack.c.b16 %v656, %v656
      %v659 = vpack.c.b16 %v657, %v657
      %v661 = vshrl.u32 %v658, 16
      %v662 = vpack.i.b16 %v661, %v661
      %v664 = vlaneseq
      %v665 = vshrl.u32 %v664, 7
      %v666 = vsub.s32 0, %v665
      %v667 = vrot.slane %v662, %v666
      %v669 = vshrl.u32 %v659, 16
      %v670 = vpack.i.b16 %v669, %v669
      %v672 = vlaneseq
      %v673 = vshrl.u32 %v672, 7
      %v674 = vsub.s32 0, %v673
      %v675 = vrot.slane %v670, %v674
      %v678 = vunpack.c.l.b16 %v667
      %v679 = vunpack.c.l.b16 %v675
      %v680 = vpack.c.b16 %v679, %v678
      %681 = vrot.lane.b32.xlu0 %v680, 64
      %v682 = vpop.permute.xlu0 %681
      %v683 = vrot.slane %v682, 4
      %vm684 = vcmask 523264
      %v685 = vsel %vm684, %v683, %v682
      %v688 = vmul.bf16 %v239, %v685
      %v689 = vmul.bf16 %v240, %v683
      %692 = vrot.lane.b32.xlu0 %v688, 64
      %v693 = vpop.permute.xlu0 %692
      %694 = vrot.lane.b32.xlu0 %v689, 64
      %v695 = vpop.permute.xlu0 %694
      %v696 = vrot.slane %v693, 4
      %v697 = vrot.slane %v695, 4
      %v698 = vsel %vm313, %v696, %v697
      %v699 = vsel %vm684, %v693, %v698
      %701 = vst [vmem:[#allocation2 + $0x48] sm:$0xff] %v699
      %v702 = vld [vmem:[%s1 + $0x8] sm:$0x22]
      %v704 = vunpack.c.l.b16 %v702
      %v705 = vunpack.c.h.b16 %v702
      %v706 = vpack.c.b16 %v704, %v704
      %v707 = vpack.c.b16 %v705, %v705
      %v709 = vpack.i.b16 %v706, %v706
      %v711 = vlaneseq
      %v712 = vshrl.u32 %v711, 7
      %v713 = vsub.s32 1, %v712
      %v714 = vrot.slane %v709, %v713
      %v716 = vpack.i.b16 %v707, %v707
      %v718 = vlaneseq
      %v719 = vshrl.u32 %v718, 7
      %v720 = vsub.s32 1, %v719
      %v721 = vrot.slane %v716, %v720
      %v724 = vunpack.c.l.b16 %v714
      %v725 = vunpack.c.l.b16 %v721
      %v726 = vpack.c.b16 %v725, %v724
      %727 = vrot.lane.b32.xlu0 %v726, 65
      %v728 = vpop.permute.xlu0 %727
      %v729 = vrot.slane %v728, 4
      %vm730 = vcmask 531456
      %v731 = vsel %vm730, %v729, %v728
      %v734 = vmul.bf16 %v239, %v731
      %v735 = vmul.bf16 %v240, %v729
      %738 = vrot.lane.b32.xlu0 %v734, 63
      %v739 = vpop.permute.xlu0 %738
      %740 = vrot.lane.b32.xlu0 %v735, 63
      %v741 = vpop.permute.xlu0 %740
      %v742 = vrot.slane %v739, 4
      %v743 = vrot.slane %v741, 4
      %v744 = vsel %vm313, %v742, %v743
      %vm745 = vcmask 515072
      %v746 = vsel %vm745, %v739, %v744
      %748 = vst [vmem:[#allocation2 + $0x50] sm:$0xff] %v746
      %v749 = vld [vmem:[%s1 + $0x8] sm:$0x22]
      %v751 = vunpack.c.l.b16 %v749
      %v752 = vunpack.c.h.b16 %v749
      %v753 = vpack.c.b16 %v751, %v751
      %v754 = vpack.c.b16 %v752, %v752
      %v756 = vshrl.u32 %v753, 16
      %v757 = vpack.i.b16 %v756, %v756
      %v759 = vlaneseq
      %v760 = vshrl.u32 %v759, 7
      %v761 = vsub.s32 1, %v760
      %v762 = vrot.slane %v757, %v761
      %v764 = vshrl.u32 %v754, 16
      %v765 = vpack.i.b16 %v764, %v764
      %v767 = vlaneseq
      %v768 = vshrl.u32 %v767, 7
      %v769 = vsub.s32 1, %v768
      %v770 = vrot.slane %v765, %v769
      %v773 = vunpack.c.l.b16 %v762
      %v774 = vunpack.c.l.b16 %v770
      %v775 = vpack.c.b16 %v774, %v773
      %776 = vrot.lane.b32.xlu0 %v775, 66
      %v777 = vpop.permute.xlu0 %776
      %v778 = vrot.slane %v777, 4
      %vm779 = vcmask 539648
      %v780 = vsel %vm779, %v778, %v777
      %v783 = vmul.bf16 %v239, %v780
      %v784 = vmul.bf16 %v240, %v778
      %787 = vrot.lane.b32.xlu0 %v783, 62
      %v788 = vpop.permute.xlu0 %787
      %789 = vrot.lane.b32.xlu0 %v784, 62
      %v790 = vpop.permute.xlu0 %789
      %v791 = vrot.slane %v788, 4
      %v792 = vrot.slane %v790, 4
      %v793 = vsel %vm313, %v791, %v792
      %vm794 = vcmask 506880
      %v795 = vsel %vm794, %v788, %v793
      %797 = vst [vmem:[#allocation2 + $0x58] sm:$0xff] %v795
      %v798 = vld [vmem:[%s1 + $0x8] sm:$0x44]
      %v800 = vunpack.c.l.b16 %v798
      %v801 = vunpack.c.h.b16 %v798
      %v802 = vpack.c.b16 %v800, %v800
      %v803 = vpack.c.b16 %v801, %v801
      %v805 = vpack.i.b16 %v802, %v802
      %v807 = vlaneseq
      %v808 = vshrl.u32 %v807, 7
      %v809 = vsub.s32 2, %v808
      %v810 = vrot.slane %v805, %v809
      %v812 = vpack.i.b16 %v803, %v803
      %v814 = vlaneseq
      %v815 = vshrl.u32 %v814, 7
      %v816 = vsub.s32 2, %v815
      %v817 = vrot.slane %v812, %v816
      %v820 = vunpack.c.l.b16 %v810
      %v821 = vunpack.c.l.b16 %v817
      %v822 = vpack.c.b16 %v821, %v820
      %823 = vrot.lane.b32.xlu0 %v822, 72
      %v824 = vpop.permute.xlu0 %823
      %v825 = vrot.slane %v824, 4
      %vm826 = vcmask 588800
      %v827 = vsel %vm826, %v825, %v824
      %v830 = vmul.bf16 %v239, %v827
      %v831 = vmul.bf16 %v240, %v825
      %834 = vrot.lane.b32.xlu0 %v830, 56
      %v835 = vpop.permute.xlu0 %834
      %836 = vrot.lane.b32.xlu0 %v831, 56
      %v837 = vpop.permute.xlu0 %836
      %v838 = vrot.slane %v835, 4
      %v839 = vrot.slane %v837, 4
      %v840 = vsel %vm313, %v838, %v839
      %vm841 = vcmask 457728
      %v842 = vsel %vm841, %v835, %v840
      %844 = vst [vmem:[#allocation2 + $0x60] sm:$0xff] %v842
      %v845 = vld [vmem:[%s1 + $0x8] sm:$0x44]
      %v847 = vunpack.c.l.b16 %v845
      %v848 = vunpack.c.h.b16 %v845
      %v849 = vpack.c.b16 %v847, %v847
      %v850 = vpack.c.b16 %v848, %v848
      %v852 = vshrl.u32 %v849, 16
      %v853 = vpack.i.b16 %v852, %v852
      %v855 = vlaneseq
      %v856 = vshrl.u32 %v855, 7
      %v857 = vsub.s32 2, %v856
      %v858 = vrot.slane %v853, %v857
      %v860 = vshrl.u32 %v850, 16
      %v861 = vpack.i.b16 %v860, %v860
      %v863 = vlaneseq
      %v864 = vshrl.u32 %v863, 7
      %v865 = vsub.s32 2, %v864
      %v866 = vrot.slane %v861, %v865
      %v869 = vunpack.c.l.b16 %v858
      %v870 = vunpack.c.l.b16 %v866
      %v871 = vpack.c.b16 %v870, %v869
      %872 = vrot.lane.b32.xlu0 %v871, 73
      %v873 = vpop.permute.xlu0 %872
      %v874 = vrot.slane %v873, 4
      %vm875 = vcmask 596992
      %v876 = vsel %vm875, %v874, %v873
      %v879 = vmul.bf16 %v239, %v876
      %v880 = vmul.bf16 %v240, %v874
      %883 = vrot.lane.b32.xlu0 %v879, 55
      %v884 = vpop.permute.xlu0 %883
      %885 = vrot.lane.b32.xlu0 %v880, 55
      %v886 = vpop.permute.xlu0 %885
      %v887 = vrot.slane %v884, 4
      %v888 = vrot.slane %v886, 4
      %v889 = vsel %vm313, %v887, %v888
      %vm890 = vcmask 449536
      %v891 = vsel %vm890, %v884, %v889
      %893 = vst [vmem:[#allocation2 + $0x68] sm:$0xff] %v891
      %v894 = vld [vmem:[%s1 + $0x8] sm:$0x88]
      %v896 = vunpack.c.l.b16 %v894
      %v897 = vunpack.c.h.b16 %v894
      %v898 = vpack.c.b16 %v896, %v896
      %v899 = vpack.c.b16 %v897, %v897
      %v901 = vpack.i.b16 %v898, %v898
      %v903 = vlaneseq
      %v904 = vshrl.u32 %v903, 7
      %v905 = vsub.s32 3, %v904
      %v906 = vrot.slane %v901, %v905
      %v908 = vpack.i.b16 %v899, %v899
      %v910 = vlaneseq
      %v911 = vshrl.u32 %v910, 7
      %v912 = vsub.s32 3, %v911
      %v913 = vrot.slane %v908, %v912
      %v916 = vunpack.c.l.b16 %v906
      %v917 = vunpack.c.l.b16 %v913
      %v918 = vpack.c.b16 %v917, %v916
      %919 = vrot.lane.b32.xlu0 %v918, 74
      %v920 = vpop.permute.xlu0 %919
      %v921 = vrot.slane %v920, 4
      %vm922 = vcmask 605184
      %v923 = vsel %vm922, %v921, %v920
      %v926 = vmul.bf16 %v239, %v923
      %v927 = vmul.bf16 %v240, %v921
      %930 = vrot.lane.b32.xlu0 %v926, 54
      %v931 = vpop.permute.xlu0 %930
      %932 = vrot.lane.b32.xlu0 %v927, 54
      %v933 = vpop.permute.xlu0 %932
      %v934 = vrot.slane %v931, 4
      %v935 = vrot.slane %v933, 4
      %v936 = vsel %vm313, %v934, %v935
      %vm937 = vcmask 441344
      %v938 = vsel %vm937, %v931, %v936
      %940 = vst [vmem:[#allocation2 + $0x70] sm:$0xff] %v938
      %v941 = vld [vmem:[%s1 + $0x8] sm:$0x88]
      %v943 = vunpack.c.l.b16 %v941
      %v944 = vunpack.c.h.b16 %v941
      %v945 = vpack.c.b16 %v943, %v943
      %v946 = vpack.c.b16 %v944, %v944
      %v948 = vshrl.u32 %v945, 16
      %v949 = vpack.i.b16 %v948, %v948
      %v951 = vlaneseq
      %v952 = vshrl.u32 %v951, 7
      %v953 = vsub.s32 3, %v952
      %v954 = vrot.slane %v949, %v953
      %v956 = vshrl.u32 %v946, 16
      %v957 = vpack.i.b16 %v956, %v956
      %v959 = vlaneseq
      %v960 = vshrl.u32 %v959, 7
      %v961 = vsub.s32 3, %v960
      %v962 = vrot.slane %v957, %v961
      %v965 = vunpack.c.l.b16 %v954
      %v966 = vunpack.c.l.b16 %v962
      %v967 = vpack.c.b16 %v966, %v965
      %968 = vrot.lane.b32.xlu0 %v967, 80
      %v969 = vpop.permute.xlu0 %968
      %v970 = vrot.slane %v969, 4
      %vm971 = vcmask 654336
      %v972 = vsel %vm971, %v970, %v969
      %v975 = vmul.bf16 %v239, %v972
      %v976 = vmul.bf16 %v240, %v970
      %979 = vrot.lane.b32.xlu0 %v975, 48
      %v980 = vpop.permute.xlu0 %979
      %981 = vrot.lane.b32.xlu0 %v976, 48
      %v982 = vpop.permute.xlu0 %981
      %v983 = vrot.slane %v980, 4
      %v984 = vrot.slane %v982, 4
      %v985 = vsel %vm313, %v983, %v984
      %vm986 = vcmask 392192
      %v987 = vsel %vm986, %v980, %v985
      %989 = vst [vmem:[#allocation2 + $0x78] sm:$0xff] %v987
      %v990 = vld [vmem:[%s1 + $0x10] sm:$0x11]
      %v992 = vunpack.c.l.b16 %v990
      %v993 = vunpack.c.h.b16 %v990
      %v994 = vpack.c.b16 %v992, %v992
      %v995 = vpack.c.b16 %v993, %v993
      %v997 = vpack.i.b16 %v994, %v994
      %v999 = vlaneseq
      %v1000 = vshrl.u32 %v999, 7
      %v1001 = vsub.s32 0, %v1000
      %v1002 = vrot.slane %v997, %v1001
      %v1004 = vpack.i.b16 %v995, %v995
      %v1006 = vlaneseq
      %v1007 = vshrl.u32 %v1006, 7
      %v1008 = vsub.s32 0, %v1007
      %v1009 = vrot.slane %v1004, %v1008
      %v1012 = vunpack.c.l.b16 %v1002
      %v1013 = vunpack.c.l.b16 %v1009
      %v1014 = vpack.c.b16 %v1013, %v1012
      %1015 = vrot.lane.b32.xlu0 %v1014, 81
      %v1016 = vpop.permute.xlu0 %1015
      %v1017 = vrot.slane %v1016, 4
      %vm1018 = vcmask 662528
      %v1019 = vsel %vm1018, %v1017, %v1016
      %v1022 = vmul.bf16 %v239, %v1019
      %v1023 = vmul.bf16 %v240, %v1017
      %1026 = vrot.lane.b32.xlu0 %v1022, 47
      %v1027 = vpop.permute.xlu0 %1026
      %1028 = vrot.lane.b32.xlu0 %v1023, 47
      %v1029 = vpop.permute.xlu0 %1028
      %v1030 = vrot.slane %v1027, 4
      %v1031 = vrot.slane %v1029, 4
      %v1032 = vsel %vm313, %v1030, %v1031
      %vm1033 = vcmask 384000
      %v1034 = vsel %vm1033, %v1027, %v1032
      %1036 = vst [vmem:[#allocation2 + $0x80] sm:$0xff] %v1034
      %v1037 = vld [vmem:[%s1 + $0x10] sm:$0x11]
      %v1039 = vunpack.c.l.b16 %v1037
      %v1040 = vunpack.c.h.b16 %v1037
      %v1041 = vpack.c.b16 %v1039, %v1039
      %v1042 = vpack.c.b16 %v1040, %v1040
      %v1044 = vshrl.u32 %v1041, 16
      %v1045 = vpack.i.b16 %v1044, %v1044
      %v1047 = vlaneseq
      %v1048 = vshrl.u32 %v1047, 7
      %v1049 = vsub.s32 0, %v1048
      %v1050 = vrot.slane %v1045, %v1049
      %v1052 = vshrl.u32 %v1042, 16
      %v1053 = vpack.i.b16 %v1052, %v1052
      %v1055 = vlaneseq
      %v1056 = vshrl.u32 %v1055, 7
      %v1057 = vsub.s32 0, %v1056
      %v1058 = vrot.slane %v1053, %v1057
      %v1061 = vunpack.c.l.b16 %v1050
      %v1062 = vunpack.c.l.b16 %v1058
      %v1063 = vpack.c.b16 %v1062, %v1061
      %1064 = vrot.lane.b32.xlu0 %v1063, 82
      %v1065 = vpop.permute.xlu0 %1064
      %v1066 = vrot.slane %v1065, 4
      %vm1067 = vcmask 670720
      %v1068 = vsel %vm1067, %v1066, %v1065
      %v1071 = vmul.bf16 %v239, %v1068
      %v1072 = vmul.bf16 %v240, %v1066
      %1075 = vrot.lane.b32.xlu0 %v1071, 46
      %v1076 = vpop.permute.xlu0 %1075
      %1077 = vrot.lane.b32.xlu0 %v1072, 46
      %v1078 = vpop.permute.xlu0 %1077
      %v1079 = vrot.slane %v1076, 4
      %v1080 = vrot.slane %v1078, 4
      %v1081 = vsel %vm313, %v1079, %v1080
      %vm1082 = vcmask 375808
      %v1083 = vsel %vm1082, %v1076, %v1081
      %1085 = vst [vmem:[#allocation2 + $0x88] sm:$0xff] %v1083
      %v1086 = vld [vmem:[%s1 + $0x10] sm:$0x22]
      %v1088 = vunpack.c.l.b16 %v1086
      %v1089 = vunpack.c.h.b16 %v1086
      %v1090 = vpack.c.b16 %v1088, %v1088
      %v1091 = vpack.c.b16 %v1089, %v1089
      %v1093 = vpack.i.b16 %v1090, %v1090
      %v1095 = vlaneseq
      %v1096 = vshrl.u32 %v1095, 7
      %v1097 = vsub.s32 1, %v1096
      %v1098 = vrot.slane %v1093, %v1097
      %v1100 = vpack.i.b16 %v1091, %v1091
      %v1102 = vlaneseq
      %v1103 = vshrl.u32 %v1102, 7
      %v1104 = vsub.s32 1, %v1103
      %v1105 = vrot.slane %v1100, %v1104
      %v1108 = vrot.slane %v239, 4
      %v1109 = vrot.slane %v240, 4
      %v1110 = vsel %vm313, %v1108, %v1109
      %v1114 = vunpack.c.l.b16 %v1098
      %v1115 = vunpack.c.l.b16 %v1105
      %v1116 = vpack.c.b16 %v1115, %v1114
      %v1118 = vmul.bf16 %v1110, %v1116
      %1119 = vst [vmem:[#allocation2 + $0x90] sm:$0xff] %v1118
      %v1120 = vld [vmem:[%s1 + $0x10] sm:$0x22]
      %v1122 = vunpack.c.l.b16 %v1120
      %v1123 = vunpack.c.h.b16 %v1120
      %v1124 = vpack.c.b16 %v1122, %v1122
      %v1125 = vpack.c.b16 %v1123, %v1123
      %v1127 = vshrl.u32 %v1124, 16
      %v1128 = vpack.i.b16 %v1127, %v1127
      %v1130 = vlaneseq
      %v1131 = vshrl.u32 %v1130, 7
      %v1132 = vsub.s32 1, %v1131
      %v1133 = vrot.slane %v1128, %v1132
      %v1135 = vshrl.u32 %v1125, 16
      %v1136 = vpack.i.b16 %v1135, %v1135
      %v1138 = vlaneseq
      %v1139 = vshrl.u32 %v1138, 7
      %v1140 = vsub.s32 1, %v1139
      %v1141 = vrot.slane %v1136, %v1140
      %1142 = vrot.lane.b32.xlu0 %v239, 127
      %v1143 = vpop.permute.xlu0 %1142
      %1144 = vrot.lane.b32.xlu0 %v240, 127
      %v1145 = vpop.permute.xlu0 %1144
      %v1146 = vrot.slane %v1143, 4
      %v1147 = vrot.slane %v1145, 4
      %v1148 = vsel %vm313, %v1146, %v1147
      %v1149 = vsel %vm315, %v1148, %v1145
      %v1153 = vunpack.c.l.b16 %v1133
      %v1154 = vunpack.c.l.b16 %v1141
      %v1155 = vpack.c.b16 %v1154, %v1153
      %v1157 = vmul.bf16 %v1149, %v1155
      %1158 = vst [vmem:[#allocation2 + $0x98] sm:$0xff] %v1157
      %v1159 = vld [vmem:[%s1 + $0x10] sm:$0x44]
      %v1161 = vunpack.c.l.b16 %v1159
      %v1162 = vunpack.c.h.b16 %v1159
      %v1163 = vpack.c.b16 %v1161, %v1161
      %v1164 = vpack.c.b16 %v1162, %v1162
      %v1166 = vpack.i.b16 %v1163, %v1163
      %v1168 = vlaneseq
      %v1169 = vshrl.u32 %v1168, 7
      %v1170 = vsub.s32 2, %v1169
      %v1171 = vrot.slane %v1166, %v1170
      %v1173 = vpack.i.b16 %v1164, %v1164
      %v1175 = vlaneseq
      %v1176 = vshrl.u32 %v1175, 7
      %v1177 = vsub.s32 2, %v1176
      %v1178 = vrot.slane %v1173, %v1177
      %1179 = vrot.lane.b32.xlu0 %v239, 126
      %v1180 = vpop.permute.xlu0 %1179
      %1181 = vrot.lane.b32.xlu0 %v240, 126
      %v1182 = vpop.permute.xlu0 %1181
      %v1183 = vrot.slane %v1180, 4
      %v1184 = vrot.slane %v1182, 4
      %v1185 = vsel %vm313, %v1183, %v1184
      %v1186 = vsel %vm362, %v1185, %v1182
      %v1190 = vunpack.c.l.b16 %v1171
      %v1191 = vunpack.c.l.b16 %v1178
      %v1192 = vpack.c.b16 %v1191, %v1190
      %v1194 = vmul.bf16 %v1186, %v1192
      %1195 = vst [vmem:[#allocation2 + $0xa0] sm:$0xff] %v1194
      %v1196 = vld [vmem:[%s1 + $0x10] sm:$0x44]
      %v1198 = vunpack.c.l.b16 %v1196
      %v1199 = vunpack.c.h.b16 %v1196
      %v1200 = vpack.c.b16 %v1198, %v1198
      %v1201 = vpack.c.b16 %v1199, %v1199
      %v1203 = vshrl.u32 %v1200, 16
      %v1204 = vpack.i.b16 %v1203, %v1203
      %v1206 = vlaneseq
      %v1207 = vshrl.u32 %v1206, 7
      %v1208 = vsub.s32 2, %v1207
      %v1209 = vrot.slane %v1204, %v1208
      %v1211 = vshrl.u32 %v1201, 16
      %v1212 = vpack.i.b16 %v1211, %v1211
      %v1214 = vlaneseq
      %v1215 = vshrl.u32 %v1214, 7
      %v1216 = vsub.s32 2, %v1215
      %v1217 = vrot.slane %v1212, %v1216
      %1218 = vrot.lane.b32.xlu0 %v239, 120
      %v1219 = vpop.permute.xlu0 %1218
      %1220 = vrot.lane.b32.xlu0 %v240, 120
      %v1221 = vpop.permute.xlu0 %1220
      %v1222 = vrot.slane %v1219, 4
      %v1223 = vrot.slane %v1221, 4
      %v1224 = vsel %vm313, %v1222, %v1223
      %v1225 = vsel %vm411, %v1224, %v1221
      %v1229 = vunpack.c.l.b16 %v1209
      %v1230 = vunpack.c.l.b16 %v1217
      %v1231 = vpack.c.b16 %v1230, %v1229
      %v1233 = vmul.bf16 %v1225, %v1231
      %1234 = vst [vmem:[#allocation2 + $0xa8] sm:$0xff] %v1233
      %v1235 = vld [vmem:[%s1 + $0x10] sm:$0x88]
      %v1237 = vunpack.c.l.b16 %v1235
      %v1238 = vunpack.c.h.b16 %v1235
      %v1239 = vpack.c.b16 %v1237, %v1237
      %v1240 = vpack.c.b16 %v1238, %v1238
      %v1242 = vpack.i.b16 %v1239, %v1239
      %v1244 = vlaneseq
      %v1245 = vshrl.u32 %v1244, 7
      %v1246 = vsub.s32 3, %v1245
      %v1247 = vrot.slane %v1242, %v1246
      %v1249 = vpack.i.b16 %v1240, %v1240
      %v1251 = vlaneseq
      %v1252 = vshrl.u32 %v1251, 7
      %v1253 = vsub.s32 3, %v1252
      %v1254 = vrot.slane %v1249, %v1253
      %1255 = vrot.lane.b32.xlu0 %v239, 119
      %v1256 = vpop.permute.xlu0 %1255
      %1257 = vrot.lane.b32.xlu0 %v240, 119
      %v1258 = vpop.permute.xlu0 %1257
      %v1259 = vrot.slane %v1256, 4
      %v1260 = vrot.slane %v1258, 4
      %v1261 = vsel %vm313, %v1259, %v1260
      %v1262 = vsel %vm458, %v1261, %v1258
      %v1266 = vunpack.c.l.b16 %v1247
      %v1267 = vunpack.c.l.b16 %v1254
      %v1268 = vpack.c.b16 %v1267, %v1266
      %v1270 = vmul.bf16 %v1262, %v1268
      %1271 = vst [vmem:[#allocation2 + $0xb0] sm:$0xff] %v1270
      %v1272 = vld [vmem:[%s1 + $0x10] sm:$0x88]
      %v1274 = vunpack.c.l.b16 %v1272
      %v1275 = vunpack.c.h.b16 %v1272
      %v1276 = vpack.c.b16 %v1274, %v1274
      %v1277 = vpack.c.b16 %v1275, %v1275
      %v1279 = vshrl.u32 %v1276, 16
      %v1280 = vpack.i.b16 %v1279, %v1279
      %v1282 = vlaneseq
      %v1283 = vshrl.u32 %v1282, 7
      %v1284 = vsub.s32 3, %v1283
      %v1285 = vrot.slane %v1280, %v1284
      %v1287 = vshrl.u32 %v1277, 16
      %v1288 = vpack.i.b16 %v1287, %v1287
      %v1290 = vlaneseq
      %v1291 = vshrl.u32 %v1290, 7
      %v1292 = vsub.s32 3, %v1291
      %v1293 = vrot.slane %v1288, %v1292
      %1294 = vrot.lane.b32.xlu0 %v239, 118
      %v1295 = vpop.permute.xlu0 %1294
      %1296 = vrot.lane.b32.xlu0 %v240, 118
      %v1297 = vpop.permute.xlu0 %1296
      %v1298 = vrot.slane %v1295, 4
      %v1299 = vrot.slane %v1297, 4
      %v1300 = vsel %vm313, %v1298, %v1299
      %v1301 = vsel %vm507, %v1300, %v1297
      %v1305 = vunpack.c.l.b16 %v1285
      %v1306 = vunpack.c.l.b16 %v1293
      %v1307 = vpack.c.b16 %v1306, %v1305
      %v1309 = vmul.bf16 %v1301, %v1307
      %1310 = vst [vmem:[#allocation2 + $0xb8] sm:$0xff] %v1309
      %v1311 = vld [vmem:[%s1 + $0x18] sm:$0x11]
      %v1313 = vunpack.c.l.b16 %v1311
      %v1314 = vunpack.c.h.b16 %v1311
      %v1315 = vpack.c.b16 %v1313, %v1313
      %v1316 = vpack.c.b16 %v1314, %v1314
      %v1318 = vpack.i.b16 %v1315, %v1315
      %v1320 = vlaneseq
      %v1321 = vshrl.u32 %v1320, 7
      %v1322 = vsub.s32 0, %v1321
      %v1323 = vrot.slane %v1318, %v1322
      %v1325 = vpack.i.b16 %v1316, %v1316
      %v1327 = vlaneseq
      %v1328 = vshrl.u32 %v1327, 7
      %v1329 = vsub.s32 0, %v1328
      %v1330 = vrot.slane %v1325, %v1329
      %1331 = vrot.lane.b32.xlu0 %v239, 112
      %v1332 = vpop.permute.xlu0 %1331
      %1333 = vrot.lane.b32.xlu0 %v240, 112
      %v1334 = vpop.permute.xlu0 %1333
      %v1335 = vrot.slane %v1332, 4
      %v1336 = vrot.slane %v1334, 4
      %v1337 = vsel %vm313, %v1335, %v1336
      %v1338 = vsel %vm554, %v1337, %v1334
      %v1342 = vunpack.c.l.b16 %v1323
      %v1343 = vunpack.c.l.b16 %v1330
      %v1344 = vpack.c.b16 %v1343, %v1342
      %v1346 = vmul.bf16 %v1338, %v1344
      %1347 = vst [vmem:[#allocation2 + $0xc0] sm:$0xff] %v1346
      %v1348 = vld [vmem:[%s1 + $0x18] sm:$0x11]
      %v1350 = vunpack.c.l.b16 %v1348
      %v1351 = vunpack.c.h.b16 %v1348
      %v1352 = vpack.c.b16 %v1350, %v1350
      %v1353 = vpack.c.b16 %v1351, %v1351
      %v1355 = vshrl.u32 %v1352, 16
      %v1356 = vpack.i.b16 %v1355, %v1355
      %v1358 = vlaneseq
      %v1359 = vshrl.u32 %v1358, 7
      %v1360 = vsub.s32 0, %v1359
      %v1361 = vrot.slane %v1356, %v1360
      %v1363 = vshrl.u32 %v1353, 16
      %v1364 = vpack.i.b16 %v1363, %v1363
      %v1366 = vlaneseq
      %v1367 = vshrl.u32 %v1366, 7
      %v1368 = vsub.s32 0, %v1367
      %v1369 = vrot.slane %v1364, %v1368
      %1370 = vrot.lane.b32.xlu0 %v239, 111
      %v1371 = vpop.permute.xlu0 %1370
      %1372 = vrot.lane.b32.xlu0 %v240, 111
      %v1373 = vpop.permute.xlu0 %1372
      %v1374 = vrot.slane %v1371, 4
      %v1375 = vrot.slane %v1373, 4
      %v1376 = vsel %vm313, %v1374, %v1375
      %v1377 = vsel %vm603, %v1376, %v1373
      %v1381 = vunpack.c.l.b16 %v1361
      %v1382 = vunpack.c.l.b16 %v1369
      %v1383 = vpack.c.b16 %v1382, %v1381
      %v1385 = vmul.bf16 %v1377, %v1383
      %1386 = vst [vmem:[#allocation2 + $0xc8] sm:$0xff] %v1385
      %v1387 = vld [vmem:[%s1 + $0x18] sm:$0x22]
      %v1389 = vunpack.c.l.b16 %v1387
      %v1390 = vunpack.c.h.b16 %v1387
      %v1391 = vpack.c.b16 %v1389, %v1389
      %v1392 = vpack.c.b16 %v1390, %v1390
      %v1394 = vpack.i.b16 %v1391, %v1391
      %v1396 = vlaneseq
      %v1397 = vshrl.u32 %v1396, 7
      %v1398 = vsub.s32 1, %v1397
      %v1399 = vrot.slane %v1394, %v1398
      %v1401 = vpack.i.b16 %v1392, %v1392
      %v1403 = vlaneseq
      %v1404 = vshrl.u32 %v1403, 7
      %v1405 = vsub.s32 1, %v1404
      %v1406 = vrot.slane %v1401, %v1405
      %1407 = vrot.lane.b32.xlu0 %v239, 110
      %v1408 = vpop.permute.xlu0 %1407
      %1409 = vrot.lane.b32.xlu0 %v240, 110
      %v1410 = vpop.permute.xlu0 %1409
      %v1411 = vrot.slane %v1408, 4
      %v1412 = vrot.slane %v1410, 4
      %v1413 = vsel %vm313, %v1411, %v1412
      %v1414 = vsel %vm650, %v1413, %v1410
      %v1418 = vunpack.c.l.b16 %v1399
      %v1419 = vunpack.c.l.b16 %v1406
      %v1420 = vpack.c.b16 %v1419, %v1418
      %v1422 = vmul.bf16 %v1414, %v1420
      %1423 = vst [vmem:[#allocation2 + $0xd0] sm:$0xff] %v1422
      %v1424 = vld [vmem:[%s2] sm:$0xff]
      %v1425 = vld [vmem:[%s2 + $0x8] sm:$0xff]
      %v1426 = vld [vmem:[#allocation2] sm:$0xff]
      %v1427 = vld [vmem:[#allocation2 + $0x8] sm:$0xff]
      %v1428 = vld [vmem:[#allocation2 + $0x10] sm:$0xff]
      %v1429 = vld [vmem:[#allocation2 + $0x18] sm:$0xff]
      %v1430 = vld [vmem:[#allocation2 + $0x20] sm:$0xff]
      %v1431 = vld [vmem:[#allocation2 + $0x28] sm:$0xff]
      %v1432 = vld [vmem:[#allocation2 + $0x30] sm:$0xff]
      %v1433 = vld [vmem:[#allocation2 + $0x38] sm:$0xff]
      %v1434 = vld [vmem:[#allocation2 + $0x40] sm:$0xff]
      %v1435 = vld [vmem:[#allocation2 + $0x48] sm:$0xff]
      %v1436 = vld [vmem:[#allocation2 + $0x50] sm:$0xff]
      %v1437 = vld [vmem:[#allocation2 + $0x58] sm:$0xff]
      %v1438 = vld [vmem:[#allocation2 + $0x60] sm:$0xff]
      %v1439 = vld [vmem:[#allocation2 + $0x68] sm:$0xff]
      %v1440 = vld [vmem:[#allocation2 + $0x70] sm:$0xff]
      %v1441 = vld [vmem:[#allocation2 + $0x78] sm:$0xff]
      %v1442 = vld [vmem:[#allocation2 + $0x80] sm:$0xff]
      %v1443 = vld [vmem:[#allocation2 + $0x88] sm:$0xff]
      %v1444 = vld [vmem:[#allocation2 + $0x90] sm:$0xff]
      %v1445 = vld [vmem:[#allocation2 + $0x98] sm:$0xff]
      %v1446 = vld [vmem:[#allocation2 + $0xa0] sm:$0xff]
      %v1447 = vld [vmem:[#allocation2 + $0xa8] sm:$0xff]
      %v1448 = vld [vmem:[#allocation2 + $0xb0] sm:$0xff]
      %v1449 = vld [vmem:[#allocation2 + $0xb8] sm:$0xff]
      %v1450 = vld [vmem:[#allocation2 + $0xc0] sm:$0xff]
      %v1451 = vld [vmem:[#allocation2 + $0xc8] sm:$0xff]
      %v1452 = vld [vmem:[#allocation2 + $0xd0] sm:$0xff]
      %v1455 = vunpack.c.l.b16 %v1424
      %v1456 = vunpack.c.h.b16 %v1424
      %v1457 = vunpack.c.l.b16 %v1425
      %v1458 = vunpack.c.h.b16 %v1425
      %v1459 = vpack.c.b16 %v1457, %v1455
      %v1460 = vpack.c.b16 %v1458, %v1456
      %v1489 = vunpack.c.l.b16 %v1426
      %v1490 = vunpack.c.h.b16 %v1426
      %v1491 = vunpack.c.l.b16 %v1427
      %v1492 = vunpack.c.h.b16 %v1427
      %v1493 = vunpack.c.l.b16 %v1428
      %v1494 = vunpack.c.h.b16 %v1428
      %v1495 = vunpack.c.l.b16 %v1429
      %v1496 = vunpack.c.h.b16 %v1429
      %v1497 = vunpack.c.l.b16 %v1430
      %v1498 = vunpack.c.h.b16 %v1430
      %v1499 = vunpack.c.l.b16 %v1431
      %v1500 = vunpack.c.h.b16 %v1431
      %v1501 = vunpack.c.l.b16 %v1432
      %v1502 = vunpack.c.h.b16 %v1432
      %v1503 = vunpack.c.l.b16 %v1433
      %v1504 = vunpack.c.h.b16 %v1433
      %v1505 = vunpack.c.l.b16 %v1434
      %v1506 = vunpack.c.h.b16 %v1434
      %v1507 = vunpack.c.l.b16 %v1435
      %v1508 = vunpack.c.h.b16 %v1435
      %v1509 = vunpack.c.l.b16 %v1436
      %v1510 = vunpack.c.h.b16 %v1436
      %v1511 = vunpack.c.l.b16 %v1437
      %v1512 = vunpack.c.h.b16 %v1437
      %v1513 = vunpack.c.l.b16 %v1438
      %v1514 = vunpack.c.h.b16 %v1438
      %v1515 = vunpack.c.l.b16 %v1439
      %v1516 = vunpack.c.h.b16 %v1439
      %v1517 = vunpack.c.l.b16 %v1440
      %v1518 = vunpack.c.h.b16 %v1440
      %v1519 = vunpack.c.l.b16 %v1441
      %v1520 = vunpack.c.h.b16 %v1441
      %v1521 = vunpack.c.l.b16 %v1442
      %v1522 = vunpack.c.h.b16 %v1442
      %v1523 = vunpack.c.l.b16 %v1443
      %v1524 = vunpack.c.h.b16 %v1443
      %v1525 = vunpack.c.l.b16 %v1444
      %v1526 = vunpack.c.h.b16 %v1444
      %v1527 = vunpack.c.l.b16 %v1445
      %v1528 = vunpack.c.h.b16 %v1445
      %v1529 = vunpack.c.l.b16 %v1446
      %v1530 = vunpack.c.h.b16 %v1446
      %v1531 = vunpack.c.l.b16 %v1447
      %v1532 = vunpack.c.h.b16 %v1447
      %v1533 = vunpack.c.l.b16 %v1448
      %v1534 = vunpack.c.h.b16 %v1448
      %v1535 = vunpack.c.l.b16 %v1449
      %v1536 = vunpack.c.h.b16 %v1449
      %v1537 = vunpack.c.l.b16 %v1450
      %v1538 = vunpack.c.h.b16 %v1450
      %v1539 = vunpack.c.l.b16 %v1451
      %v1540 = vunpack.c.h.b16 %v1451
      %v1541 = vunpack.c.l.b16 %v1452
      %v1542 = vunpack.c.h.b16 %v1452
      %v1543 = vpack.c.b16 %v1491, %v1489
      %v1544 = vpack.c.b16 %v1492, %v1490
      %v1545 = vpack.c.b16 %v1495, %v1493
      %v1546 = vpack.c.b16 %v1496, %v1494
      %v1547 = vpack.c.b16 %v1499, %v1497
      %v1548 = vpack.c.b16 %v1500, %v1498
      %v1549 = vpack.c.b16 %v1503, %v1501
      %v1550 = vpack.c.b16 %v1504, %v1502
      %v1551 = vpack.c.b16 %v1507, %v1505
      %v1552 = vpack.c.b16 %v1508, %v1506
      %v1553 = vpack.c.b16 %v1511, %v1509
      %v1554 = vpack.c.b16 %v1512, %v1510
      %v1555 = vpack.c.b16 %v1515, %v1513
      %v1556 = vpack.c.b16 %v1516, %v1514
      %v1557 = vpack.c.b16 %v1519, %v1517
      %v1558 = vpack.c.b16 %v1520, %v1518
      %v1559 = vpack.c.b16 %v1523, %v1521
      %v1560 = vpack.c.b16 %v1524, %v1522
      %v1561 = vpack.c.b16 %v1527, %v1525
      %v1562 = vpack.c.b16 %v1528, %v1526
      %v1563 = vpack.c.b16 %v1531, %v1529
      %v1564 = vpack.c.b16 %v1532, %v1530
      %v1565 = vpack.c.b16 %v1535, %v1533
      %v1566 = vpack.c.b16 %v1536, %v1534
      %v1567 = vpack.c.b16 %v1539, %v1537
      %v1568 = vpack.c.b16 %v1540, %v1538
      %v1569 = vpack.c.b16 %v1541, %v1541
      %v1570 = vpack.c.b16 %v1542, %v1542
      %vm1597 = vcmask 719872
      %v1599 = vsel %vm1597, %v1460, 0
      %vm1601 = vcmask 1043456
      %v1603 = vsel %vm1601, %v1569, 0
      %v1606 = vsel %vm1601, %v1570, 0
      %1608 = vmatprep.subr.bf16.mxu0 %v1544
      %1609 = vmatpush1.bf16.msra.mxu0 %v1543
      %1610 = vmatprep.subr.bf16.mxu0 %v1546
      %1611 = vmatpush1.bf16.msra.mxu0 %v1545
      %1612 = vmatprep.subr.bf16.mxu0 %v1548
      %1613 = vmatpush1.bf16.msra.mxu0 %v1547
      %1614 = vmatprep.subr.bf16.mxu0 %v1550
      %1615 = vmatpush1.bf16.msra.mxu0 %v1549
      %1616 = vmatprep.subr.bf16.mxu0 %v1552
      %1617 = vmatpush1.bf16.msra.mxu0 %v1551
      %1618 = vmatprep.subr.bf16.mxu0 %v1554
      %1619 = vmatpush1.bf16.msra.mxu0 %v1553
      %1620 = vmatprep.subr.bf16.mxu0 %v1556
      %1621 = vmatpush1.bf16.msra.mxu0 %v1555
      %1622 = vmatprep.subr.bf16.mxu0 %v1558
      %1623 = vmatpush1.bf16.msra.mxu0 %v1557
      %1624 = vmatprep.subr.bf16.mxu0 %v1560
      %1625 = vmatpush1.bf16.msra.mxu0 %v1559
      %1626 = vmatprep.subr.bf16.mxu0 %v1562
      %1627 = vmatpush1.bf16.msra.mxu0 %v1561
      %1628 = vmatprep.subr.bf16.mxu0 %v1564
      %1629 = vmatpush1.bf16.msra.mxu0 %v1563
      %1630 = vmatprep.subr.bf16.mxu0 %v1566
      %1631 = vmatpush1.bf16.msra.mxu0 %v1565
      %1632 = vmatprep.subr.bf16.mxu0 %v1568
      %1633 = vmatpush1.bf16.msra.mxu0 %v1567
      %1634 = vmatprep.subr.bf16.mxu0 %v1606
      %1635 = vmatpush1.bf16.msra.mxu0 %v1603
      %1636 = vmatprep.subr.bf16.mxu0 0
      %1637 = vmatpush1.bf16.msra.mxu0 0
      %1638 = vmatprep.subr.bf16.mxu0 0
      %1639 = vmatpush1.bf16.msra.mxu0 0
      %1640 = vmatprep.mubr.bf16.mxu0 %v1599
      %1641 = vmatmul.mubr.bf16.gmra.mrb[0].mxu0 %v1459
      %v1642 = vpop.f32.mrb[0].mxu0
      %v1643 = vadd.f32 0.0, %v1642
      %v1644 = vpop.f32.mrb[0].mxu0
      %v1645 = vadd.f32 0.0, %v1644
      %v1646 = vpop.f32.mrb[0].mxu0
      %v1647 = vadd.f32 0.0, %v1646
      %v1648 = vpop.f32.mrb[0].mxu0
      %v1649 = vadd.f32 0.0, %v1648
      %1650 = vdwg.mxu0
      %1651 = vst [vmem:[%s232] sm:$0xff] %v1643
      %1652 = vst [vmem:[%s232 + $0x8] sm:$0xff] %v1645
      %1653 = vst [vmem:[%s232 + $0x10] sm:$0xff] %v1647
      %1654 = vst [vmem:[%s232 + $0x18] sm:$0xff] %v1649
      %v1655 = vld [vmem:[%s3] sm:$0xf]
      %v1656 = vld [vmem:[%s3 + $0x4] sm:$0xf]
      %v1659 = vunpack.c.l.b16 %v1655
      %v1660 = vunpack.c.l.b16 %v1656
      %v1661 = vpack.c.b16 %v1660, %v1659
      %v1662 = vunpack.c.l.b16 %v239
      %v1663 = vunpack.c.h.b16 %v239
      %v1664 = vunpack.c.l.b16 %v240
      %v1665 = vpack.c.b16 %v1662, %v1662
      %v1666 = vpack.c.b16 %v1663, %v1663
      %v1667 = vpack.c.b16 %v1664, %v1664
      %1668 = vrot.lane.b32.xlu0 %v1665, 55
      %v1669 = vpop.permute.xlu0 %1668
      %1670 = vrot.lane.b32.xlu0 %v1666, 55
      %v1671 = vpop.permute.xlu0 %1670
      %1672 = vrot.lane.b32.xlu0 %v1667, 55
      %v1673 = vpop.permute.xlu0 %1672
      %v1674 = vsel %vm890, %v1669, %v1671
      %v1675 = vsel %vm890, %v1671, %v1673
      %vm1676 = vcmask 64512
      %v1678 = vsel %vm1676, %v1661, 0
      %v1681 = vsel %vm1601, %v1674, 0
      %v1684 = vsel %vm1601, %v1675, 0
      %1686 = vmatprep.subr.bf16.mxu0 %v1684
      %1687 = vmatpush1.bf16.msra.mxu0 %v1681
      %1688 = vmatprep.subr.bf16.mxu0 0
      %1689 = vmatpush1.bf16.msra.mxu0 0
      %1690 = vmatprep.subr.bf16.mxu0 0
      %1691 = vmatpush1.bf16.msra.mxu0 0
      %1692 = vmatprep.subr.bf16.mxu0 0
      %1693 = vmatpush1.bf16.msra.mxu0 0
      %1694 = vmatprep.subr.bf16.mxu0 0
      %1695 = vmatpush1.bf16.msra.mxu0 0
      %1696 = vmatprep.subr.bf16.mxu0 0
      %1697 = vmatpush1.bf16.msra.mxu0 0
      %1698 = vmatprep.subr.bf16.mxu0 0
      %1699 = vmatpush1.bf16.msra.mxu0 0
      %1700 = vmatprep.subr.bf16.mxu0 0
      %1701 = vmatpush1.bf16.msra.mxu0 0
      %1702 = vmatprep.subr.bf16.mxu0 0
      %1703 = vmatpush1.bf16.msra.mxu0 0
      %1704 = vmatprep.subr.bf16.mxu0 0
      %1705 = vmatpush1.bf16.msra.mxu0 0
      %1706 = vmatprep.subr.bf16.mxu0 0
      %1707 = vmatpush1.bf16.msra.mxu0 0
      %1708 = vmatprep.subr.bf16.mxu0 0
      %1709 = vmatpush1.bf16.msra.mxu0 0
      %1710 = vmatprep.subr.bf16.mxu0 0
      %1711 = vmatpush1.bf16.msra.mxu0 0
      %1712 = vmatprep.subr.bf16.mxu0 0
      %1713 = vmatpush1.bf16.msra.mxu0 0
      %1714 = vmatprep.subr.bf16.mxu0 0
      %1715 = vmatpush1.bf16.msra.mxu0 0
      %1716 = vmatprep.subr.bf16.mxu0 0
      %1717 = vmatpush1.bf16.msra.mxu0 0
      %1718 = vmatprep.mubr.bf16.mxu0 0
      %1719 = vmatmul.mubr.bf16.gmra.mrb[0].mxu0 %v1678
      %v1720 = vpop.f32.mrb[0].mxu0
      %v1721 = vadd.f32 0.0, %v1720
      %v1722 = vpop.f32.mrb[0].mxu0
      %v1723 = vadd.f32 0.0, %v1722
      %v1724 = vpop.f32.mrb[0].mxu0
      %v1725 = vadd.f32 0.0, %v1724
      %v1726 = vpop.f32.mrb[0].mxu0
      %v1727 = vadd.f32 0.0, %v1726
      %1728 = vdwg.mxu0
      %1729 = vst [vmem:[%s237] sm:$0xff] %v1721
      %1730 = vst [vmem:[%s237 + $0x8] sm:$0xff] %v1723
      %1731 = vst [vmem:[%s237 + $0x10] sm:$0xff] %v1725
      %1732 = vst [vmem:[%s237 + $0x18] sm:$0xff] %v1727
      %p1733 = scmp.lt.s32.totalorder %s17, 1
      %s1734 = scalar_select %p1733, %s17, 1
      %s1735 = smul.addr %s1734, 4
      %s1736 = smul.addr %s1735, 8
      %s1737 = scalar_lea.vmem %s4, %s1736
      %p1738 = scmp.lt.s32.totalorder %s17, 1
      %s1739 = scalar_select %p1738, %s17, 1
      %s1740 = smul.addr %s1739, 4
      %s1741 = smul.addr %s1740, 8
      %s1742 = scalar_lea.vmem %s5, %s1741
      // Predicated region
      $region37: #{basic_block_forward.4} parent=35 // pred_check
        %p1743 = pneg %p124
      $region38: #{basic_block_forward.4} parent=35 // pred_check_branch
        %1745 = sbr.rel (%p1743) target = $region40
      $region39: #{basic_block_forward.4} parent=35 // pred_region
        _
      $region40: #{basic_block_forward.4} parent=35 // pred_fallthru
        _
      // Predicated region
      $region41: #{basic_block_forward.4} parent=35 // pred_check
        %p1746 = pneg %p150
      $region42: #{basic_block_forward.4} parent=35 // pred_check_branch
        %1748 = sbr.rel (%p1746) target = $region44
      $region43: #{basic_block_forward.4} parent=35 // pred_region
        _
      $region44: #{basic_block_forward.4} parent=35 // pred_fallthru
        _
    $region36: #{basic_block_forward.4} parent=5 // pred_fallthru
      _
    %p1749 = scmp.le.s32.totalorder 2, %s12
    // Predicated region
    $region45: #{basic_block_forward.4} parent=5 // pred_check
      %p1750 = pneg %p1749
    $region46: #{basic_block_forward.4} parent=5 // pred_check_branch
      %1752 = sbr.rel (%p1750) target = $region48
    $region47: #{basic_block_forward.4} parent=5 // pred_region
      %s1753 = ssub.s32 %s12, 2
      // Predicated region
      $region49: #{basic_block_forward.4} parent=47 // pred_check
        %p1754 = pneg %p130
      $region50: #{basic_block_forward.4} parent=47 // pred_check_branch
        %1756 = sbr.rel (%p1754) target = $region52
      $region51: #{basic_block_forward.4} parent=47 // pred_region
        %p1757 = scmp.lt.s32.totalorder %s18, 1
        %s1758 = scalar_select %p1757, %s18, 1
        %s1759 = smul.addr %s1758, 4
        %s1760 = smul.addr %s1759, 8
        %s1761 = scalar_lea.vmem %s4, %s1760
      $region52: #{basic_block_forward.4} parent=47 // pred_fallthru
        _
      // Predicated region
      $region53: #{basic_block_forward.4} parent=47 // pred_check
        %p1762 = pneg %p156
      $region54: #{basic_block_forward.4} parent=47 // pred_check_branch
        %1764 = sbr.rel (%p1762) target = $region56
      $region55: #{basic_block_forward.4} parent=47 // pred_region
        %p1765 = scmp.lt.s32.totalorder %s18, 1
        %s1766 = scalar_select %p1765, %s18, 1
        %s1767 = smul.addr %s1766, 4
        %s1768 = smul.addr %s1767, 8
        %s1769 = scalar_lea.vmem %s5, %s1768
      $region56: #{basic_block_forward.4} parent=47 // pred_fallthru
        _
    $region48: #{basic_block_forward.4} parent=5 // pred_fallthru
      _
  $region6: #{basic_block_forward.4} parent=0 // loop_footer
    %s16 = sadd.s32 1, %s12
  $region7: #{basic_block_forward.4} parent=0 // loop_footer_branch
    %11 = sbr.rel target = $region3
  $region8: #{basic_block_forward.4} parent=0 // loop_exit
    _

// kernel: basic_block_forward.6
$region0: #{basic_block_forward.6}
  #allocation0 [shape = 'u32[]', space=smem, size = 0x4, offset = 0x4, fixed_abs, tag = 'smem constant byte address 0x4 - core index']
  #allocation1 [shape = 'u32[144,128]{1,0:T(1,128)}', space=vmem, size = 0x12000, scoped, tag = 'internal scratch']
  #allocation2 [shape = 'bf16[432,256]{1,0:T(16,128)(2,1)}', space=vmem, size = 0x36000, scoped, tag = 'scratch operand']
  %s0 = inlined_call_operand.vmem [shape: bf16[2,16,402], index: 0, kind: input, shape index: {}]
  %s1 = inlined_call_operand.vmem [shape: bf16[27,256], index: 1, kind: input, shape index: {}]
  %s2 = inlined_call_operand.vmem [shape: bf16[16,432], index: 2, kind: input, shape index: {}]
  %s3 = inlined_call_operand.vmem [shape: f32[2,16,256], index: 3, kind: output, shape index: {}]
  %s4 = sld [smem:[#allocation0]]
  $region45: #{basic_block_forward.6} parent=0
    _
  %s6 = ssub.s32 1, %s4
  %s7 = scalar_select 0, %s6, %s4
  loop: start=0, step=1, limit=4
  $region2: #{basic_block_forward.6} parent=0 // loop_pre_header
    _
  $region3: #{basic_block_forward.6} parent=0 // loop_header
    %s9 = sphi 0, %s13
    %p10 = scmp.ge.s32.totalorder %s9, 4
    %s19 = sphi 0, %s21
    %s22 = sphi 0, %s19
    %s23 = sphi 0, %s22
    %s39 = sphi 0, %s23
    %s43 = sphi 0, %s43
    %s45 = sphi 0, %s43
    %s46 = sphi 0, %s45
    %s60 = sphi 0, %s46
    %s64 = sphi 0, %s64
    %s66 = sphi 0, %s64
    %s67 = sphi 0, %s66
    %s81 = sphi 0, %s67
    %s87 = sphi 0, %s89
    %s90 = sphi 0, %s87
    %s91 = sphi 0, %s90
    %s107 = sphi 0, %s91
  $region4: #{basic_block_forward.6} parent=0 // loop_header_branch
    %12 = sbr.rel (%p10) target = $region8
  $region5: #{basic_block_forward.6} parent=0 // loop_body
    %s14 = ssub.s32 %s9, 1
    %s15 = ssub.s32 %s9, 2
    %s16 = sadd.s32 %s9, 1
    %s17 = ssub.s32 %s9, %s16
    %p18 = scmp.eq.s32.totalorder %s17, 0
    %s20 = sadd.s32 %s19, 1
    %s21 = scalar_select %p18, %s19, %s20
    %p24 = pneg %p18
    %p25 = scmp.eq.s32.totalorder %s9, 1
    %p26 = por %p24, %p25
    %p27 = scmp.ne.s32.totalorder %s19, %s22
    %p28 = scmp.eq.s32.totalorder %s9, 0
    %p29 = por %p27, %p28
    %p30 = scmp.ne.s32.totalorder %s19, %s22
    %p31 = scmp.eq.s32.totalorder %s14, 1
    %p32 = por %p30, %p31
    %p33 = scmp.ne.s32.totalorder %s22, %s23
    %p34 = scmp.eq.s32.totalorder %s14, 0
    %p35 = por %p33, %p34
    %p36 = scmp.ne.s32.totalorder %s22, %s23
    %p37 = scmp.eq.s32.totalorder %s15, 1
    %p38 = por %p36, %p37
    %p40 = scmp.ne.s32.totalorder %s23, %s39
    %p41 = scmp.eq.s32.totalorder %s15, 0
    %p42 = por %p40, %p41
    %s44 = sadd.s32 %s43, 1
    %p47 = scmp.eq.s32.totalorder %s9, 1
    %p48 = scmp.ne.s32.totalorder %s43, %s45
    %p49 = scmp.eq.s32.totalorder %s9, 0
    %p50 = por %p48, %p49
    %p51 = scmp.ne.s32.totalorder %s43, %s45
    %p52 = scmp.eq.s32.totalorder %s14, 1
    %p53 = por %p51, %p52
    %p54 = scmp.ne.s32.totalorder %s45, %s46
    %p55 = scmp.eq.s32.totalorder %s14, 0
    %p56 = por %p54, %p55
    %p57 = scmp.ne.s32.totalorder %s45, %s46
    %p58 = scmp.eq.s32.totalorder %s15, 1
    %p59 = por %p57, %p58
    %p61 = scmp.ne.s32.totalorder %s46, %s60
    %p62 = scmp.eq.s32.totalorder %s15, 0
    %p63 = por %p61, %p62
    %s65 = sadd.s32 %s64, 1
    %p68 = scmp.eq.s32.totalorder %s9, 1
    %p69 = scmp.ne.s32.totalorder %s64, %s66
    %p70 = scmp.eq.s32.totalorder %s9, 0
    %p71 = por %p69, %p70
    %p72 = scmp.ne.s32.totalorder %s64, %s66
    %p73 = scmp.eq.s32.totalorder %s14, 1
    %p74 = por %p72, %p73
    %p75 = scmp.ne.s32.totalorder %s66, %s67
    %p76 = scmp.eq.s32.totalorder %s14, 0
    %p77 = por %p75, %p76
    %p78 = scmp.ne.s32.totalorder %s66, %s67
    %p79 = scmp.eq.s32.totalorder %s15, 1
    %p80 = por %p78, %p79
    %p82 = scmp.ne.s32.totalorder %s67, %s81
    %p83 = scmp.eq.s32.totalorder %s15, 0
    %p84 = por %p82, %p83
    %s85 = ssub.s32 %s9, %s16
    %p86 = scmp.eq.s32.totalorder %s85, 0
    %s88 = sadd.s32 %s87, 1
    %s89 = scalar_select %p86, %s87, %s88
    %p92 = pneg %p86
    %p93 = scmp.eq.s32.totalorder %s9, 1
    %p94 = por %p92, %p93
    %p95 = scmp.ne.s32.totalorder %s87, %s90
    %p96 = scmp.eq.s32.totalorder %s9, 0
    %p97 = por %p95, %p96
    %p98 = scmp.ne.s32.totalorder %s87, %s90
    %p99 = scmp.eq.s32.totalorder %s14, 1
    %p100 = por %p98, %p99
    %p101 = scmp.ne.s32.totalorder %s90, %s91
    %p102 = scmp.eq.s32.totalorder %s14, 0
    %p103 = por %p101, %p102
    %p104 = scmp.ne.s32.totalorder %s90, %s91
    %p105 = scmp.eq.s32.totalorder %s15, 1
    %p106 = por %p104, %p105
    %p108 = scmp.ne.s32.totalorder %s91, %s107
    %p109 = scmp.eq.s32.totalorder %s15, 0
    %p110 = por %p108, %p109
    %p111 = scmp.le.s32.totalorder 1, %s9
    %p112 = scmp.lt.s32.totalorder %s9, 3
    %p113 = pnand %p111, %p112
    %p114 = pneg %p113
    // Predicated region
    $region9: #{basic_block_forward.6} parent=5 // pred_check
      _
    $region10: #{basic_block_forward.6} parent=5 // pred_check_branch
      %116 = sbr.rel (%p113) target = $region12
    $region11: #{basic_block_forward.6} parent=5 // pred_region
      %s117 = ssub.s32 %s9, 1
      // Predicated region
      $region13: #{basic_block_forward.6} parent=11 // pred_check
        %p118 = pneg %p56
      $region14: #{basic_block_forward.6} parent=11 // pred_check_branch
        %120 = sbr.rel (%p118) target = $region16
      $region15: #{basic_block_forward.6} parent=11 // pred_region
        _
      $region16: #{basic_block_forward.6} parent=11 // pred_fallthru
        _
      // Predicated region
      $region17: #{basic_block_forward.6} parent=11 // pred_check
        %p121 = pneg %p77
      $region18: #{basic_block_forward.6} parent=11 // pred_check_branch
        %123 = sbr.rel (%p121) target = $region20
      $region19: #{basic_block_forward.6} parent=11 // pred_region
        _
      $region20: #{basic_block_forward.6} parent=11 // pred_fallthru
        _
    $region12: #{basic_block_forward.6} parent=5 // pred_fallthru
      _
    %p124 = scmp.lt.s32.totalorder %s9, 2
    // Predicated region
    $region21: #{basic_block_forward.6} parent=5 // pred_check
      %p125 = pneg %p124
    $region22: #{basic_block_forward.6} parent=5 // pred_check_branch
      %127 = sbr.rel (%p125) target = $region24
    $region23: #{basic_block_forward.6} parent=5 // pred_region
      // Predicated region
      $region25: #{basic_block_forward.6} parent=23 // pred_check
        %p128 = pneg %p29
      $region26: #{basic_block_forward.6} parent=23 // pred_check_branch
        %130 = sbr.rel (%p128) target = $region28
      $region27: #{basic_block_forward.6} parent=23 // pred_region
        %p131 = scmp.lt.s32.totalorder %s9, 1
        %s132 = scalar_select %p131, %s9, 1
        %s133 = smul.addr %s132, 8
        %s134 = smul.addr %s133, 4
        %s135 = scalar_lea.vmem %s0, %s134
      $region28: #{basic_block_forward.6} parent=23 // pred_fallthru
        _
    $region24: #{basic_block_forward.6} parent=5 // pred_fallthru
      _
    %p136 = scmp.le.s32.totalorder 1, %s9
    %p137 = scmp.lt.s32.totalorder %s9, 3
    %p138 = pnand %p136, %p137
    %p139 = pneg %p138
    // Predicated region
    $region29: #{basic_block_forward.6} parent=5 // pred_check
      _
    $region30: #{basic_block_forward.6} parent=5 // pred_check_branch
      %141 = sbr.rel (%p138) target = $region32
    $region31: #{basic_block_forward.6} parent=5 // pred_region
      %s142 = ssub.s32 %s9, 1
      %p143 = scmp.lt.s32.totalorder %s14, 1
      %s144 = scalar_select %p143, %s14, 1
      %s145 = smul.addr %s144, 8
      %s146 = smul.addr %s145, 4
      %s147 = scalar_lea.vmem %s0, %s146
      %p148 = pneg %p35
      %p149 = pneg %p32
      %p150 = pneg %p56
      %p151 = pneg %p53
      %p152 = pneg %p77
      %p153 = pneg %p74
      %p154 = pneg %p103
      %p155 = pneg %p100
      %p156 = scmp.lt.s32.totalorder %s14, 1
      %s157 = scalar_select %p156, %s14, 1
      %s158 = smul.addr %s157, 4
      %s159 = smul.addr %s158, 8
      %s160 = scalar_lea.vmem %s3, %s159
      %p161 = scmp.lt.s32.totalorder %s14, 1
      %s162 = scalar_select %p161, %s14, 1
      %s163 = smul.addr %s162, 8
      %s164 = smul.addr %s163, 4
      %s165 = scalar_lea.vmem %s0, %s164
      %p166 = scmp.lt.s32.totalorder %s14, 1
      %s167 = scalar_select %p166, %s14, 1
      %s168 = smul.addr %s167, 4
      %s169 = smul.addr %s168, 8
      %s170 = scalar_lea.vmem %s3, %s169
      %v172 = vld [vmem:[%s165] sm:$0xff]
      %v173 = vld [vmem:[%s165 + $0x8] sm:$0xff]
      %v174 = vld [vmem:[%s165 + $0x10] sm:$0xff]
      %v175 = vld [vmem:[%s165 + $0x18] sm:$0xff]
      %v176 = vld [vmem:[%s1] sm:$0x11]
      %v178 = vunpack.c.l.b16 %v176
      %v179 = vunpack.c.h.b16 %v176
      %v180 = vpack.c.b16 %v178, %v178
      %v181 = vpack.c.b16 %v179, %v179
      %v183 = vpack.i.b16 %v180, %v180
      %v185 = vlaneseq
      %v186 = vshrl.u32 %v185, 7
      %v187 = vsub.s32 0, %v186
      %v188 = vrot.slane %v183, %v187
      %v190 = vpack.i.b16 %v181, %v181
      %v192 = vlaneseq
      %v193 = vshrl.u32 %v192, 7
      %v194 = vsub.s32 0, %v193
      %v195 = vrot.slane %v190, %v194
      %v198 = vunpack.c.l.b16 %v188
      %v199 = vunpack.c.l.b16 %v195
      %v200 = vpack.c.b16 %v199, %v198
      %v202 = vmul.bf16 %v172, %v200
      %v203 = vmul.bf16 %v174, %v200
      %v206 = vunpack.c.l.b16 %v202
      %v207 = vunpack.c.h.b16 %v202
      %v208 = vunpack.c.l.b16 %v203
      %v209 = vunpack.c.h.b16 %v203
      %v210 = vpack.c.b16 %v208, %v206
      %v211 = vpack.c.b16 %v209, %v207
      %214 = vst [vmem:[#allocation2] sm:$0xff] %v210
      %215 = vst [vmem:[#allocation2 + $0x8] sm:$0xff] %v211
      %v216 = vld [vmem:[%s1] sm:$0x11]
      %v218 = vunpack.c.l.b16 %v216
      %v219 = vunpack.c.h.b16 %v216
      %v220 = vpack.c.b16 %v218, %v218
      %v221 = vpack.c.b16 %v219, %v219
      %v223 = vshrl.u32 %v220, 16
      %v224 = vpack.i.b16 %v223, %v223
      %v226 = vlaneseq
      %v227 = vshrl.u32 %v226, 7
      %v228 = vsub.s32 0, %v227
      %v229 = vrot.slane %v224, %v228
      %v231 = vshrl.u32 %v221, 16
      %v232 = vpack.i.b16 %v231, %v231
      %v234 = vlaneseq
      %v235 = vshrl.u32 %v234, 7
      %v236 = vsub.s32 0, %v235
      %v237 = vrot.slane %v232, %v236
      %v240 = vunpack.c.l.b16 %v229
      %v241 = vunpack.c.l.b16 %v237
      %v242 = vpack.c.b16 %v241, %v240
      %243 = vrot.lane.b32.xlu0 %v242, 1
      %v244 = vpop.permute.xlu0 %243
      %v245 = vrot.slane %v244, 4
      %vm246 = vcmask 7168
      %v247 = vsel %vm246, %v245, %v244
      %v250 = vmul.bf16 %v172, %v247
      %v251 = vmul.bf16 %v173, %v245
      %v252 = vmul.bf16 %v174, %v247
      %v253 = vmul.bf16 %v175, %v245
      %v258 = vunpack.c.l.b16 %v250
      %v259 = vunpack.c.h.b16 %v250
      %v260 = vunpack.c.l.b16 %v251
      %v261 = vunpack.c.l.b16 %v252
      %v262 = vunpack.c.h.b16 %v252
      %v263 = vunpack.c.l.b16 %v253
      %v264 = vpack.c.b16 %v261, %v258
      %v265 = vpack.c.b16 %v262, %v259
      %v266 = vpack.c.b16 %v263, %v260
      %267 = vrot.lane.b32.xlu0 %v264, 127
      %v268 = vpop.permute.xlu0 %267
      %269 = vrot.lane.b32.xlu0 %v265, 127
      %v270 = vpop.permute.xlu0 %269
      %271 = vrot.lane.b32.xlu0 %v266, 127
      %v272 = vpop.permute.xlu0 %271
      %vm273 = vcmask 1039360
      %v274 = vsel %vm273, %v268, %v270
      %v275 = vsel %vm273, %v270, %v272
      %278 = vst [vmem:[#allocation2 + $0x10] sm:$0xff] %v274
      %279 = vst [vmem:[#allocation2 + $0x18] sm:$0xff] %v275
      %v280 = vld [vmem:[%s1] sm:$0x22]
      %v282 = vunpack.c.l.b16 %v280
      %v283 = vunpack.c.h.b16 %v280
      %v284 = vpack.c.b16 %v282, %v282
      %v285 = vpack.c.b16 %v283, %v283
      %v287 = vpack.i.b16 %v284, %v284
      %v289 = vlaneseq
      %v290 = vshrl.u32 %v289, 7
      %v291 = vsub.s32 1, %v290
      %v292 = vrot.slane %v287, %v291
      %v294 = vpack.i.b16 %v285, %v285
      %v296 = vlaneseq
      %v297 = vshrl.u32 %v296, 7
      %v298 = vsub.s32 1, %v297
      %v299 = vrot.slane %v294, %v298
      %v302 = vunpack.c.l.b16 %v292
      %v303 = vunpack.c.l.b16 %v299
      %v304 = vpack.c.b16 %v303, %v302
      %305 = vrot.lane.b32.xlu0 %v304, 2
      %v306 = vpop.permute.xlu0 %305
      %v307 = vrot.slane %v306, 4
      %vm308 = vcmask 15360
      %v309 = vsel %vm308, %v307, %v306
      %v312 = vmul.bf16 %v172, %v309
      %v313 = vmul.bf16 %v173, %v307
      %v314 = vmul.bf16 %v174, %v309
      %v315 = vmul.bf16 %v175, %v307
      %v320 = vunpack.c.l.b16 %v312
      %v321 = vunpack.c.h.b16 %v312
      %v322 = vunpack.c.l.b16 %v313
      %v323 = vunpack.c.l.b16 %v314
      %v324 = vunpack.c.h.b16 %v314
      %v325 = vunpack.c.l.b16 %v315
      %v326 = vpack.c.b16 %v323, %v320
      %v327 = vpack.c.b16 %v324, %v321
      %v328 = vpack.c.b16 %v325, %v322
      %329 = vrot.lane.b32.xlu0 %v326, 126
      %v330 = vpop.permute.xlu0 %329
      %331 = vrot.lane.b32.xlu0 %v327, 126
      %v332 = vpop.permute.xlu0 %331
      %333 = vrot.lane.b32.xlu0 %v328, 126
      %v334 = vpop.permute.xlu0 %333
      %vm335 = vcmask 1031168
      %v336 = vsel %vm335, %v330, %v332
      %v337 = vsel %vm335, %v332, %v334
      %340 = vst [vmem:[#allocation2 + $0x20] sm:$0xff] %v336
      %341 = vst [vmem:[#allocation2 + $0x28] sm:$0xff] %v337
      %v342 = vld [vmem:[%s1] sm:$0x22]
      %v344 = vunpack.c.l.b16 %v342
      %v345 = vunpack.c.h.b16 %v342
      %v346 = vpack.c.b16 %v344, %v344
      %v347 = vpack.c.b16 %v345, %v345
      %v349 = vshrl.u32 %v346, 16
      %v350 = vpack.i.b16 %v349, %v349
      %v352 = vlaneseq
      %v353 = vshrl.u32 %v352, 7
      %v354 = vsub.s32 1, %v353
      %v355 = vrot.slane %v350, %v354
      %v357 = vshrl.u32 %v347, 16
      %v358 = vpack.i.b16 %v357, %v357
      %v360 = vlaneseq
      %v361 = vshrl.u32 %v360, 7
      %v362 = vsub.s32 1, %v361
      %v363 = vrot.slane %v358, %v362
      %v366 = vunpack.c.l.b16 %v355
      %v367 = vunpack.c.l.b16 %v363
      %v368 = vpack.c.b16 %v367, %v366
      %369 = vrot.lane.b32.xlu0 %v368, 8
      %v370 = vpop.permute.xlu0 %369
      %v371 = vrot.slane %v370, 4
      %vm372 = vcmask 64512
      %v373 = vsel %vm372, %v371, %v370
      %v376 = vmul.bf16 %v172, %v373
      %v377 = vmul.bf16 %v173, %v371
      %v378 = vmul.bf16 %v174, %v373
      %v379 = vmul.bf16 %v175, %v371
      %v384 = vunpack.c.l.b16 %v376
      %v385 = vunpack.c.h.b16 %v376
      %v386 = vunpack.c.l.b16 %v377
      %v387 = vunpack.c.l.b16 %v378
      %v388 = vunpack.c.h.b16 %v378
      %v389 = vunpack.c.l.b16 %v379
      %v390 = vpack.c.b16 %v387, %v384
      %v391 = vpack.c.b16 %v388, %v385
      %v392 = vpack.c.b16 %v389, %v386
      %393 = vrot.lane.b32.xlu0 %v390, 120
      %v394 = vpop.permute.xlu0 %393
      %395 = vrot.lane.b32.xlu0 %v391, 120
      %v396 = vpop.permute.xlu0 %395
      %397 = vrot.lane.b32.xlu0 %v392, 120
      %v398 = vpop.permute.xlu0 %397
      %vm399 = vcmask 982016
      %v400 = vsel %vm399, %v394, %v396
      %v401 = vsel %vm399, %v396, %v398
      %404 = vst [vmem:[#allocation2 + $0x30] sm:$0xff] %v400
      %405 = vst [vmem:[#allocation2 + $0x38] sm:$0xff] %v401
      %v406 = vld [vmem:[%s1] sm:$0x44]
      %v408 = vunpack.c.l.b16 %v406
      %v409 = vunpack.c.h.b16 %v406
      %v410 = vpack.c.b16 %v408, %v408
      %v411 = vpack.c.b16 %v409, %v409
      %v413 = vpack.i.b16 %v410, %v410
      %v415 = vlaneseq
      %v416 = vshrl.u32 %v415, 7
      %v417 = vsub.s32 2, %v416
      %v418 = vrot.slane %v413, %v417
      %v420 = vpack.i.b16 %v411, %v411
      %v422 = vlaneseq
      %v423 = vshrl.u32 %v422, 7
      %v424 = vsub.s32 2, %v423
      %v425 = vrot.slane %v420, %v424
      %v428 = vunpack.c.l.b16 %v418
      %v429 = vunpack.c.l.b16 %v425
      %v430 = vpack.c.b16 %v429, %v428
      %431 = vrot.lane.b32.xlu0 %v430, 9
      %v432 = vpop.permute.xlu0 %431
      %v433 = vrot.slane %v432, 4
      %vm434 = vcmask 72704
      %v435 = vsel %vm434, %v433, %v432
      %v438 = vmul.bf16 %v172, %v435
      %v439 = vmul.bf16 %v173, %v433
      %v440 = vmul.bf16 %v174, %v435
      %v441 = vmul.bf16 %v175, %v433
      %v446 = vunpack.c.l.b16 %v438
      %v447 = vunpack.c.h.b16 %v438
      %v448 = vunpack.c.l.b16 %v439
      %v449 = vunpack.c.l.b16 %v440
      %v450 = vunpack.c.h.b16 %v440
      %v451 = vunpack.c.l.b16 %v441
      %v452 = vpack.c.b16 %v449, %v446
      %v453 = vpack.c.b16 %v450, %v447
      %v454 = vpack.c.b16 %v451, %v448
      %455 = vrot.lane.b32.xlu0 %v452, 119
      %v456 = vpop.permute.xlu0 %455
      %457 = vrot.lane.b32.xlu0 %v453, 119
      %v458 = vpop.permute.xlu0 %457
      %459 = vrot.lane.b32.xlu0 %v454, 119
      %v460 = vpop.permute.xlu0 %459
      %vm461 = vcmask 973824
      %v462 = vsel %vm461, %v456, %v458
      %v463 = vsel %vm461, %v458, %v460
      %466 = vst [vmem:[#allocation2 + $0x40] sm:$0xff] %v462
      %467 = vst [vmem:[#allocation2 + $0x48] sm:$0xff] %v463
      %v468 = vld [vmem:[%s1] sm:$0x44]
      %v470 = vunpack.c.l.b16 %v468
      %v471 = vunpack.c.h.b16 %v468
      %v472 = vpack.c.b16 %v470, %v470
      %v473 = vpack.c.b16 %v471, %v471
      %v475 = vshrl.u32 %v472, 16
      %v476 = vpack.i.b16 %v475, %v475
      %v478 = vlaneseq
      %v479 = vshrl.u32 %v478, 7
      %v480 = vsub.s32 2, %v479
      %v481 = vrot.slane %v476, %v480
      %v483 = vshrl.u32 %v473, 16
      %v484 = vpack.i.b16 %v483, %v483
      %v486 = vlaneseq
      %v487 = vshrl.u32 %v486, 7
      %v488 = vsub.s32 2, %v487
      %v489 = vrot.slane %v484, %v488
      %v492 = vunpack.c.l.b16 %v481
      %v493 = vunpack.c.l.b16 %v489
      %v494 = vpack.c.b16 %v493, %v492
      %495 = vrot.lane.b32.xlu0 %v494, 10
      %v496 = vpop.permute.xlu0 %495
      %v497 = vrot.slane %v496, 4
      %vm498 = vcmask 80896
      %v499 = vsel %vm498, %v497, %v496
      %v502 = vmul.bf16 %v172, %v499
      %v503 = vmul.bf16 %v173, %v497
      %v504 = vmul.bf16 %v174, %v499
      %v505 = vmul.bf16 %v175, %v497
      %v510 = vunpack.c.l.b16 %v502
      %v511 = vunpack.c.h.b16 %v502
      %v512 = vunpack.c.l.b16 %v503
      %v513 = vunpack.c.l.b16 %v504
      %v514 = vunpack.c.h.b16 %v504
      %v515 = vunpack.c.l.b16 %v505
      %v516 = vpack.c.b16 %v513, %v510
      %v517 = vpack.c.b16 %v514, %v511
      %v518 = vpack.c.b16 %v515, %v512
      %519 = vrot.lane.b32.xlu0 %v516, 118
      %v520 = vpop.permute.xlu0 %519
      %521 = vrot.lane.b32.xlu0 %v517, 118
      %v522 = vpop.permute.xlu0 %521
      %523 = vrot.lane.b32.xlu0 %v518, 118
      %v524 = vpop.permute.xlu0 %523
      %vm525 = vcmask 965632
      %v526 = vsel %vm525, %v520, %v522
      %v527 = vsel %vm525, %v522, %v524
      %530 = vst [vmem:[#allocation2 + $0x50] sm:$0xff] %v526
      %531 = vst [vmem:[#allocation2 + $0x58] sm:$0xff] %v527
      %v532 = vld [vmem:[%s1] sm:$0x88]
      %v534 = vunpack.c.l.b16 %v532
      %v535 = vunpack.c.h.b16 %v532
      %v536 = vpack.c.b16 %v534, %v534
      %v537 = vpack.c.b16 %v535, %v535
      %v539 = vpack.i.b16 %v536, %v536
      %v541 = vlaneseq
      %v542 = vshrl.u32 %v541, 7
      %v543 = vsub.s32 3, %v542
      %v544 = vrot.slane %v539, %v543
      %v546 = vpack.i.b16 %v537, %v537
      %v548 = vlaneseq
      %v549 = vshrl.u32 %v548, 7
      %v550 = vsub.s32 3, %v549
      %v551 = vrot.slane %v546, %v550
      %v554 = vunpack.c.l.b16 %v544
      %v555 = vunpack.c.l.b16 %v551
      %v556 = vpack.c.b16 %v555, %v554
      %557 = vrot.lane.b32.xlu0 %v556, 16
      %v558 = vpop.permute.xlu0 %557
      %v559 = vrot.slane %v558, 4
      %vm560 = vcmask 130048
      %v561 = vsel %vm560, %v559, %v558
      %v564 = vmul.bf16 %v172, %v561
      %v565 = vmul.bf16 %v173, %v559
      %v566 = vmul.bf16 %v174, %v561
      %v567 = vmul.bf16 %v175, %v559
      %v572 = vunpack.c.l.b16 %v564
      %v573 = vunpack.c.h.b16 %v564
      %v574 = vunpack.c.l.b16 %v565
      %v575 = vunpack.c.l.b16 %v566
      %v576 = vunpack.c.h.b16 %v566
      %v577 = vunpack.c.l.b16 %v567
      %v578 = vpack.c.b16 %v575, %v572
      %v579 = vpack.c.b16 %v576, %v573
      %v580 = vpack.c.b16 %v577, %v574
      %581 = vrot.lane.b32.xlu0 %v578, 112
      %v582 = vpop.permute.xlu0 %581
      %583 = vrot.lane.b32.xlu0 %v579, 112
      %v584 = vpop.permute.xlu0 %583
      %585 = vrot.lane.b32.xlu0 %v580, 112
      %v586 = vpop.permute.xlu0 %585
      %vm587 = vcmask 916480
      %v588 = vsel %vm587, %v582, %v584
      %v589 = vsel %vm587, %v584, %v586
      %592 = vst [vmem:[#allocation2 + $0x60] sm:$0xff] %v588
      %593 = vst [vmem:[#allocation2 + $0x68] sm:$0xff] %v589
      %v594 = vld [vmem:[%s1] sm:$0x88]
      %v596 = vunpack.c.l.b16 %v594
      %v597 = vunpack.c.h.b16 %v594
      %v598 = vpack.c.b16 %v596, %v596
      %v599 = vpack.c.b16 %v597, %v597
      %v601 = vshrl.u32 %v598, 16
      %v602 = vpack.i.b16 %v601, %v601
      %v604 = vlaneseq
      %v605 = vshrl.u32 %v604, 7
      %v606 = vsub.s32 3, %v605
      %v607 = vrot.slane %v602, %v606
      %v609 = vshrl.u32 %v599, 16
      %v610 = vpack.i.b16 %v609, %v609
      %v612 = vlaneseq
      %v613 = vshrl.u32 %v612, 7
      %v614 = vsub.s32 3, %v613
      %v615 = vrot.slane %v610, %v614
      %v618 = vunpack.c.l.b16 %v607
      %v619 = vunpack.c.l.b16 %v615
      %v620 = vpack.c.b16 %v619, %v618
      %621 = vrot.lane.b32.xlu0 %v620, 17
      %v622 = vpop.permute.xlu0 %621
      %v623 = vrot.slane %v622, 4
      %vm624 = vcmask 138240
      %v625 = vsel %vm624, %v623, %v622
      %v628 = vmul.bf16 %v172, %v625
      %v629 = vmul.bf16 %v173, %v623
      %v630 = vmul.bf16 %v174, %v625
      %v631 = vmul.bf16 %v175, %v623
      %v636 = vunpack.c.l.b16 %v628
      %v637 = vunpack.c.h.b16 %v628
      %v638 = vunpack.c.l.b16 %v629
      %v639 = vunpack.c.l.b16 %v630
      %v640 = vunpack.c.h.b16 %v630
      %v641 = vunpack.c.l.b16 %v631
      %v642 = vpack.c.b16 %v639, %v636
      %v643 = vpack.c.b16 %v640, %v637
      %v644 = vpack.c.b16 %v641, %v638
      %645 = vrot.lane.b32.xlu0 %v642, 111
      %v646 = vpop.permute.xlu0 %645
      %647 = vrot.lane.b32.xlu0 %v643, 111
      %v648 = vpop.permute.xlu0 %647
      %649 = vrot.lane.b32.xlu0 %v644, 111
      %v650 = vpop.permute.xlu0 %649
      %vm651 = vcmask 908288
      %v652 = vsel %vm651, %v646, %v648
      %v653 = vsel %vm651, %v648, %v650
      %656 = vst [vmem:[#allocation2 + $0x70] sm:$0xff] %v652
      %657 = vst [vmem:[#allocation2 + $0x78] sm:$0xff] %v653
      %v658 = vld [vmem:[%s1 + $0x8] sm:$0x11]
      %v660 = vunpack.c.l.b16 %v658
      %v661 = vunpack.c.h.b16 %v658
      %v662 = vpack.c.b16 %v660, %v660
      %v663 = vpack.c.b16 %v661, %v661
      %v665 = vpack.i.b16 %v662, %v662
      %v667 = vlaneseq
      %v668 = vshrl.u32 %v667, 7
      %v669 = vsub.s32 0, %v668
      %v670 = vrot.slane %v665, %v669
      %v672 = vpack.i.b16 %v663, %v663
      %v674 = vlaneseq
      %v675 = vshrl.u32 %v674, 7
      %v676 = vsub.s32 0, %v675
      %v677 = vrot.slane %v672, %v676
      %v680 = vunpack.c.l.b16 %v670
      %v681 = vunpack.c.l.b16 %v677
      %v682 = vpack.c.b16 %v681, %v680
      %683 = vrot.lane.b32.xlu0 %v682, 18
      %v684 = vpop.permute.xlu0 %683
      %v685 = vrot.slane %v684, 4
      %vm686 = vcmask 146432
      %v687 = vsel %vm686, %v685, %v684
      %v690 = vmul.bf16 %v172, %v687
      %v691 = vmul.bf16 %v173, %v685
      %v692 = vmul.bf16 %v174, %v687
      %v693 = vmul.bf16 %v175, %v685
      %v698 = vunpack.c.l.b16 %v690
      %v699 = vunpack.c.h.b16 %v690
      %v700 = vunpack.c.l.b16 %v691
      %v701 = vunpack.c.l.b16 %v692
      %v702 = vunpack.c.h.b16 %v692
      %v703 = vunpack.c.l.b16 %v693
      %v704 = vpack.c.b16 %v701, %v698
      %v705 = vpack.c.b16 %v702, %v699
      %v706 = vpack.c.b16 %v703, %v700
      %707 = vrot.lane.b32.xlu0 %v704, 110
      %v708 = vpop.permute.xlu0 %707
      %709 = vrot.lane.b32.xlu0 %v705, 110
      %v710 = vpop.permute.xlu0 %709
      %711 = vrot.lane.b32.xlu0 %v706, 110
      %v712 = vpop.permute.xlu0 %711
      %vm713 = vcmask 900096
      %v714 = vsel %vm713, %v708, %v710
      %v715 = vsel %vm713, %v710, %v712
      %718 = vst [vmem:[#allocation2 + $0x80] sm:$0xff] %v714
      %719 = vst [vmem:[#allocation2 + $0x88] sm:$0xff] %v715
      %v720 = vld [vmem:[%s1 + $0x8] sm:$0x11]
      %v722 = vunpack.c.l.b16 %v720
      %v723 = vunpack.c.h.b16 %v720
      %v724 = vpack.c.b16 %v722, %v722
      %v725 = vpack.c.b16 %v723, %v723
      %v727 = vshrl.u32 %v724, 16
      %v728 = vpack.i.b16 %v727, %v727
      %v730 = vlaneseq
      %v731 = vshrl.u32 %v730, 7
      %v732 = vsub.s32 0, %v731
      %v733 = vrot.slane %v728, %v732
      %v735 = vshrl.u32 %v725, 16
      %v736 = vpack.i.b16 %v735, %v735
      %v738 = vlaneseq
      %v739 = vshrl.u32 %v738, 7
      %v740 = vsub.s32 0, %v739
      %v741 = vrot.slane %v736, %v740
      %v744 = vunpack.c.l.b16 %v733
      %v745 = vunpack.c.l.b16 %v741
      %v746 = vpack.c.b16 %v745, %v744
      %747 = vrot.lane.b32.xlu0 %v746, 64
      %v748 = vpop.permute.xlu0 %747
      %v749 = vrot.slane %v748, 4
      %vm750 = vcmask 523264
      %v751 = vsel %vm750, %v749, %v748
      %v754 = vmul.bf16 %v172, %v751
      %v755 = vmul.bf16 %v173, %v749
      %v756 = vmul.bf16 %v174, %v751
      %v757 = vmul.bf16 %v175, %v749
      %v762 = vunpack.c.l.b16 %v754
      %v763 = vunpack.c.h.b16 %v754
      %v764 = vunpack.c.l.b16 %v755
      %v765 = vunpack.c.l.b16 %v756
      %v766 = vunpack.c.h.b16 %v756
      %v767 = vunpack.c.l.b16 %v757
      %v768 = vpack.c.b16 %v765, %v762
      %v769 = vpack.c.b16 %v766, %v763
      %v770 = vpack.c.b16 %v767, %v764
      %771 = vrot.lane.b32.xlu0 %v768, 64
      %v772 = vpop.permute.xlu0 %771
      %773 = vrot.lane.b32.xlu0 %v769, 64
      %v774 = vpop.permute.xlu0 %773
      %775 = vrot.lane.b32.xlu0 %v770, 64
      %v776 = vpop.permute.xlu0 %775
      %v777 = vsel %vm750, %v772, %v774
      %v778 = vsel %vm750, %v774, %v776
      %781 = vst [vmem:[#allocation2 + $0x90] sm:$0xff] %v777
      %782 = vst [vmem:[#allocation2 + $0x98] sm:$0xff] %v778
      %v783 = vld [vmem:[%s1 + $0x8] sm:$0x22]
      %v785 = vunpack.c.l.b16 %v783
      %v786 = vunpack.c.h.b16 %v783
      %v787 = vpack.c.b16 %v785, %v785
      %v788 = vpack.c.b16 %v786, %v786
      %v790 = vpack.i.b16 %v787, %v787
      %v792 = vlaneseq
      %v793 = vshrl.u32 %v792, 7
      %v794 = vsub.s32 1, %v793
      %v795 = vrot.slane %v790, %v794
      %v797 = vpack.i.b16 %v788, %v788
      %v799 = vlaneseq
      %v800 = vshrl.u32 %v799, 7
      %v801 = vsub.s32 1, %v800
      %v802 = vrot.slane %v797, %v801
      %v805 = vunpack.c.l.b16 %v795
      %v806 = vunpack.c.l.b16 %v802
      %v807 = vpack.c.b16 %v806, %v805
      %808 = vrot.lane.b32.xlu0 %v807, 65
      %v809 = vpop.permute.xlu0 %808
      %v810 = vrot.slane %v809, 4
      %vm811 = vcmask 531456
      %v812 = vsel %vm811, %v810, %v809
      %v815 = vmul.bf16 %v172, %v812
      %v816 = vmul.bf16 %v173, %v810
      %v817 = vmul.bf16 %v174, %v812
      %v818 = vmul.bf16 %v175, %v810
      %v823 = vunpack.c.l.b16 %v815
      %v824 = vunpack.c.h.b16 %v815
      %v825 = vunpack.c.l.b16 %v816
      %v826 = vunpack.c.l.b16 %v817
      %v827 = vunpack.c.h.b16 %v817
      %v828 = vunpack.c.l.b16 %v818
      %v829 = vpack.c.b16 %v826, %v823
      %v830 = vpack.c.b16 %v827, %v824
      %v831 = vpack.c.b16 %v828, %v825
      %832 = vrot.lane.b32.xlu0 %v829, 63
      %v833 = vpop.permute.xlu0 %832
      %834 = vrot.lane.b32.xlu0 %v830, 63
      %v835 = vpop.permute.xlu0 %834
      %836 = vrot.lane.b32.xlu0 %v831, 63
      %v837 = vpop.permute.xlu0 %836
      %vm838 = vcmask 515072
      %v839 = vsel %vm838, %v833, %v835
      %v840 = vsel %vm838, %v835, %v837
      %843 = vst [vmem:[#allocation2 + $0xa0] sm:$0xff] %v839
      %844 = vst [vmem:[#allocation2 + $0xa8] sm:$0xff] %v840
      %v845 = vld [vmem:[%s1 + $0x8] sm:$0x22]
      %v847 = vunpack.c.l.b16 %v845
      %v848 = vunpack.c.h.b16 %v845
      %v849 = vpack.c.b16 %v847, %v847
      %v850 = vpack.c.b16 %v848, %v848
      %v852 = vshrl.u32 %v849, 16
      %v853 = vpack.i.b16 %v852, %v852
      %v855 = vlaneseq
      %v856 = vshrl.u32 %v855, 7
      %v857 = vsub.s32 1, %v856
      %v858 = vrot.slane %v853, %v857
      %v860 = vshrl.u32 %v850, 16
      %v861 = vpack.i.b16 %v860, %v860
      %v863 = vlaneseq
      %v864 = vshrl.u32 %v863, 7
      %v865 = vsub.s32 1, %v864
      %v866 = vrot.slane %v861, %v865
      %v869 = vunpack.c.l.b16 %v858
      %v870 = vunpack.c.l.b16 %v866
      %v871 = vpack.c.b16 %v870, %v869
      %872 = vrot.lane.b32.xlu0 %v871, 66
      %v873 = vpop.permute.xlu0 %872
      %v874 = vrot.slane %v873, 4
      %vm875 = vcmask 539648
      %v876 = vsel %vm875, %v874, %v873
      %v879 = vmul.bf16 %v172, %v876
      %v880 = vmul.bf16 %v173, %v874
      %v881 = vmul.bf16 %v174, %v876
      %v882 = vmul.bf16 %v175, %v874
      %v887 = vunpack.c.l.b16 %v879
      %v888 = vunpack.c.h.b16 %v879
      %v889 = vunpack.c.l.b16 %v880
      %v890 = vunpack.c.l.b16 %v881
      %v891 = vunpack.c.h.b16 %v881
      %v892 = vunpack.c.l.b16 %v882
      %v893 = vpack.c.b16 %v890, %v887
      %v894 = vpack.c.b16 %v891, %v888
      %v895 = vpack.c.b16 %v892, %v889
      %896 = vrot.lane.b32.xlu0 %v893, 62
      %v897 = vpop.permute.xlu0 %896
      %898 = vrot.lane.b32.xlu0 %v894, 62
      %v899 = vpop.permute.xlu0 %898
      %900 = vrot.lane.b32.xlu0 %v895, 62
      %v901 = vpop.permute.xlu0 %900
      %vm902 = vcmask 506880
      %v903 = vsel %vm902, %v897, %v899
      %v904 = vsel %vm902, %v899, %v901
      %907 = vst [vmem:[#allocation2 + $0xb0] sm:$0xff] %v903
      %908 = vst [vmem:[#allocation2 + $0xb8] sm:$0xff] %v904
      %v909 = vld [vmem:[%s1 + $0x8] sm:$0x44]
      %v911 = vunpack.c.l.b16 %v909
      %v912 = vunpack.c.h.b16 %v909
      %v913 = vpack.c.b16 %v911, %v911
      %v914 = vpack.c.b16 %v912, %v912
      %v916 = vpack.i.b16 %v913, %v913
      %v918 = vlaneseq
      %v919 = vshrl.u32 %v918, 7
      %v920 = vsub.s32 2, %v919
      %v921 = vrot.slane %v916, %v920
      %v923 = vpack.i.b16 %v914, %v914
      %v925 = vlaneseq
      %v926 = vshrl.u32 %v925, 7
      %v927 = vsub.s32 2, %v926
      %v928 = vrot.slane %v923, %v927
      %v931 = vunpack.c.l.b16 %v921
      %v932 = vunpack.c.l.b16 %v928
      %v933 = vpack.c.b16 %v932, %v931
      %934 = vrot.lane.b32.xlu0 %v933, 72
      %v935 = vpop.permute.xlu0 %934
      %v936 = vrot.slane %v935, 4
      %vm937 = vcmask 588800
      %v938 = vsel %vm937, %v936, %v935
      %v941 = vmul.bf16 %v172, %v938
      %v942 = vmul.bf16 %v173, %v936
      %v943 = vmul.bf16 %v174, %v938
      %v944 = vmul.bf16 %v175, %v936
      %v949 = vunpack.c.l.b16 %v941
      %v950 = vunpack.c.h.b16 %v941
      %v951 = vunpack.c.l.b16 %v942
      %v952 = vunpack.c.l.b16 %v943
      %v953 = vunpack.c.h.b16 %v943
      %v954 = vunpack.c.l.b16 %v944
      %v955 = vpack.c.b16 %v952, %v949
      %v956 = vpack.c.b16 %v953, %v950
      %v957 = vpack.c.b16 %v954, %v951
      %958 = vrot.lane.b32.xlu0 %v955, 56
      %v959 = vpop.permute.xlu0 %958
      %960 = vrot.lane.b32.xlu0 %v956, 56
      %v961 = vpop.permute.xlu0 %960
      %962 = vrot.lane.b32.xlu0 %v957, 56
      %v963 = vpop.permute.xlu0 %962
      %vm964 = vcmask 457728
      %v965 = vsel %vm964, %v959, %v961
      %v966 = vsel %vm964, %v961, %v963
      %969 = vst [vmem:[#allocation2 + $0xc0] sm:$0xff] %v965
      %970 = vst [vmem:[#allocation2 + $0xc8] sm:$0xff] %v966
      %v971 = vld [vmem:[%s1 + $0x8] sm:$0x44]
      %v973 = vunpack.c.l.b16 %v971
      %v974 = vunpack.c.h.b16 %v971
      %v975 = vpack.c.b16 %v973, %v973
      %v976 = vpack.c.b16 %v974, %v974
      %v978 = vshrl.u32 %v975, 16
      %v979 = vpack.i.b16 %v978, %v978
      %v981 = vlaneseq
      %v982 = vshrl.u32 %v981, 7
      %v983 = vsub.s32 2, %v982
      %v984 = vrot.slane %v979, %v983
      %v986 = vshrl.u32 %v976, 16
      %v987 = vpack.i.b16 %v986, %v986
      %v989 = vlaneseq
      %v990 = vshrl.u32 %v989, 7
      %v991 = vsub.s32 2, %v990
      %v992 = vrot.slane %v987, %v991
      %v995 = vunpack.c.l.b16 %v984
      %v996 = vunpack.c.l.b16 %v992
      %v997 = vpack.c.b16 %v996, %v995
      %998 = vrot.lane.b32.xlu0 %v997, 73
      %v999 = vpop.permute.xlu0 %998
      %v1000 = vrot.slane %v999, 4
      %vm1001 = vcmask 596992
      %v1002 = vsel %vm1001, %v1000, %v999
      %v1005 = vmul.bf16 %v172, %v1002
      %v1006 = vmul.bf16 %v173, %v1000
      %v1007 = vmul.bf16 %v174, %v1002
      %v1008 = vmul.bf16 %v175, %v1000
      %v1013 = vunpack.c.l.b16 %v1005
      %v1014 = vunpack.c.h.b16 %v1005
      %v1015 = vunpack.c.l.b16 %v1006
      %v1016 = vunpack.c.l.b16 %v1007
      %v1017 = vunpack.c.h.b16 %v1007
      %v1018 = vunpack.c.l.b16 %v1008
      %v1019 = vpack.c.b16 %v1016, %v1013
      %v1020 = vpack.c.b16 %v1017, %v1014
      %v1021 = vpack.c.b16 %v1018, %v1015
      %1022 = vrot.lane.b32.xlu0 %v1019, 55
      %v1023 = vpop.permute.xlu0 %1022
      %1024 = vrot.lane.b32.xlu0 %v1020, 55
      %v1025 = vpop.permute.xlu0 %1024
      %1026 = vrot.lane.b32.xlu0 %v1021, 55
      %v1027 = vpop.permute.xlu0 %1026
      %vm1028 = vcmask 449536
      %v1029 = vsel %vm1028, %v1023, %v1025
      %v1030 = vsel %vm1028, %v1025, %v1027
      %1033 = vst [vmem:[#allocation2 + $0xd0] sm:$0xff] %v1029
      %1034 = vst [vmem:[#allocation2 + $0xd8] sm:$0xff] %v1030
      %v1035 = vld [vmem:[%s1 + $0x8] sm:$0x88]
      %v1037 = vunpack.c.l.b16 %v1035
      %v1038 = vunpack.c.h.b16 %v1035
      %v1039 = vpack.c.b16 %v1037, %v1037
      %v1040 = vpack.c.b16 %v1038, %v1038
      %v1042 = vpack.i.b16 %v1039, %v1039
      %v1044 = vlaneseq
      %v1045 = vshrl.u32 %v1044, 7
      %v1046 = vsub.s32 3, %v1045
      %v1047 = vrot.slane %v1042, %v1046
      %v1049 = vpack.i.b16 %v1040, %v1040
      %v1051 = vlaneseq
      %v1052 = vshrl.u32 %v1051, 7
      %v1053 = vsub.s32 3, %v1052
      %v1054 = vrot.slane %v1049, %v1053
      %v1057 = vunpack.c.l.b16 %v1047
      %v1058 = vunpack.c.l.b16 %v1054
      %v1059 = vpack.c.b16 %v1058, %v1057
      %1060 = vrot.lane.b32.xlu0 %v1059, 74
      %v1061 = vpop.permute.xlu0 %1060
      %v1062 = vrot.slane %v1061, 4
      %vm1063 = vcmask 605184
      %v1064 = vsel %vm1063, %v1062, %v1061
      %v1067 = vmul.bf16 %v172, %v1064
      %v1068 = vmul.bf16 %v173, %v1062
      %v1069 = vmul.bf16 %v174, %v1064
      %v1070 = vmul.bf16 %v175, %v1062
      %v1075 = vunpack.c.l.b16 %v1067
      %v1076 = vunpack.c.h.b16 %v1067
      %v1077 = vunpack.c.l.b16 %v1068
      %v1078 = vunpack.c.l.b16 %v1069
      %v1079 = vunpack.c.h.b16 %v1069
      %v1080 = vunpack.c.l.b16 %v1070
      %v1081 = vpack.c.b16 %v1078, %v1075
      %v1082 = vpack.c.b16 %v1079, %v1076
      %v1083 = vpack.c.b16 %v1080, %v1077
      %1084 = vrot.lane.b32.xlu0 %v1081, 54
      %v1085 = vpop.permute.xlu0 %1084
      %1086 = vrot.lane.b32.xlu0 %v1082, 54
      %v1087 = vpop.permute.xlu0 %1086
      %1088 = vrot.lane.b32.xlu0 %v1083, 54
      %v1089 = vpop.permute.xlu0 %1088
      %vm1090 = vcmask 441344
      %v1091 = vsel %vm1090, %v1085, %v1087
      %v1092 = vsel %vm1090, %v1087, %v1089
      %1095 = vst [vmem:[#allocation2 + $0xe0] sm:$0xff] %v1091
      %1096 = vst [vmem:[#allocation2 + $0xe8] sm:$0xff] %v1092
      %v1097 = vld [vmem:[%s1 + $0x8] sm:$0x88]
      %v1099 = vunpack.c.l.b16 %v1097
      %v1100 = vunpack.c.h.b16 %v1097
      %v1101 = vpack.c.b16 %v1099, %v1099
      %v1102 = vpack.c.b16 %v1100, %v1100
      %v1104 = vshrl.u32 %v1101, 16
      %v1105 = vpack.i.b16 %v1104, %v1104
      %v1107 = vlaneseq
      %v1108 = vshrl.u32 %v1107, 7
      %v1109 = vsub.s32 3, %v1108
      %v1110 = vrot.slane %v1105, %v1109
      %v1112 = vshrl.u32 %v1102, 16
      %v1113 = vpack.i.b16 %v1112, %v1112
      %v1115 = vlaneseq
      %v1116 = vshrl.u32 %v1115, 7
      %v1117 = vsub.s32 3, %v1116
      %v1118 = vrot.slane %v1113, %v1117
      %v1121 = vunpack.c.l.b16 %v1110
      %v1122 = vunpack.c.l.b16 %v1118
      %v1123 = vpack.c.b16 %v1122, %v1121
      %1124 = vrot.lane.b32.xlu0 %v1123, 80
      %v1125 = vpop.permute.xlu0 %1124
      %v1126 = vrot.slane %v1125, 4
      %vm1127 = vcmask 654336
      %v1128 = vsel %vm1127, %v1126, %v1125
      %v1131 = vmul.bf16 %v172, %v1128
      %v1132 = vmul.bf16 %v173, %v1126
      %v1133 = vmul.bf16 %v174, %v1128
      %v1134 = vmul.bf16 %v175, %v1126
      %v1139 = vunpack.c.l.b16 %v1131
      %v1140 = vunpack.c.h.b16 %v1131
      %v1141 = vunpack.c.l.b16 %v1132
      %v1142 = vunpack.c.l.b16 %v1133
      %v1143 = vunpack.c.h.b16 %v1133
      %v1144 = vunpack.c.l.b16 %v1134
      %v1145 = vpack.c.b16 %v1142, %v1139
      %v1146 = vpack.c.b16 %v1143, %v1140
      %v1147 = vpack.c.b16 %v1144, %v1141
      %1148 = vrot.lane.b32.xlu0 %v1145, 48
      %v1149 = vpop.permute.xlu0 %1148
      %1150 = vrot.lane.b32.xlu0 %v1146, 48
      %v1151 = vpop.permute.xlu0 %1150
      %1152 = vrot.lane.b32.xlu0 %v1147, 48
      %v1153 = vpop.permute.xlu0 %1152
      %vm1154 = vcmask 392192
      %v1155 = vsel %vm1154, %v1149, %v1151
      %v1156 = vsel %vm1154, %v1151, %v1153
      %1159 = vst [vmem:[#allocation2 + $0xf0] sm:$0xff] %v1155
      %1160 = vst [vmem:[#allocation2 + $0xf8] sm:$0xff] %v1156
      %v1161 = vld [vmem:[%s1 + $0x10] sm:$0x11]
      %v1163 = vunpack.c.l.b16 %v1161
      %v1164 = vunpack.c.h.b16 %v1161
      %v1165 = vpack.c.b16 %v1163, %v1163
      %v1166 = vpack.c.b16 %v1164, %v1164
      %v1168 = vpack.i.b16 %v1165, %v1165
      %v1170 = vlaneseq
      %v1171 = vshrl.u32 %v1170, 7
      %v1172 = vsub.s32 0, %v1171
      %v1173 = vrot.slane %v1168, %v1172
      %v1175 = vpack.i.b16 %v1166, %v1166
      %v1177 = vlaneseq
      %v1178 = vshrl.u32 %v1177, 7
      %v1179 = vsub.s32 0, %v1178
      %v1180 = vrot.slane %v1175, %v1179
      %v1183 = vunpack.c.l.b16 %v1173
      %v1184 = vunpack.c.l.b16 %v1180
      %v1185 = vpack.c.b16 %v1184, %v1183
      %1186 = vrot.lane.b32.xlu0 %v1185, 81
      %v1187 = vpop.permute.xlu0 %1186
      %v1188 = vrot.slane %v1187, 4
      %vm1189 = vcmask 662528
      %v1190 = vsel %vm1189, %v1188, %v1187
      %v1193 = vmul.bf16 %v172, %v1190
      %v1194 = vmul.bf16 %v173, %v1188
      %v1195 = vmul.bf16 %v174, %v1190
      %v1196 = vmul.bf16 %v175, %v1188
      %v1201 = vunpack.c.l.b16 %v1193
      %v1202 = vunpack.c.h.b16 %v1193
      %v1203 = vunpack.c.l.b16 %v1194
      %v1204 = vunpack.c.l.b16 %v1195
      %v1205 = vunpack.c.h.b16 %v1195
      %v1206 = vunpack.c.l.b16 %v1196
      %v1207 = vpack.c.b16 %v1204, %v1201
      %v1208 = vpack.c.b16 %v1205, %v1202
      %v1209 = vpack.c.b16 %v1206, %v1203
      %1210 = vrot.lane.b32.xlu0 %v1207, 47
      %v1211 = vpop.permute.xlu0 %1210
      %1212 = vrot.lane.b32.xlu0 %v1208, 47
      %v1213 = vpop.permute.xlu0 %1212
      %1214 = vrot.lane.b32.xlu0 %v1209, 47
      %v1215 = vpop.permute.xlu0 %1214
      %vm1216 = vcmask 384000
      %v1217 = vsel %vm1216, %v1211, %v1213
      %v1218 = vsel %vm1216, %v1213, %v1215
      %1221 = vst [vmem:[#allocation2 + $0x100] sm:$0xff] %v1217
      %1222 = vst [vmem:[#allocation2 + $0x108] sm:$0xff] %v1218
      %v1223 = vld [vmem:[%s1 + $0x10] sm:$0x11]
      %v1225 = vunpack.c.l.b16 %v1223
      %v1226 = vunpack.c.h.b16 %v1223
      %v1227 = vpack.c.b16 %v1225, %v1225
      %v1228 = vpack.c.b16 %v1226, %v1226
      %v1230 = vshrl.u32 %v1227, 16
      %v1231 = vpack.i.b16 %v1230, %v1230
      %v1233 = vlaneseq
      %v1234 = vshrl.u32 %v1233, 7
      %v1235 = vsub.s32 0, %v1234
      %v1236 = vrot.slane %v1231, %v1235
      %v1238 = vshrl.u32 %v1228, 16
      %v1239 = vpack.i.b16 %v1238, %v1238
      %v1241 = vlaneseq
      %v1242 = vshrl.u32 %v1241, 7
      %v1243 = vsub.s32 0, %v1242
      %v1244 = vrot.slane %v1239, %v1243
      %v1247 = vunpack.c.l.b16 %v1236
      %v1248 = vunpack.c.l.b16 %v1244
      %v1249 = vpack.c.b16 %v1248, %v1247
      %1250 = vrot.lane.b32.xlu0 %v1249, 82
      %v1251 = vpop.permute.xlu0 %1250
      %v1252 = vrot.slane %v1251, 4
      %vm1253 = vcmask 670720
      %v1254 = vsel %vm1253, %v1252, %v1251
      %v1257 = vmul.bf16 %v172, %v1254
      %v1258 = vmul.bf16 %v173, %v1252
      %v1259 = vmul.bf16 %v174, %v1254
      %v1260 = vmul.bf16 %v175, %v1252
      %v1265 = vunpack.c.l.b16 %v1257
      %v1266 = vunpack.c.h.b16 %v1257
      %v1267 = vunpack.c.l.b16 %v1258
      %v1268 = vunpack.c.l.b16 %v1259
      %v1269 = vunpack.c.h.b16 %v1259
      %v1270 = vunpack.c.l.b16 %v1260
      %v1271 = vpack.c.b16 %v1268, %v1265
      %v1272 = vpack.c.b16 %v1269, %v1266
      %v1273 = vpack.c.b16 %v1270, %v1267
      %1274 = vrot.lane.b32.xlu0 %v1271, 46
      %v1275 = vpop.permute.xlu0 %1274
      %1276 = vrot.lane.b32.xlu0 %v1272, 46
      %v1277 = vpop.permute.xlu0 %1276
      %1278 = vrot.lane.b32.xlu0 %v1273, 46
      %v1279 = vpop.permute.xlu0 %1278
      %vm1280 = vcmask 375808
      %v1281 = vsel %vm1280, %v1275, %v1277
      %v1282 = vsel %vm1280, %v1277, %v1279
      %1285 = vst [vmem:[#allocation2 + $0x110] sm:$0xff] %v1281
      %1286 = vst [vmem:[#allocation2 + $0x118] sm:$0xff] %v1282
      %v1287 = vld [vmem:[%s1 + $0x10] sm:$0x22]
      %v1289 = vunpack.c.l.b16 %v1287
      %v1290 = vunpack.c.h.b16 %v1287
      %v1291 = vpack.c.b16 %v1289, %v1289
      %v1292 = vpack.c.b16 %v1290, %v1290
      %v1294 = vpack.i.b16 %v1291, %v1291
      %v1296 = vlaneseq
      %v1297 = vshrl.u32 %v1296, 7
      %v1298 = vsub.s32 1, %v1297
      %v1299 = vrot.slane %v1294, %v1298
      %v1301 = vpack.i.b16 %v1292, %v1292
      %v1303 = vlaneseq
      %v1304 = vshrl.u32 %v1303, 7
      %v1305 = vsub.s32 1, %v1304
      %v1306 = vrot.slane %v1301, %v1305
      %v1311 = vrot.slane %v172, 4
      %v1312 = vrot.slane %v173, 4
      %v1313 = vrot.slane %v174, 4
      %v1314 = vrot.slane %v175, 4
      %vm1315 = vcmask 1043456
      %v1316 = vsel %vm1315, %v1311, %v1312
      %v1317 = vsel %vm1315, %v1313, %v1314
      %v1322 = vunpack.c.l.b16 %v1299
      %v1323 = vunpack.c.l.b16 %v1306
      %v1324 = vpack.c.b16 %v1323, %v1322
      %v1326 = vmul.bf16 %v1316, %v1324
      %v1327 = vmul.bf16 %v1317, %v1324
      %v1330 = vunpack.c.l.b16 %v1326
      %v1331 = vunpack.c.h.b16 %v1326
      %v1332 = vunpack.c.l.b16 %v1327
      %v1333 = vunpack.c.h.b16 %v1327
      %v1334 = vpack.c.b16 %v1332, %v1330
      %v1335 = vpack.c.b16 %v1333, %v1331
      %1338 = vst [vmem:[#allocation2 + $0x120] sm:$0xff] %v1334
      %1339 = vst [vmem:[#allocation2 + $0x128] sm:$0xff] %v1335
      %v1340 = vld [vmem:[%s1 + $0x10] sm:$0x22]
      %v1342 = vunpack.c.l.b16 %v1340
      %v1343 = vunpack.c.h.b16 %v1340
      %v1344 = vpack.c.b16 %v1342, %v1342
      %v1345 = vpack.c.b16 %v1343, %v1343
      %v1347 = vshrl.u32 %v1344, 16
      %v1348 = vpack.i.b16 %v1347, %v1347
      %v1350 = vlaneseq
      %v1351 = vshrl.u32 %v1350, 7
      %v1352 = vsub.s32 1, %v1351
      %v1353 = vrot.slane %v1348, %v1352
      %v1355 = vshrl.u32 %v1345, 16
      %v1356 = vpack.i.b16 %v1355, %v1355
      %v1358 = vlaneseq
      %v1359 = vshrl.u32 %v1358, 7
      %v1360 = vsub.s32 1, %v1359
      %v1361 = vrot.slane %v1356, %v1360
      %1362 = vrot.lane.b32.xlu0 %v172, 127
      %v1363 = vpop.permute.xlu0 %1362
      %1364 = vrot.lane.b32.xlu0 %v173, 127
      %v1365 = vpop.permute.xlu0 %1364
      %1366 = vrot.lane.b32.xlu0 %v174, 127
      %v1367 = vpop.permute.xlu0 %1366
      %1368 = vrot.lane.b32.xlu0 %v175, 127
      %v1369 = vpop.permute.xlu0 %1368
      %v1370 = vrot.slane %v1363, 4
      %v1371 = vrot.slane %v1365, 4
      %v1372 = vrot.slane %v1367, 4
      %v1373 = vrot.slane %v1369, 4
      %v1374 = vsel %vm1315, %v1370, %v1371
      %v1375 = vsel %vm273, %v1374, %v1365
      %v1376 = vsel %vm1315, %v1372, %v1373
      %v1377 = vsel %vm273, %v1376, %v1369
      %v1382 = vunpack.c.l.b16 %v1353
      %v1383 = vunpack.c.l.b16 %v1361
      %v1384 = vpack.c.b16 %v1383, %v1382
      %v1386 = vmul.bf16 %v1375, %v1384
      %v1387 = vmul.bf16 %v1377, %v1384
      %v1390 = vunpack.c.l.b16 %v1386
      %v1391 = vunpack.c.h.b16 %v1386
      %v1392 = vunpack.c.l.b16 %v1387
      %v1393 = vunpack.c.h.b16 %v1387
      %v1394 = vpack.c.b16 %v1392, %v1390
      %v1395 = vpack.c.b16 %v1393, %v1391
      %1398 = vst [vmem:[#allocation2 + $0x130] sm:$0xff] %v1394
      %1399 = vst [vmem:[#allocation2 + $0x138] sm:$0xff] %v1395
      %v1400 = vld [vmem:[%s1 + $0x10] sm:$0x44]
      %v1402 = vunpack.c.l.b16 %v1400
      %v1403 = vunpack.c.h.b16 %v1400
      %v1404 = vpack.c.b16 %v1402, %v1402
      %v1405 = vpack.c.b16 %v1403, %v1403
      %v1407 = vpack.i.b16 %v1404, %v1404
      %v1409 = vlaneseq
      %v1410 = vshrl.u32 %v1409, 7
      %v1411 = vsub.s32 2, %v1410
      %v1412 = vrot.slane %v1407, %v1411
      %v1414 = vpack.i.b16 %v1405, %v1405
      %v1416 = vlaneseq
      %v1417 = vshrl.u32 %v1416, 7
      %v1418 = vsub.s32 2, %v1417
      %v1419 = vrot.slane %v1414, %v1418
      %1420 = vrot.lane.b32.xlu0 %v172, 126
      %v1421 = vpop.permute.xlu0 %1420
      %1422 = vrot.lane.b32.xlu0 %v173, 126
      %v1423 = vpop.permute.xlu0 %1422
      %1424 = vrot.lane.b32.xlu0 %v174, 126
      %v1425 = vpop.permute.xlu0 %1424
      %1426 = vrot.lane.b32.xlu0 %v175, 126
      %v1427 = vpop.permute.xlu0 %1426
      %v1428 = vrot.slane %v1421, 4
      %v1429 = vrot.slane %v1423, 4
      %v1430 = vrot.slane %v1425, 4
      %v1431 = vrot.slane %v1427, 4
      %v1432 = vsel %vm1315, %v1428, %v1429
      %v1433 = vsel %vm335, %v1432, %v1423
      %v1434 = vsel %vm1315, %v1430, %v1431
      %v1435 = vsel %vm335, %v1434, %v1427
      %v1440 = vunpack.c.l.b16 %v1412
      %v1441 = vunpack.c.l.b16 %v1419
      %v1442 = vpack.c.b16 %v1441, %v1440
      %v1444 = vmul.bf16 %v1433, %v1442
      %v1445 = vmul.bf16 %v1435, %v1442
      %v1448 = vunpack.c.l.b16 %v1444
      %v1449 = vunpack.c.h.b16 %v1444
      %v1450 = vunpack.c.l.b16 %v1445
      %v1451 = vunpack.c.h.b16 %v1445
      %v1452 = vpack.c.b16 %v1450, %v1448
      %v1453 = vpack.c.b16 %v1451, %v1449
      %1456 = vst [vmem:[#allocation2 + $0x140] sm:$0xff] %v1452
      %1457 = vst [vmem:[#allocation2 + $0x148] sm:$0xff] %v1453
      %v1458 = vld [vmem:[%s1 + $0x10] sm:$0x44]
      %v1460 = vunpack.c.l.b16 %v1458
      %v1461 = vunpack.c.h.b16 %v1458
      %v1462 = vpack.c.b16 %v1460, %v1460
      %v1463 = vpack.c.b16 %v1461, %v1461
      %v1465 = vshrl.u32 %v1462, 16
      %v1466 = vpack.i.b16 %v1465, %v1465
      %v1468 = vlaneseq
      %v1469 = vshrl.u32 %v1468, 7
      %v1470 = vsub.s32 2, %v1469
      %v1471 = vrot.slane %v1466, %v1470
      %v1473 = vshrl.u32 %v1463, 16
      %v1474 = vpack.i.b16 %v1473, %v1473
      %v1476 = vlaneseq
      %v1477 = vshrl.u32 %v1476, 7
      %v1478 = vsub.s32 2, %v1477
      %v1479 = vrot.slane %v1474, %v1478
      %1480 = vrot.lane.b32.xlu0 %v172, 120
      %v1481 = vpop.permute.xlu0 %1480
      %1482 = vrot.lane.b32.xlu0 %v173, 120
      %v1483 = vpop.permute.xlu0 %1482
      %1484 = vrot.lane.b32.xlu0 %v174, 120
      %v1485 = vpop.permute.xlu0 %1484
      %1486 = vrot.lane.b32.xlu0 %v175, 120
      %v1487 = vpop.permute.xlu0 %1486
      %v1488 = vrot.slane %v1481, 4
      %v1489 = vrot.slane %v1483, 4
      %v1490 = vrot.slane %v1485, 4
      %v1491 = vrot.slane %v1487, 4
      %v1492 = vsel %vm1315, %v1488, %v1489
      %v1493 = vsel %vm399, %v1492, %v1483
      %v1494 = vsel %vm1315, %v1490, %v1491
      %v1495 = vsel %vm399, %v1494, %v1487
      %v1500 = vunpack.c.l.b16 %v1471
      %v1501 = vunpack.c.l.b16 %v1479
      %v1502 = vpack.c.b16 %v1501, %v1500
      %v1504 = vmul.bf16 %v1493, %v1502
      %v1505 = vmul.bf16 %v1495, %v1502
      %v1508 = vunpack.c.l.b16 %v1504
      %v1509 = vunpack.c.h.b16 %v1504
      %v1510 = vunpack.c.l.b16 %v1505
      %v1511 = vunpack.c.h.b16 %v1505
      %v1512 = vpack.c.b16 %v1510, %v1508
      %v1513 = vpack.c.b16 %v1511, %v1509
      %1516 = vst [vmem:[#allocation2 + $0x150] sm:$0xff] %v1512
      %1517 = vst [vmem:[#allocation2 + $0x158] sm:$0xff] %v1513
      %v1518 = vld [vmem:[%s1 + $0x10] sm:$0x88]
      %v1520 = vunpack.c.l.b16 %v1518
      %v1521 = vunpack.c.h.b16 %v1518
      %v1522 = vpack.c.b16 %v1520, %v1520
      %v1523 = vpack.c.b16 %v1521, %v1521
      %v1525 = vpack.i.b16 %v1522, %v1522
      %v1527 = vlaneseq
      %v1528 = vshrl.u32 %v1527, 7
      %v1529 = vsub.s32 3, %v1528
      %v1530 = vrot.slane %v1525, %v1529
      %v1532 = vpack.i.b16 %v1523, %v1523
      %v1534 = vlaneseq
      %v1535 = vshrl.u32 %v1534, 7
      %v1536 = vsub.s32 3, %v1535
      %v1537 = vrot.slane %v1532, %v1536
      %1538 = vrot.lane.b32.xlu0 %v172, 119
      %v1539 = vpop.permute.xlu0 %1538
      %1540 = vrot.lane.b32.xlu0 %v173, 119
      %v1541 = vpop.permute.xlu0 %1540
      %1542 = vrot.lane.b32.xlu0 %v174, 119
      %v1543 = vpop.permute.xlu0 %1542
      %1544 = vrot.lane.b32.xlu0 %v175, 119
      %v1545 = vpop.permute.xlu0 %1544
      %v1546 = vrot.slane %v1539, 4
      %v1547 = vrot.slane %v1541, 4
      %v1548 = vrot.slane %v1543, 4
      %v1549 = vrot.slane %v1545, 4
      %v1550 = vsel %vm1315, %v1546, %v1547
      %v1551 = vsel %vm461, %v1550, %v1541
      %v1552 = vsel %vm1315, %v1548, %v1549
      %v1553 = vsel %vm461, %v1552, %v1545
      %v1558 = vunpack.c.l.b16 %v1530
      %v1559 = vunpack.c.l.b16 %v1537
      %v1560 = vpack.c.b16 %v1559, %v1558
      %v1562 = vmul.bf16 %v1551, %v1560
      %v1563 = vmul.bf16 %v1553, %v1560
      %v1566 = vunpack.c.l.b16 %v1562
      %v1567 = vunpack.c.h.b16 %v1562
      %v1568 = vunpack.c.l.b16 %v1563
      %v1569 = vunpack.c.h.b16 %v1563
      %v1570 = vpack.c.b16 %v1568, %v1566
      %v1571 = vpack.c.b16 %v1569, %v1567
      %1574 = vst [vmem:[#allocation2 + $0x160] sm:$0xff] %v1570
      %1575 = vst [vmem:[#allocation2 + $0x168] sm:$0xff] %v1571
      %v1576 = vld [vmem:[%s1 + $0x10] sm:$0x88]
      %v1578 = vunpack.c.l.b16 %v1576
      %v1579 = vunpack.c.h.b16 %v1576
      %v1580 = vpack.c.b16 %v1578, %v1578
      %v1581 = vpack.c.b16 %v1579, %v1579
      %v1583 = vshrl.u32 %v1580, 16
      %v1584 = vpack.i.b16 %v1583, %v1583
      %v1586 = vlaneseq
      %v1587 = vshrl.u32 %v1586, 7
      %v1588 = vsub.s32 3, %v1587
      %v1589 = vrot.slane %v1584, %v1588
      %v1591 = vshrl.u32 %v1581, 16
      %v1592 = vpack.i.b16 %v1591, %v1591
      %v1594 = vlaneseq
      %v1595 = vshrl.u32 %v1594, 7
      %v1596 = vsub.s32 3, %v1595
      %v1597 = vrot.slane %v1592, %v1596
      %1598 = vrot.lane.b32.xlu0 %v172, 118
      %v1599 = vpop.permute.xlu0 %1598
      %1600 = vrot.lane.b32.xlu0 %v173, 118
      %v1601 = vpop.permute.xlu0 %1600
      %1602 = vrot.lane.b32.xlu0 %v174, 118
      %v1603 = vpop.permute.xlu0 %1602
      %1604 = vrot.lane.b32.xlu0 %v175, 118
      %v1605 = vpop.permute.xlu0 %1604
      %v1606 = vrot.slane %v1599, 4
      %v1607 = vrot.slane %v1601, 4
      %v1608 = vrot.slane %v1603, 4
      %v1609 = vrot.slane %v1605, 4
      %v1610 = vsel %vm1315, %v1606, %v1607
      %v1611 = vsel %vm525, %v1610, %v1601
      %v1612 = vsel %vm1315, %v1608, %v1609
      %v1613 = vsel %vm525, %v1612, %v1605
      %v1618 = vunpack.c.l.b16 %v1589
      %v1619 = vunpack.c.l.b16 %v1597
      %v1620 = vpack.c.b16 %v1619, %v1618
      %v1622 = vmul.bf16 %v1611, %v1620
      %v1623 = vmul.bf16 %v1613, %v1620
      %v1626 = vunpack.c.l.b16 %v1622
      %v1627 = vunpack.c.h.b16 %v1622
      %v1628 = vunpack.c.l.b16 %v1623
      %v1629 = vunpack.c.h.b16 %v1623
      %v1630 = vpack.c.b16 %v1628, %v1626
      %v1631 = vpack.c.b16 %v1629, %v1627
      %1634 = vst [vmem:[#allocation2 + $0x170] sm:$0xff] %v1630
      %1635 = vst [vmem:[#allocation2 + $0x178] sm:$0xff] %v1631
      %v1636 = vld [vmem:[%s1 + $0x18] sm:$0x11]
      %v1638 = vunpack.c.l.b16 %v1636
      %v1639 = vunpack.c.h.b16 %v1636
      %v1640 = vpack.c.b16 %v1638, %v1638
      %v1641 = vpack.c.b16 %v1639, %v1639
      %v1643 = vpack.i.b16 %v1640, %v1640
      %v1645 = vlaneseq
      %v1646 = vshrl.u32 %v1645, 7
      %v1647 = vsub.s32 0, %v1646
      %v1648 = vrot.slane %v1643, %v1647
      %v1650 = vpack.i.b16 %v1641, %v1641
      %v1652 = vlaneseq
      %v1653 = vshrl.u32 %v1652, 7
      %v1654 = vsub.s32 0, %v1653
      %v1655 = vrot.slane %v1650, %v1654
      %1656 = vrot.lane.b32.xlu0 %v172, 112
      %v1657 = vpop.permute.xlu0 %1656
      %1658 = vrot.lane.b32.xlu0 %v173, 112
      %v1659 = vpop.permute.xlu0 %1658
      %1660 = vrot.lane.b32.xlu0 %v174, 112
      %v1661 = vpop.permute.xlu0 %1660
      %1662 = vrot.lane.b32.xlu0 %v175, 112
      %v1663 = vpop.permute.xlu0 %1662
      %v1664 = vrot.slane %v1657, 4
      %v1665 = vrot.slane %v1659, 4
      %v1666 = vrot.slane %v1661, 4
      %v1667 = vrot.slane %v1663, 4
      %v1668 = vsel %vm1315, %v1664, %v1665
      %v1669 = vsel %vm587, %v1668, %v1659
      %v1670 = vsel %vm1315, %v1666, %v1667
      %v1671 = vsel %vm587, %v1670, %v1663
      %v1676 = vunpack.c.l.b16 %v1648
      %v1677 = vunpack.c.l.b16 %v1655
      %v1678 = vpack.c.b16 %v1677, %v1676
      %v1680 = vmul.bf16 %v1669, %v1678
      %v1681 = vmul.bf16 %v1671, %v1678
      %v1684 = vunpack.c.l.b16 %v1680
      %v1685 = vunpack.c.h.b16 %v1680
      %v1686 = vunpack.c.l.b16 %v1681
      %v1687 = vunpack.c.h.b16 %v1681
      %v1688 = vpack.c.b16 %v1686, %v1684
      %v1689 = vpack.c.b16 %v1687, %v1685
      %1692 = vst [vmem:[#allocation2 + $0x180] sm:$0xff] %v1688
      %1693 = vst [vmem:[#allocation2 + $0x188] sm:$0xff] %v1689
      %v1694 = vld [vmem:[%s1 + $0x18] sm:$0x11]
      %v1696 = vunpack.c.l.b16 %v1694
      %v1697 = vunpack.c.h.b16 %v1694
      %v1698 = vpack.c.b16 %v1696, %v1696
      %v1699 = vpack.c.b16 %v1697, %v1697
      %v1701 = vshrl.u32 %v1698, 16
      %v1702 = vpack.i.b16 %v1701, %v1701
      %v1704 = vlaneseq
      %v1705 = vshrl.u32 %v1704, 7
      %v1706 = vsub.s32 0, %v1705
      %v1707 = vrot.slane %v1702, %v1706
      %v1709 = vshrl.u32 %v1699, 16
      %v1710 = vpack.i.b16 %v1709, %v1709
      %v1712 = vlaneseq
      %v1713 = vshrl.u32 %v1712, 7
      %v1714 = vsub.s32 0, %v1713
      %v1715 = vrot.slane %v1710, %v1714
      %1716 = vrot.lane.b32.xlu0 %v172, 111
      %v1717 = vpop.permute.xlu0 %1716
      %1718 = vrot.lane.b32.xlu0 %v173, 111
      %v1719 = vpop.permute.xlu0 %1718
      %1720 = vrot.lane.b32.xlu0 %v174, 111
      %v1721 = vpop.permute.xlu0 %1720
      %1722 = vrot.lane.b32.xlu0 %v175, 111
      %v1723 = vpop.permute.xlu0 %1722
      %v1724 = vrot.slane %v1717, 4
      %v1725 = vrot.slane %v1719, 4
      %v1726 = vrot.slane %v1721, 4
      %v1727 = vrot.slane %v1723, 4
      %v1728 = vsel %vm1315, %v1724, %v1725
      %v1729 = vsel %vm651, %v1728, %v1719
      %v1730 = vsel %vm1315, %v1726, %v1727
      %v1731 = vsel %vm651, %v1730, %v1723
      %v1736 = vunpack.c.l.b16 %v1707
      %v1737 = vunpack.c.l.b16 %v1715
      %v1738 = vpack.c.b16 %v1737, %v1736
      %v1740 = vmul.bf16 %v1729, %v1738
      %v1741 = vmul.bf16 %v1731, %v1738
      %v1744 = vunpack.c.l.b16 %v1740
      %v1745 = vunpack.c.h.b16 %v1740
      %v1746 = vunpack.c.l.b16 %v1741
      %v1747 = vunpack.c.h.b16 %v1741
      %v1748 = vpack.c.b16 %v1746, %v1744
      %v1749 = vpack.c.b16 %v1747, %v1745
      %1752 = vst [vmem:[#allocation2 + $0x190] sm:$0xff] %v1748
      %1753 = vst [vmem:[#allocation2 + $0x198] sm:$0xff] %v1749
      %v1754 = vld [vmem:[%s1 + $0x18] sm:$0x22]
      %v1756 = vunpack.c.l.b16 %v1754
      %v1757 = vunpack.c.h.b16 %v1754
      %v1758 = vpack.c.b16 %v1756, %v1756
      %v1759 = vpack.c.b16 %v1757, %v1757
      %v1761 = vpack.i.b16 %v1758, %v1758
      %v1763 = vlaneseq
      %v1764 = vshrl.u32 %v1763, 7
      %v1765 = vsub.s32 1, %v1764
      %v1766 = vrot.slane %v1761, %v1765
      %v1768 = vpack.i.b16 %v1759, %v1759
      %v1770 = vlaneseq
      %v1771 = vshrl.u32 %v1770, 7
      %v1772 = vsub.s32 1, %v1771
      %v1773 = vrot.slane %v1768, %v1772
      %1774 = vrot.lane.b32.xlu0 %v172, 110
      %v1775 = vpop.permute.xlu0 %1774
      %1776 = vrot.lane.b32.xlu0 %v173, 110
      %v1777 = vpop.permute.xlu0 %1776
      %1778 = vrot.lane.b32.xlu0 %v174, 110
      %v1779 = vpop.permute.xlu0 %1778
      %1780 = vrot.lane.b32.xlu0 %v175, 110
      %v1781 = vpop.permute.xlu0 %1780
      %v1782 = vrot.slane %v1775, 4
      %v1783 = vrot.slane %v1777, 4
      %v1784 = vrot.slane %v1779, 4
      %v1785 = vrot.slane %v1781, 4
      %v1786 = vsel %vm1315, %v1782, %v1783
      %v1787 = vsel %vm713, %v1786, %v1777
      %v1788 = vsel %vm1315, %v1784, %v1785
      %v1789 = vsel %vm713, %v1788, %v1781
      %v1794 = vunpack.c.l.b16 %v1766
      %v1795 = vunpack.c.l.b16 %v1773
      %v1796 = vpack.c.b16 %v1795, %v1794
      %v1798 = vmul.bf16 %v1787, %v1796
      %v1799 = vmul.bf16 %v1789, %v1796
      %v1802 = vunpack.c.l.b16 %v1798
      %v1803 = vunpack.c.h.b16 %v1798
      %v1804 = vunpack.c.l.b16 %v1799
      %v1805 = vunpack.c.h.b16 %v1799
      %v1806 = vpack.c.b16 %v1804, %v1802
      %v1807 = vpack.c.b16 %v1805, %v1803
      %1810 = vst [vmem:[#allocation2 + $0x1a0] sm:$0xff] %v1806
      %1811 = vst [vmem:[#allocation2 + $0x1a8] sm:$0xff] %v1807
      %v1812 = vld [vmem:[%s2] sm:$0xff]
      %v1813 = vld [vmem:[%s2 + $0x8] sm:$0xff]
      %v1814 = vld [vmem:[%s2 + $0x10] sm:$0xff]
      %v1815 = vld [vmem:[%s2 + $0x18] sm:$0xff]
      %v1816 = vld [vmem:[#allocation2] sm:$0xff]
      %v1817 = vld [vmem:[#allocation2 + $0x8] sm:$0xff]
      %v1818 = vld [vmem:[#allocation2 + $0x10] sm:$0xff]
      %v1819 = vld [vmem:[#allocation2 + $0x18] sm:$0xff]
      %v1820 = vld [vmem:[#allocation2 + $0x20] sm:$0xff]
      %v1821 = vld [vmem:[#allocation2 + $0x28] sm:$0xff]
      %v1822 = vld [vmem:[#allocation2 + $0x30] sm:$0xff]
      %v1823 = vld [vmem:[#allocation2 + $0x38] sm:$0xff]
      %v1824 = vld [vmem:[#allocation2 + $0x40] sm:$0xff]
      %v1825 = vld [vmem:[#allocation2 + $0x48] sm:$0xff]
      %v1826 = vld [vmem:[#allocation2 + $0x50] sm:$0xff]
      %v1827 = vld [vmem:[#allocation2 + $0x58] sm:$0xff]
      %v1828 = vld [vmem:[#allocation2 + $0x60] sm:$0xff]
      %v1829 = vld [vmem:[#allocation2 + $0x68] sm:$0xff]
      %v1830 = vld [vmem:[#allocation2 + $0x70] sm:$0xff]
      %v1831 = vld [vmem:[#allocation2 + $0x78] sm:$0xff]
      %v1832 = vld [vmem:[#allocation2 + $0x80] sm:$0xff]
      %v1833 = vld [vmem:[#allocation2 + $0x88] sm:$0xff]
      %v1834 = vld [vmem:[#allocation2 + $0x90] sm:$0xff]
      %v1835 = vld [vmem:[#allocation2 + $0x98] sm:$0xff]
      %v1836 = vld [vmem:[#allocation2 + $0xa0] sm:$0xff]
      %v1837 = vld [vmem:[#allocation2 + $0xa8] sm:$0xff]
      %v1838 = vld [vmem:[#allocation2 + $0xb0] sm:$0xff]
      %v1839 = vld [vmem:[#allocation2 + $0xb8] sm:$0xff]
      %v1840 = vld [vmem:[#allocation2 + $0xc0] sm:$0xff]
      %v1841 = vld [vmem:[#allocation2 + $0xc8] sm:$0xff]
      %v1842 = vld [vmem:[#allocation2 + $0xd0] sm:$0xff]
      %v1843 = vld [vmem:[#allocation2 + $0xd8] sm:$0xff]
      %v1844 = vld [vmem:[#allocation2 + $0xe0] sm:$0xff]
      %v1845 = vld [vmem:[#allocation2 + $0xe8] sm:$0xff]
      %v1846 = vld [vmem:[#allocation2 + $0xf0] sm:$0xff]
      %v1847 = vld [vmem:[#allocation2 + $0xf8] sm:$0xff]
      %v1848 = vld [vmem:[#allocation2 + $0x100] sm:$0xff]
      %v1849 = vld [vmem:[#allocation2 + $0x108] sm:$0xff]
      %v1850 = vld [vmem:[#allocation2 + $0x110] sm:$0xff]
      %v1851 = vld [vmem:[#allocation2 + $0x118] sm:$0xff]
      %v1852 = vld [vmem:[#allocation2 + $0x120] sm:$0xff]
      %v1853 = vld [vmem:[#allocation2 + $0x128] sm:$0xff]
      %v1854 = vld [vmem:[#allocation2 + $0x130] sm:$0xff]
      %v1855 = vld [vmem:[#allocation2 + $0x138] sm:$0xff]
      %v1856 = vld [vmem:[#allocation2 + $0x140] sm:$0xff]
      %v1857 = vld [vmem:[#allocation2 + $0x148] sm:$0xff]
      %v1858 = vld [vmem:[#allocation2 + $0x150] sm:$0xff]
      %v1859 = vld [vmem:[#allocation2 + $0x158] sm:$0xff]
      %v1860 = vld [vmem:[#allocation2 + $0x160] sm:$0xff]
      %v1861 = vld [vmem:[#allocation2 + $0x168] sm:$0xff]
      %v1862 = vld [vmem:[#allocation2 + $0x170] sm:$0xff]
      %v1863 = vld [vmem:[#allocation2 + $0x178] sm:$0xff]
      %v1864 = vld [vmem:[#allocation2 + $0x180] sm:$0xff]
      %v1865 = vld [vmem:[#allocation2 + $0x188] sm:$0xff]
      %v1866 = vld [vmem:[#allocation2 + $0x190] sm:$0xff]
      %v1867 = vld [vmem:[#allocation2 + $0x198] sm:$0xff]
      %v1868 = vld [vmem:[#allocation2 + $0x1a0] sm:$0xff]
      %v1869 = vld [vmem:[#allocation2 + $0x1a8] sm:$0xff]
      %v1874 = vunpack.c.l.b16 %v1812
      %v1875 = vunpack.c.h.b16 %v1812
      %v1876 = vunpack.c.l.b16 %v1813
      %v1877 = vunpack.c.h.b16 %v1813
      %v1878 = vunpack.c.l.b16 %v1814
      %v1879 = vunpack.c.h.b16 %v1814
      %v1880 = vunpack.c.l.b16 %v1815
      %v1881 = vunpack.c.h.b16 %v1815
      %v1882 = vpack.c.b16 %v1878, %v1874
      %v1883 = vpack.c.b16 %v1879, %v1875
      %v1884 = vpack.c.b16 %v1880, %v1876
      %v1885 = vpack.c.b16 %v1881, %v1877
      %vm1889 = vcmask 392192
      %v1891 = vsel %vm1889, %v1885, 0
      %1893 = vmatprep.subr.bf16.mxu0 %v1817
      %1894 = vmatpush1.bf16.msra.mxu0 %v1816
      %1895 = vmatprep.subr.bf16.mxu0 %v1819
      %1896 = vmatpush1.bf16.msra.mxu0 %v1818
      %1897 = vmatprep.subr.bf16.mxu0 %v1821
      %1898 = vmatpush1.bf16.msra.mxu0 %v1820
      %1899 = vmatprep.subr.bf16.mxu0 %v1823
      %1900 = vmatpush1.bf16.msra.mxu0 %v1822
      %1901 = vmatprep.subr.bf16.mxu0 %v1825
      %1902 = vmatpush1.bf16.msra.mxu0 %v1824
      %1903 = vmatprep.subr.bf16.mxu0 %v1827
      %1904 = vmatpush1.bf16.msra.mxu0 %v1826
      %1905 = vmatprep.subr.bf16.mxu0 %v1829
      %1906 = vmatpush1.bf16.msra.mxu0 %v1828
      %1907 = vmatprep.subr.bf16.mxu0 %v1831
      %1908 = vmatpush1.bf16.msra.mxu0 %v1830
      %1909 = vmatprep.subr.bf16.mxu0 %v1833
      %1910 = vmatpush1.bf16.msra.mxu0 %v1832
      %1911 = vmatprep.subr.bf16.mxu0 %v1835
      %1912 = vmatpush1.bf16.msra.mxu0 %v1834
      %1913 = vmatprep.subr.bf16.mxu0 %v1837
      %1914 = vmatpush1.bf16.msra.mxu0 %v1836
      %1915 = vmatprep.subr.bf16.mxu0 %v1839
      %1916 = vmatpush1.bf16.msra.mxu0 %v1838
      %1917 = vmatprep.subr.bf16.mxu0 %v1841
      %1918 = vmatpush1.bf16.msra.mxu0 %v1840
      %1919 = vmatprep.subr.bf16.mxu0 %v1843
      %1920 = vmatpush1.bf16.msra.mxu0 %v1842
      %1921 = vmatprep.subr.bf16.mxu0 %v1845
      %1922 = vmatpush1.bf16.msra.mxu0 %v1844
      %1923 = vmatprep.subr.bf16.mxu0 %v1847
      %1924 = vmatpush1.bf16.msra.mxu0 %v1846
      %1925 = vmatprep.mubr.bf16.mxu0 %v1883
      %1926 = vmatmul.mubr.bf16.gmra.mrb[0].mxu0 %v1882
      %v1927 = vpop.f32.mrb[0].mxu0
      %v1928 = vadd.f32 0.0, %v1927
      %v1929 = vpop.f32.mrb[0].mxu0
      %v1930 = vadd.f32 0.0, %v1929
      %v1931 = vpop.f32.mrb[0].mxu0
      %v1932 = vadd.f32 0.0, %v1931
      %v1933 = vpop.f32.mrb[0].mxu0
      %v1934 = vadd.f32 0.0, %v1933
      %1935 = vdwg.mxu0
      %1936 = vmatprep.subr.bf16.mxu0 %v1849
      %1937 = vmatpush1.bf16.msra.mxu0 %v1848
      %1938 = vmatprep.subr.bf16.mxu0 %v1851
      %1939 = vmatpush1.bf16.msra.mxu0 %v1850
      %1940 = vmatprep.subr.bf16.mxu0 %v1853
      %1941 = vmatpush1.bf16.msra.mxu0 %v1852
      %1942 = vmatprep.subr.bf16.mxu0 %v1855
      %1943 = vmatpush1.bf16.msra.mxu0 %v1854
      %1944 = vmatprep.subr.bf16.mxu0 %v1857
      %1945 = vmatpush1.bf16.msra.mxu0 %v1856
      %1946 = vmatprep.subr.bf16.mxu0 %v1859
      %1947 = vmatpush1.bf16.msra.mxu0 %v1858
      %1948 = vmatprep.subr.bf16.mxu0 %v1861
      %1949 = vmatpush1.bf16.msra.mxu0 %v1860
      %1950 = vmatprep.subr.bf16.mxu0 %v1863
      %1951 = vmatpush1.bf16.msra.mxu0 %v1862
      %1952 = vmatprep.subr.bf16.mxu0 %v1865
      %1953 = vmatpush1.bf16.msra.mxu0 %v1864
      %1954 = vmatprep.subr.bf16.mxu0 %v1867
      %1955 = vmatpush1.bf16.msra.mxu0 %v1866
      %1956 = vmatprep.subr.bf16.mxu0 %v1869
      %1957 = vmatpush1.bf16.msra.mxu0 %v1868
      %1958 = vmatprep.subr.bf16.mxu0 0
      %1959 = vmatpush1.bf16.msra.mxu0 0
      %1960 = vmatprep.subr.bf16.mxu0 0
      %1961 = vmatpush1.bf16.msra.mxu0 0
      %1962 = vmatprep.subr.bf16.mxu0 0
      %1963 = vmatpush1.bf16.msra.mxu0 0
      %1964 = vmatprep.subr.bf16.mxu0 0
      %1965 = vmatpush1.bf16.msra.mxu0 0
      %1966 = vmatprep.subr.bf16.mxu0 0
      %1967 = vmatpush1.bf16.msra.mxu0 0
      %1968 = vmatprep.mubr.bf16.mxu0 %v1891
      %1969 = vmatmul.mubr.bf16.gmra.mrb[0].mxu0 %v1884
      %v1970 = vpop.f32.mrb[0].mxu0
      %v1971 = vadd.f32 %v1928, %v1970
      %v1972 = vpop.f32.mrb[0].mxu0
      %v1973 = vadd.f32 %v1930, %v1972
      %v1974 = vpop.f32.mrb[0].mxu0
      %v1975 = vadd.f32 %v1932, %v1974
      %v1976 = vpop.f32.mrb[0].mxu0
      %v1977 = vadd.f32 %v1934, %v1976
      %1978 = vdwg.mxu0
      %1979 = vst [vmem:[%s170] sm:$0xff] %v1971
      %1980 = vst [vmem:[%s170 + $0x8] sm:$0xff] %v1973
      %1981 = vst [vmem:[%s170 + $0x10] sm:$0xff] %v1975
      %1982 = vst [vmem:[%s170 + $0x18] sm:$0xff] %v1977
      %p1983 = scmp.lt.s32.totalorder %s14, 1
      %s1984 = scalar_select %p1983, %s14, 1
      %s1985 = smul.addr %s1984, 4
      %s1986 = smul.addr %s1985, 8
      %s1987 = scalar_lea.vmem %s3, %s1986
      // Predicated region
      $region33: #{basic_block_forward.6} parent=31 // pred_check
        %p1988 = pneg %p100
      $region34: #{basic_block_forward.6} parent=31 // pred_check_branch
        %1990 = sbr.rel (%p1988) target = $region36
      $region35: #{basic_block_forward.6} parent=31 // pred_region
        _
      $region36: #{basic_block_forward.6} parent=31 // pred_fallthru
        _
    $region32: #{basic_block_forward.6} parent=5 // pred_fallthru
      _
    %p1991 = scmp.le.s32.totalorder 2, %s9
    // Predicated region
    $region37: #{basic_block_forward.6} parent=5 // pred_check
      %p1992 = pneg %p1991
    $region38: #{basic_block_forward.6} parent=5 // pred_check_branch
      %1994 = sbr.rel (%p1992) target = $region40
    $region39: #{basic_block_forward.6} parent=5 // pred_region
      %s1995 = ssub.s32 %s9, 2
      // Predicated region
      $region41: #{basic_block_forward.6} parent=39 // pred_check
        %p1996 = pneg %p106
      $region42: #{basic_block_forward.6} parent=39 // pred_check_branch
        %1998 = sbr.rel (%p1996) target = $region44
      $region43: #{basic_block_forward.6} parent=39 // pred_region
        %p1999 = scmp.lt.s32.totalorder %s15, 1
        %s2000 = scalar_select %p1999, %s15, 1
        %s2001 = smul.addr %s2000, 4
        %s2002 = smul.addr %s2001, 8
        %s2003 = scalar_lea.vmem %s3, %s2002
      $region44: #{basic_block_forward.6} parent=39 // pred_fallthru
        _
    $region40: #{basic_block_forward.6} parent=5 // pred_fallthru
      _
  $region6: #{basic_block_forward.6} parent=0 // loop_footer
    %s13 = sadd.s32 1, %s9
  $region7: #{basic_block_forward.6} parent=0 // loop_footer_branch
    %8 = sbr.rel target = $region3
  $region8: #{basic_block_forward.6} parent=0 // loop_exit
    _

// kernel: basic_block_forward.7
$region0: #{basic_block_forward.7}
  #allocation0 [shape = 'u32[]', space=smem, size = 0x4, offset = 0x4, fixed_abs, tag = 'smem constant byte address 0x4 - core index']
  #allocation1 [shape = 'u32[144,128]{1,0:T(1,128)}', space=vmem, size = 0x12000, scoped, tag = 'internal scratch']
  %s0 = inlined_call_operand.vmem [shape: f32[2,16,256], index: 0, kind: input, shape index: {}]
  %s1 = inlined_call_operand.vmem [shape: f32[2,16,256], index: 1, kind: input, shape index: {}]
  %s2 = inlined_call_operand.vmem [shape: f32[16,3], index: 2, kind: input, shape index: {}]
  %s3 = inlined_call_operand.vmem [shape: f32[16,16], index: 3, kind: input, shape index: {}]
  %s4 = inlined_call_operand.vmem [shape: f32[2,16,256], index: 4, kind: output, shape index: {}]
  %s5 = sld [smem:[#allocation0]]
  $region49: #{basic_block_forward.7} parent=0
    _
  %s7 = ssub.s32 1, %s5
  %s8 = scalar_select 0, %s7, %s5
  loop: start=0, step=1, limit=4
  $region2: #{basic_block_forward.7} parent=0 // loop_pre_header
    _
  $region3: #{basic_block_forward.7} parent=0 // loop_header
    %s10 = sphi 0, %s14
    %p11 = scmp.ge.s32.totalorder %s10, 4
    %s20 = sphi 0, %s22
    %s23 = sphi 0, %s20
    %s24 = sphi 0, %s23
    %s40 = sphi 0, %s24
    %s46 = sphi 0, %s48
    %s49 = sphi 0, %s46
    %s50 = sphi 0, %s49
    %s66 = sphi 0, %s50
    %s70 = sphi 0, %s70
    %s72 = sphi 0, %s70
    %s73 = sphi 0, %s72
    %s87 = sphi 0, %s73
    %s91 = sphi 0, %s91
    %s93 = sphi 0, %s91
    %s94 = sphi 0, %s93
    %s108 = sphi 0, %s94
    %s114 = sphi 0, %s116
    %s117 = sphi 0, %s114
    %s118 = sphi 0, %s117
    %s134 = sphi 0, %s118
  $region4: #{basic_block_forward.7} parent=0 // loop_header_branch
    %13 = sbr.rel (%p11) target = $region8
  $region5: #{basic_block_forward.7} parent=0 // loop_body
    %s15 = ssub.s32 %s10, 1
    %s16 = ssub.s32 %s10, 2
    %s17 = sadd.s32 %s10, 1
    %s18 = ssub.s32 %s10, %s17
    %p19 = scmp.eq.s32.totalorder %s18, 0
    %s21 = sadd.s32 %s20, 1
    %s22 = scalar_select %p19, %s20, %s21
    %p25 = pneg %p19
    %p26 = scmp.eq.s32.totalorder %s10, 1
    %p27 = por %p25, %p26
    %p28 = scmp.ne.s32.totalorder %s20, %s23
    %p29 = scmp.eq.s32.totalorder %s10, 0
    %p30 = por %p28, %p29
    %p31 = scmp.ne.s32.totalorder %s20, %s23
    %p32 = scmp.eq.s32.totalorder %s15, 1
    %p33 = por %p31, %p32
    %p34 = scmp.ne.s32.totalorder %s23, %s24
    %p35 = scmp.eq.s32.totalorder %s15, 0
    %p36 = por %p34, %p35
    %p37 = scmp.ne.s32.totalorder %s23, %s24
    %p38 = scmp.eq.s32.totalorder %s16, 1
    %p39 = por %p37, %p38
    %p41 = scmp.ne.s32.totalorder %s24, %s40
    %p42 = scmp.eq.s32.totalorder %s16, 0
    %p43 = por %p41, %p42
    %s44 = ssub.s32 %s10, %s17
    %p45 = scmp.eq.s32.totalorder %s44, 0
    %s47 = sadd.s32 %s46, 1
    %s48 = scalar_select %p45, %s46, %s47
    %p51 = pneg %p45
    %p52 = scmp.eq.s32.totalorder %s10, 1
    %p53 = por %p51, %p52
    %p54 = scmp.ne.s32.totalorder %s46, %s49
    %p55 = scmp.eq.s32.totalorder %s10, 0
    %p56 = por %p54, %p55
    %p57 = scmp.ne.s32.totalorder %s46, %s49
    %p58 = scmp.eq.s32.totalorder %s15, 1
    %p59 = por %p57, %p58
    %p60 = scmp.ne.s32.totalorder %s49, %s50
    %p61 = scmp.eq.s32.totalorder %s15, 0
    %p62 = por %p60, %p61
    %p63 = scmp.ne.s32.totalorder %s49, %s50
    %p64 = scmp.eq.s32.totalorder %s16, 1
    %p65 = por %p63, %p64
    %p67 = scmp.ne.s32.totalorder %s50, %s66
    %p68 = scmp.eq.s32.totalorder %s16, 0
    %p69 = por %p67, %p68
    %s71 = sadd.s32 %s70, 1
    %p74 = scmp.eq.s32.totalorder %s10, 1
    %p75 = scmp.ne.s32.totalorder %s70, %s72
    %p76 = scmp.eq.s32.totalorder %s10, 0
    %p77 = por %p75, %p76
    %p78 = scmp.ne.s32.totalorder %s70, %s72
    %p79 = scmp.eq.s32.totalorder %s15, 1
    %p80 = por %p78, %p79
    %p81 = scmp.ne.s32.totalorder %s72, %s73
    %p82 = scmp.eq.s32.totalorder %s15, 0
    %p83 = por %p81, %p82
    %p84 = scmp.ne.s32.totalorder %s72, %s73
    %p85 = scmp.eq.s32.totalorder %s16, 1
    %p86 = por %p84, %p85
    %p88 = scmp.ne.s32.totalorder %s73, %s87
    %p89 = scmp.eq.s32.totalorder %s16, 0
    %p90 = por %p88, %p89
    %s92 = sadd.s32 %s91, 1
    %p95 = scmp.eq.s32.totalorder %s10, 1
    %p96 = scmp.ne.s32.totalorder %s91, %s93
    %p97 = scmp.eq.s32.totalorder %s10, 0
    %p98 = por %p96, %p97
    %p99 = scmp.ne.s32.totalorder %s91, %s93
    %p100 = scmp.eq.s32.totalorder %s15, 1
    %p101 = por %p99, %p100
    %p102 = scmp.ne.s32.totalorder %s93, %s94
    %p103 = scmp.eq.s32.totalorder %s15, 0
    %p104 = por %p102, %p103
    %p105 = scmp.ne.s32.totalorder %s93, %s94
    %p106 = scmp.eq.s32.totalorder %s16, 1
    %p107 = por %p105, %p106
    %p109 = scmp.ne.s32.totalorder %s94, %s108
    %p110 = scmp.eq.s32.totalorder %s16, 0
    %p111 = por %p109, %p110
    %s112 = ssub.s32 %s10, %s17
    %p113 = scmp.eq.s32.totalorder %s112, 0
    %s115 = sadd.s32 %s114, 1
    %s116 = scalar_select %p113, %s114, %s115
    %p119 = pneg %p113
    %p120 = scmp.eq.s32.totalorder %s10, 1
    %p121 = por %p119, %p120
    %p122 = scmp.ne.s32.totalorder %s114, %s117
    %p123 = scmp.eq.s32.totalorder %s10, 0
    %p124 = por %p122, %p123
    %p125 = scmp.ne.s32.totalorder %s114, %s117
    %p126 = scmp.eq.s32.totalorder %s15, 1
    %p127 = por %p125, %p126
    %p128 = scmp.ne.s32.totalorder %s117, %s118
    %p129 = scmp.eq.s32.totalorder %s15, 0
    %p130 = por %p128, %p129
    %p131 = scmp.ne.s32.totalorder %s117, %s118
    %p132 = scmp.eq.s32.totalorder %s16, 1
    %p133 = por %p131, %p132
    %p135 = scmp.ne.s32.totalorder %s118, %s134
    %p136 = scmp.eq.s32.totalorder %s16, 0
    %p137 = por %p135, %p136
    %p138 = scmp.le.s32.totalorder 1, %s10
    %p139 = scmp.lt.s32.totalorder %s10, 3
    %p140 = pnand %p138, %p139
    %p141 = pneg %p140
    // Predicated region
    $region9: #{basic_block_forward.7} parent=5 // pred_check
      _
    $region10: #{basic_block_forward.7} parent=5 // pred_check_branch
      %143 = sbr.rel (%p140) target = $region12
    $region11: #{basic_block_forward.7} parent=5 // pred_region
      %s144 = ssub.s32 %s10, 1
      // Predicated region
      $region13: #{basic_block_forward.7} parent=11 // pred_check
        %p145 = pneg %p83
      $region14: #{basic_block_forward.7} parent=11 // pred_check_branch
        %147 = sbr.rel (%p145) target = $region16
      $region15: #{basic_block_forward.7} parent=11 // pred_region
        _
      $region16: #{basic_block_forward.7} parent=11 // pred_fallthru
        _
      // Predicated region
      $region17: #{basic_block_forward.7} parent=11 // pred_check
        %p148 = pneg %p104
      $region18: #{basic_block_forward.7} parent=11 // pred_check_branch
        %150 = sbr.rel (%p148) target = $region20
      $region19: #{basic_block_forward.7} parent=11 // pred_region
        _
      $region20: #{basic_block_forward.7} parent=11 // pred_fallthru
        _
    $region12: #{basic_block_forward.7} parent=5 // pred_fallthru
      _
    %p151 = scmp.lt.s32.totalorder %s10, 2
    // Predicated region
    $region21: #{basic_block_forward.7} parent=5 // pred_check
      %p152 = pneg %p151
    $region22: #{basic_block_forward.7} parent=5 // pred_check_branch
      %154 = sbr.rel (%p152) target = $region24
    $region23: #{basic_block_forward.7} parent=5 // pred_region
      // Predicated region
      $region25: #{basic_block_forward.7} parent=23 // pred_check
        %p155 = pneg %p30
      $region26: #{basic_block_forward.7} parent=23 // pred_check_branch
        %157 = sbr.rel (%p155) target = $region28
      $region27: #{basic_block_forward.7} parent=23 // pred_region
        %p158 = scmp.lt.s32.totalorder %s10, 1
        %s159 = scalar_select %p158, %s10, 1
        %s160 = smul.addr %s159, 4
        %s161 = smul.addr %s160, 8
        %s162 = scalar_lea.vmem %s0, %s161
      $region28: #{basic_block_forward.7} parent=23 // pred_fallthru
        _
      // Predicated region
      $region29: #{basic_block_forward.7} parent=23 // pred_check
        %p163 = pneg %p56
      $region30: #{basic_block_forward.7} parent=23 // pred_check_branch
        %165 = sbr.rel (%p163) target = $region32
      $region31: #{basic_block_forward.7} parent=23 // pred_region
        %p166 = scmp.lt.s32.totalorder %s10, 1
        %s167 = scalar_select %p166, %s10, 1
        %s168 = smul.addr %s167, 4
        %s169 = smul.addr %s168, 8
        %s170 = scalar_lea.vmem %s1, %s169
      $region32: #{basic_block_forward.7} parent=23 // pred_fallthru
        _
    $region24: #{basic_block_forward.7} parent=5 // pred_fallthru
      _
    %p171 = scmp.le.s32.totalorder 1, %s10
    %p172 = scmp.lt.s32.totalorder %s10, 3
    %p173 = pnand %p171, %p172
    %p174 = pneg %p173
    // Predicated region
    $region33: #{basic_block_forward.7} parent=5 // pred_check
      _
    $region34: #{basic_block_forward.7} parent=5 // pred_check_branch
      %176 = sbr.rel (%p173) target = $region36
    $region35: #{basic_block_forward.7} parent=5 // pred_region
      %s177 = ssub.s32 %s10, 1
      %p178 = scmp.lt.s32.totalorder %s15, 1
      %s179 = scalar_select %p178, %s15, 1
      %s180 = smul.addr %s179, 4
      %s181 = smul.addr %s180, 8
      %s182 = scalar_lea.vmem %s0, %s181
      %p183 = pneg %p36
      %p184 = pneg %p33
      %p185 = scmp.lt.s32.totalorder %s15, 1
      %s186 = scalar_select %p185, %s15, 1
      %s187 = smul.addr %s186, 4
      %s188 = smul.addr %s187, 8
      %s189 = scalar_lea.vmem %s1, %s188
      %p190 = pneg %p62
      %p191 = pneg %p59
      %p192 = pneg %p83
      %p193 = pneg %p80
      %p194 = pneg %p104
      %p195 = pneg %p101
      %p196 = pneg %p130
      %p197 = pneg %p127
      %p198 = scmp.lt.s32.totalorder %s15, 1
      %s199 = scalar_select %p198, %s15, 1
      %s200 = smul.addr %s199, 4
      %s201 = smul.addr %s200, 8
      %s202 = scalar_lea.vmem %s4, %s201
      %p203 = scmp.lt.s32.totalorder %s15, 1
      %s204 = scalar_select %p203, %s15, 1
      %s205 = smul.addr %s204, 4
      %s206 = smul.addr %s205, 8
      %s207 = scalar_lea.vmem %s0, %s206
      %p208 = scmp.lt.s32.totalorder %s15, 1
      %s209 = scalar_select %p208, %s15, 1
      %s210 = smul.addr %s209, 4
      %s211 = smul.addr %s210, 8
      %s212 = scalar_lea.vmem %s1, %s211
      %p213 = scmp.lt.s32.totalorder %s15, 1
      %s214 = scalar_select %p213, %s15, 1
      %s215 = smul.addr %s214, 4
      %s216 = smul.addr %s215, 8
      %s217 = scalar_lea.vmem %s4, %s216
      %v218 = vld [vmem:[%s207] sm:$0xff]
      %v219 = vld [vmem:[%s207 + $0x8] sm:$0xff]
      %v220 = vld [vmem:[%s207 + $0x10] sm:$0xff]
      %v221 = vld [vmem:[%s207 + $0x18] sm:$0xff]
      %v222 = vld [vmem:[%s2] sm:$0xff]
      %v223 = vld [vmem:[%s2 + $0x8] sm:$0xff]
      %v224 = vld [vmem:[%s3] sm:$0xff]
      %v225 = vld [vmem:[%s3 + $0x8] sm:$0xff]
      %v226 = vld [vmem:[%s212] sm:$0xff]
      %v227 = vld [vmem:[%s212 + $0x8] sm:$0xff]
      %v228 = vld [vmem:[%s212 + $0x10] sm:$0xff]
      %v229 = vld [vmem:[%s212 + $0x18] sm:$0xff]
      %231 = vset.pattern.permute.xlu0 0
      %232 = vperm.xlu0 %231, %v222
      %v233 = vpop.permute.xlu0 %232
      %236 = vset.pattern.permute.xlu0 0
      %237 = vperm.xlu0 %236, %v223
      %v238 = vpop.permute.xlu0 %237
      %v240 = vadd.f32 %v218, %v233
      %v241 = vadd.f32 %v219, %v233
      %v242 = vadd.f32 %v220, %v238
      %v243 = vadd.f32 %v221, %v238
      %vm244 = vcmask 130048
      %v246 = vsel %vm244, %v224, 0
      %v249 = vsel %vm244, %v225, 0
      %251 = vmatprep.subr.mxu0 %v241
      %252 = vmatpush1.msra.mxu0 %v240
      %253 = vmatprep.subr.mxu0 %v243
      %254 = vmatpush1.msra.mxu0 %v242
      %255 = vmatprep.subr.mxu0 0.0
      %256 = vmatpush1.msra.mxu0 0.0
      %257 = vmatprep.subr.mxu0 0.0
      %258 = vmatpush1.msra.mxu0 0.0
      %259 = vmatprep.subr.mxu0 0.0
      %260 = vmatpush1.msra.mxu0 0.0
      %261 = vmatprep.subr.mxu0 0.0
      %262 = vmatpush1.msra.mxu0 0.0
      %263 = vmatprep.subr.mxu0 0.0
      %264 = vmatpush1.msra.mxu0 0.0
      %265 = vmatprep.subr.mxu0 0.0
      %266 = vmatpush1.msra.mxu0 0.0
      %267 = vmatprep.subr.mxu0 0.0
      %268 = vmatpush1.msra.mxu0 0.0
      %269 = vmatprep.subr.mxu0 0.0
      %270 = vmatpush1.msra.mxu0 0.0
      %271 = vmatprep.subr.mxu0 0.0
      %272 = vmatpush1.msra.mxu0 0.0
      %273 = vmatprep.subr.mxu0 0.0
      %274 = vmatpush1.msra.mxu0 0.0
      %275 = vmatprep.subr.mxu0 0.0
      %276 = vmatpush1.msra.mxu0 0.0
      %277 = vmatprep.subr.mxu0 0.0
      %278 = vmatpush1.msra.mxu0 0.0
      %279 = vmatprep.subr.mxu0 0.0
      %280 = vmatpush1.msra.mxu0 0.0
      %281 = vmatprep.subr.mxu0 0.0
      %282 = vmatpush1.msra.mxu0 0.0
      %283 = vmatprep.subr.mxu0 0.0
      %284 = vmatpush1.msra.mxu0 0.0
      %285 = vmatprep.subr.mxu0 0.0
      %286 = vmatpush1.msra.mxu0 0.0
      %287 = vmatprep.subr.mxu0 0.0
      %288 = vmatpush1.msra.mxu0 0.0
      %289 = vmatprep.subr.mxu0 0.0
      %290 = vmatpush1.msra.mxu0 0.0
      %291 = vmatprep.subr.mxu0 0.0
      %292 = vmatpush1.msra.mxu0 0.0
      %293 = vmatprep.subr.mxu0 0.0
      %294 = vmatpush1.msra.mxu0 0.0
      %295 = vmatprep.subr.mxu0 0.0
      %296 = vmatpush1.msra.mxu0 0.0
      %297 = vmatprep.subr.mxu0 0.0
      %298 = vmatpush1.msra.mxu0 0.0
      %299 = vmatprep.subr.mxu0 0.0
      %300 = vmatpush1.msra.mxu0 0.0
      %301 = vmatprep.subr.mxu0 0.0
      %302 = vmatpush1.msra.mxu0 0.0
      %303 = vmatprep.subr.mxu0 0.0
      %304 = vmatpush1.msra.mxu0 0.0
      %305 = vmatprep.subr.mxu0 0.0
      %306 = vmatpush1.msra.mxu0 0.0
      %307 = vmatprep.subr.mxu0 0.0
      %308 = vmatpush1.msra.mxu0 0.0
      %309 = vmatprep.subr.mxu0 0.0
      %310 = vmatpush1.msra.mxu0 0.0
      %311 = vmatprep.subr.mxu0 0.0
      %312 = vmatpush1.msra.mxu0 0.0
      %313 = vmatprep.subr.mxu0 0.0
      %314 = vmatpush1.msra.mxu0 0.0
      %315 = vmatprep.mubr.f32.mxu0 0.0
      %316 = vmatmul.mubr.f32.gmra.mrb[0].mxu0 %v246
      %v317 = vpop.f32.mrb[0].mxu0
      %v318 = vadd.f32 0.0, %v317
      %v319 = vpop.f32.mrb[0].mxu0
      %v320 = vadd.f32 0.0, %v319
      %321 = vmatprep.mubr.f32.mxu0 0.0
      %322 = vmatmul.mubr.f32.gmra.mrb[0].mxu0 %v249
      %v323 = vpop.f32.mrb[0].mxu0
      %v324 = vadd.f32 0.0, %v323
      %v325 = vpop.f32.mrb[0].mxu0
      %v326 = vadd.f32 0.0, %v325
      %327 = vdwg.mxu0
      %v328 = vmul.f32 %v240, %v240
      %v329 = vmul.f32 %v241, %v241
      %v330 = vmul.f32 %v242, %v242
      %v331 = vmul.f32 %v243, %v243
      %332 = vmatprep.subr.mxu0 %v329
      %333 = vmatpush1.msra.mxu0 %v328
      %334 = vmatprep.subr.mxu0 %v331
      %335 = vmatpush1.msra.mxu0 %v330
      %336 = vmatprep.subr.mxu0 0.0
      %337 = vmatpush1.msra.mxu0 0.0
      %338 = vmatprep.subr.mxu0 0.0
      %339 = vmatpush1.msra.mxu0 0.0
      %340 = vmatprep.subr.mxu0 0.0
      %341 = vmatpush1.msra.mxu0 0.0
      %342 = vmatprep.subr.mxu0 0.0
      %343 = vmatpush1.msra.mxu0 0.0
      %344 = vmatprep.subr.mxu0 0.0
      %345 = vmatpush1.msra.mxu0 0.0
      %346 = vmatprep.subr.mxu0 0.0
      %347 = vmatpush1.msra.mxu0 0.0
      %348 = vmatprep.subr.mxu0 0.0
      %349 = vmatpush1.msra.mxu0 0.0
      %350 = vmatprep.subr.mxu0 0.0
      %351 = vmatpush1.msra.mxu0 0.0
      %352 = vmatprep.subr.mxu0 0.0
      %353 = vmatpush1.msra.mxu0 0.0
      %354 = vmatprep.subr.mxu0 0.0
      %355 = vmatpush1.msra.mxu0 0.0
      %356 = vmatprep.subr.mxu0 0.0
      %357 = vmatpush1.msra.mxu0 0.0
      %358 = vmatprep.subr.mxu0 0.0
      %359 = vmatpush1.msra.mxu0 0.0
      %360 = vmatprep.subr.mxu0 0.0
      %361 = vmatpush1.msra.mxu0 0.0
      %362 = vmatprep.subr.mxu0 0.0
      %363 = vmatpush1.msra.mxu0 0.0
      %364 = vmatprep.subr.mxu0 0.0
      %365 = vmatpush1.msra.mxu0 0.0
      %366 = vmatprep.subr.mxu0 0.0
      %367 = vmatpush1.msra.mxu0 0.0
      %368 = vmatprep.subr.mxu0 0.0
      %369 = vmatpush1.msra.mxu0 0.0
      %370 = vmatprep.subr.mxu0 0.0
      %371 = vmatpush1.msra.mxu0 0.0
      %372 = vmatprep.subr.mxu0 0.0
      %373 = vmatpush1.msra.mxu0 0.0
      %374 = vmatprep.subr.mxu0 0.0
      %375 = vmatpush1.msra.mxu0 0.0
      %376 = vmatprep.subr.mxu0 0.0
      %377 = vmatpush1.msra.mxu0 0.0
      %378 = vmatprep.subr.mxu0 0.0
      %379 = vmatpush1.msra.mxu0 0.0
      %380 = vmatprep.subr.mxu0 0.0
      %381 = vmatpush1.msra.mxu0 0.0
      %382 = vmatprep.subr.mxu0 0.0
      %383 = vmatpush1.msra.mxu0 0.0
      %384 = vmatprep.subr.mxu0 0.0
      %385 = vmatpush1.msra.mxu0 0.0
      %386 = vmatprep.subr.mxu0 0.0
      %387 = vmatpush1.msra.mxu0 0.0
      %388 = vmatprep.subr.mxu0 0.0
      %389 = vmatpush1.msra.mxu0 0.0
      %390 = vmatprep.subr.mxu0 0.0
      %391 = vmatpush1.msra.mxu0 0.0
      %392 = vmatprep.subr.mxu0 0.0
      %393 = vmatpush1.msra.mxu0 0.0
      %394 = vmatprep.subr.mxu0 0.0
      %395 = vmatpush1.msra.mxu0 0.0
      %396 = vmatprep.mubr.f32.mxu0 0.0
      %397 = vmatmul.mubr.f32.gmra.mrb[0].mxu0 %v246
      %v398 = vpop.f32.mrb[0].mxu0
      %v399 = vadd.f32 0.0, %v398
      %v400 = vpop.f32.mrb[0].mxu0
      %v401 = vadd.f32 0.0, %v400
      %402 = vmatprep.mubr.f32.mxu0 0.0
      %403 = vmatmul.mubr.f32.gmra.mrb[0].mxu0 %v249
      %v404 = vpop.f32.mrb[0].mxu0
      %v405 = vadd.f32 0.0, %v404
      %v406 = vpop.f32.mrb[0].mxu0
      %v407 = vadd.f32 0.0, %v406
      %408 = vdwg.mxu0
      %v409 = vadd.f32 %v318, %v320
      %410 = vadd.xlane.f32.xlu0 %v409
      %v411 = vpop.xlane.xlu0 %410
      %v412 = vadd.f32 %v324, %v326
      %413 = vadd.xlane.f32.xlu0 %v412
      %v414 = vpop.xlane.xlu0 %413
      %v415 = vmul.f32 %v411, 0.001953125
      %v416 = vmul.f32 %v414, 0.001953125
      %v417 = vadd.f32 %v399, %v401
      %418 = vadd.xlane.f32.xlu0 %v417
      %v419 = vpop.xlane.xlu0 %418
      %v420 = vadd.f32 %v405, %v407
      %421 = vadd.xlane.f32.xlu0 %v420
      %v422 = vpop.xlane.xlu0 %421
      %v423 = vmul.f32 %v419, 0.001953125
      %v424 = vmul.f32 %v422, 0.001953125
      %v425 = vmul.f32 %v415, %v415
      %v426 = vmul.f32 %v416, %v416
      %v427 = vsub.f32 %v423, %v425
      %v428 = vsub.f32 %v424, %v426
      %v429 = vadd.f32 %v427, 1e-05
      %v430 = vadd.f32 %v428, 1e-05
      %v431 = vrsqrt.pop %v429
      %v432 = vrsqrt.pop %v430
      %v433 = vsub.f32 %v240, %v415
      %v434 = vsub.f32 %v241, %v415
      %v435 = vsub.f32 %v242, %v416
      %v436 = vsub.f32 %v243, %v416
      %v437 = vmul.f32 %v431, %v222
      %v438 = vmul.f32 %v432, %v223
      %440 = vset.pattern.permute.xlu0 1
      %441 = vperm.xlu0 %440, %v437
      %v442 = vpop.permute.xlu0 %441
      %445 = vset.pattern.permute.xlu0 1
      %446 = vperm.xlu0 %445, %v438
      %v447 = vpop.permute.xlu0 %446
      %v449 = vmul.f32 %v433, %v442
      %v450 = vmul.f32 %v434, %v442
      %v451 = vmul.f32 %v435, %v447
      %v452 = vmul.f32 %v436, %v447
      %453 = vset.pattern.permute.xlu0 2
      %454 = vperm.xlu0 %453, %v222
      %v455 = vpop.permute.xlu0 %454
      %457 = vset.pattern.permute.xlu0 2
      %458 = vperm.xlu0 %457, %v223
      %v459 = vpop.permute.xlu0 %458
      %v461 = vadd.f32 %v449, %v455
      %v462 = vadd.f32 %v450, %v455
      %v463 = vadd.f32 %v451, %v459
      %v464 = vadd.f32 %v452, %v459
      %v465 = vadd.f32 %v461, %v226
      %v466 = vadd.f32 %v462, %v227
      %v467 = vadd.f32 %v463, %v228
      %v468 = vadd.f32 %v464, %v229
      %vm469 = vcmp.ge.f32.partialorder %v465, 0.0
      %vm470 = vcmp.ge.f32.partialorder %v466, 0.0
      %vm471 = vcmp.ge.f32.partialorder %v467, 0.0
      %vm472 = vcmp.ge.f32.partialorder %v468, 0.0
      %v473 = vmul.f32 %v465, 0.01
      %v474 = vmul.f32 %v466, 0.01
      %v475 = vmul.f32 %v467, 0.01
      %v476 = vmul.f32 %v468, 0.01
      %v477 = vsel %vm469, %v465, %v473
      %v478 = vsel %vm470, %v466, %v474
      %v479 = vsel %vm471, %v467, %v475
      %v480 = vsel %vm472, %v468, %v476
      %481 = vst [vmem:[%s217] sm:$0xff] %v477
      %482 = vst [vmem:[%s217 + $0x8] sm:$0xff] %v478
      %483 = vst [vmem:[%s217 + $0x10] sm:$0xff] %v479
      %484 = vst [vmem:[%s217 + $0x18] sm:$0xff] %v480
      %p485 = scmp.lt.s32.totalorder %s15, 1
      %s486 = scalar_select %p485, %s15, 1
      %s487 = smul.addr %s486, 4
      %s488 = smul.addr %s487, 8
      %s489 = scalar_lea.vmem %s4, %s488
      // Predicated region
      $region37: #{basic_block_forward.7} parent=35 // pred_check
        %p490 = pneg %p127
      $region38: #{basic_block_forward.7} parent=35 // pred_check_branch
        %492 = sbr.rel (%p490) target = $region40
      $region39: #{basic_block_forward.7} parent=35 // pred_region
        _
      $region40: #{basic_block_forward.7} parent=35 // pred_fallthru
        _
    $region36: #{basic_block_forward.7} parent=5 // pred_fallthru
      _
    %p493 = scmp.le.s32.totalorder 2, %s10
    // Predicated region
    $region41: #{basic_block_forward.7} parent=5 // pred_check
      %p494 = pneg %p493
    $region42: #{basic_block_forward.7} parent=5 // pred_check_branch
      %496 = sbr.rel (%p494) target = $region44
    $region43: #{basic_block_forward.7} parent=5 // pred_region
      %s497 = ssub.s32 %s10, 2
      // Predicated region
      $region45: #{basic_block_forward.7} parent=43 // pred_check
        %p498 = pneg %p133
      $region46: #{basic_block_forward.7} parent=43 // pred_check_branch
        %500 = sbr.rel (%p498) target = $region48
      $region47: #{basic_block_forward.7} parent=43 // pred_region
        %p501 = scmp.lt.s32.totalorder %s16, 1
        %s502 = scalar_select %p501, %s16, 1
        %s503 = smul.addr %s502, 4
        %s504 = smul.addr %s503, 8
        %s505 = scalar_lea.vmem %s4, %s504
      $region48: #{basic_block_forward.7} parent=43 // pred_fallthru
        _
    $region44: #{basic_block_forward.7} parent=5 // pred_fallthru
      _
  $region6: #{basic_block_forward.7} parent=0 // loop_footer
    %s14 = sadd.s32 1, %s10
  $region7: #{basic_block_forward.7} parent=0 // loop_footer_branch
    %9 = sbr.rel target = $region3
  $region8: #{basic_block_forward.7} parent=0 // loop_exit
    _

</llo_original>
